<compile_context>
chip_gen: v7x
topology: tpu7x:2x2x1
jax: 0.10.0
libtpu: 0.0.40
codegen_flags: <defaults>
</compile_context>

<pallas_src>
import jax
import jax.numpy as jnp
from jax import lax
from jax.experimental import pallas as pl
from jax.experimental.pallas import tpu as pltpu


_VMEM = pl.BlockSpec(memory_space=pltpu.MemorySpace.VMEM)


# --------------------------------------------------------------------------------------
# Shared recurrence body (used by both the plain-layer and the fused-head kernels).
# --------------------------------------------------------------------------------------
def _lstm_recurrence(x_flat, h0, c0, wih_ref, whh_ref, b_ref, gx_sc, hid_sc):
    """x_flat: (T*B, in_dim) value; h0/c0: (B, H) values.
    wih_ref: (4, in_dim, H), whh_ref: (4, H, H), b_ref: (4, 1, H)  [gate order i, f, g, o]
    gx_sc:  (4*T, B, H) VMEM scratch (gate-major), hid_sc: (T, B, H) VMEM ref (scratch or output).
    Returns (h_T, c_T) values of shape (B, H)."""
    T, B, H = hid_sc.shape

    # Prologue: hoist the input projection out of the serial loop (one MXU matmul per gate).
    for k in range(4):
        gx = jnp.dot(x_flat, wih_ref[k], preferred_element_type=jnp.float32) + b_ref[k]
        gx_sc[k * T:(k + 1) * T] = gx.reshape(T, B, H)

    # Serial recurrence: only h_{t-1} @ W_hh + precomputed gate inputs per step.
    def step(t, carry):
        h_prev, c_prev = carry
        i_pre = gx_sc[0 * T + t] + jnp.dot(h_prev, whh_ref[0], preferred_element_type=jnp.float32)
        f_pre = gx_sc[1 * T + t] + jnp.dot(h_prev, whh_ref[1], preferred_element_type=jnp.float32)
        g_pre = gx_sc[2 * T + t] + jnp.dot(h_prev, whh_ref[2], preferred_element_type=jnp.float32)
        o_pre = gx_sc[3 * T + t] + jnp.dot(h_prev, whh_ref[3], preferred_element_type=jnp.float32)
        i_g = jax.nn.sigmoid(i_pre)
        f_g = jax.nn.sigmoid(f_pre)
        g_g = jnp.tanh(g_pre)
        o_g = jax.nn.sigmoid(o_pre)
        c_new = f_g * c_prev + i_g * g_g
        h_new = o_g * jnp.tanh(c_new)
        hid_sc[t] = h_new
        return h_new, c_new

    return lax.fori_loop(0, T, step, (h0, c0), unroll=True)


# --------------------------------------------------------------------------------------
# Kernel 1: plain LSTM layer (used for all layers except the last when num_layers > 1).
# Hidden sequence is written directly into the VMEM-resident output block (no extra copy).
# --------------------------------------------------------------------------------------
def lstm_layer_kernel(x_ref, h0_ref, c0_ref, wih_ref, whh_ref, b_ref,
                      hseq_ref, hT_ref, cT_ref, gx_sc):
    T, B, in_dim = x_ref.shape
    x_flat = x_ref[...].reshape(T * B, in_dim)
    h_last, c_last = _lstm_recurrence(x_flat, h0_ref[...], c0_ref[...],
                                      wih_ref, whh_ref, b_ref, gx_sc, hseq_ref)
    hT_ref[...] = h_last
    cT_ref[...] = c_last


def lstm_layer_pallas(x_tm, h0, c0, wih_g, whh_g, b_g):
    T, B, _ = x_tm.shape
    H = h0.shape[-1]
    return pl.pallas_call(
        lstm_layer_kernel,
        out_shape=(jax.ShapeDtypeStruct((T, B, H), jnp.float32),
                   jax.ShapeDtypeStruct((B, H), jnp.float32),
                   jax.ShapeDtypeStruct((B, H), jnp.float32)),
        in_specs=[_VMEM] * 6,
        out_specs=(_VMEM, _VMEM, _VMEM),
        scratch_shapes=[pltpu.VMEM((4 * T, B, H), jnp.float32)],
    )(x_tm, h0, c0, wih_g, whh_g, b_g)


# --------------------------------------------------------------------------------------
# Kernel 2: last LSTM layer fused with the proj_out head (Linear -> ReLU -> Linear).
# The hidden sequence stays in VMEM scratch; only logits / h_T / c_T go back to HBM.
# --------------------------------------------------------------------------------------
def lstm_head_kernel(x_ref, h0_ref, c0_ref, wih_ref, whh_ref, b_ref,
                     w1_ref, b1_ref, w2_ref, b2_ref,
                     logits_ref, hT_ref, cT_ref, gx_sc, hid_sc):
    T, B, in_dim = x_ref.shape
    H = hid_sc.shape[-1]
    K = w2_ref.shape[-1]
    x_flat = x_ref[...].reshape(T * B, in_dim)
    h_last, c_last = _lstm_recurrence(x_flat, h0_ref[...], c0_ref[...],
                                      wih_ref, whh_ref, b_ref, gx_sc, hid_sc)
    # Fused head over the whole VMEM-resident hidden slab (two MXU matmuls total).
    hid_flat = hid_sc[...].reshape(T * B, H)
    z = jnp.dot(hid_flat, w1_ref[...], preferred_element_type=jnp.float32) + b1_ref[...]
    z = jnp.maximum(z, 0.0)
    logits = jnp.dot(z, w2_ref[...], preferred_element_type=jnp.float32) + b2_ref[...]
    logits_ref[...] = logits.reshape(T, B, K)
    hT_ref[...] = h_last
    cT_ref[...] = c_last


def lstm_head_pallas(x_tm, h0, c0, wih_g, whh_g, b_g, w1t, b1, w2t, b2):
    # NOTE: single-invocation (no grid) is the right call for short sequences; for long T,
    # chunk the time axis with a coarse grid (e.g. 128 steps/block) and carry h/c in scratch.
    T, B, _ = x_tm.shape
    H = h0.shape[-1]
    K = w2t.shape[-1]
    return pl.pallas_call(
        lstm_head_kernel,
        out_shape=(jax.ShapeDtypeStruct((T, B, K), jnp.float32),
                   jax.ShapeDtypeStruct((B, H), jnp.float32),
                   jax.ShapeDtypeStruct((B, H), jnp.float32)),
        in_specs=[_VMEM] * 10,
        out_specs=(_VMEM, _VMEM, _VMEM),
        scratch_shapes=[pltpu.VMEM((4 * T, B, H), jnp.float32),
                        pltpu.VMEM((T, B, H), jnp.float32)],
    )(x_tm, h0, c0, wih_g, whh_g, b_g, w1t, b1, w2t, b2)


# --------------------------------------------------------------------------------------
# Module wrapper (parameters + forward), matching the PyTorch module semantics.
# --------------------------------------------------------------------------------------
def init_params(key, K, hidden_dim, num_layers=1):
    H = hidden_dim
    scale = 0.1
    keys = jax.random.split(key, 4 * num_layers + 4)
    wih_g, whh_g, b_g = [], [], []
    for l in range(num_layers):
        in_dim = K if l == 0 else H
        k0, k1, k2, k3 = keys[4 * l:4 * l + 4]
        # Per-gate layout [i, f, g, o]: avoids sub-vreg gate slicing inside the kernel.
        wih_g.append(scale * jax.random.normal(k0, (4, in_dim, H), jnp.float32))
        whh_g.append(scale * jax.random.normal(k1, (4, H, H), jnp.float32))
        b_ih = scale * jax.random.normal(k2, (4, 1, H), jnp.float32)
        b_hh = scale * jax.random.normal(k3, (4, 1, H), jnp.float32)
        b_g.append(b_ih + b_hh)                      # combined bias, as in nn.LSTM
    kw1, kb1, kw2, kb2 = keys[4 * num_layers:]
    return dict(
        K=K, hidden_dim=H, num_layers=num_layers,
        Wih_g=wih_g, Whh_g=whh_g, b_g=b_g,
        # module __init__ creates zero-valued learnable initial states (L, 1, H)
        h_init=jnp.zeros((num_layers, 1, H), jnp.float32),
        c_init=jnp.zeros((num_layers, 1, H), jnp.float32),
        W1_T=scale * jax.random.normal(kw1, (H, K), jnp.float32),
        b1=scale * jax.random.normal(kb1, (1, K), jnp.float32),
        W2_T=scale * jax.random.normal(kw2, (K, K), jnp.float32),
        b2=scale * jax.random.normal(kb2, (1, K), jnp.float32),
    )


def autoregressive_forward(params, seq, h_state=None):
    """seq: (B, T, K) batch-first, matching the PyTorch module."""
    bs, T, K = seq.shape
    L, H = params["num_layers"], params["hidden_dim"]
    if h_state is None:
        h = jnp.tile(params["h_init"], (1, bs, 1))   # (L, B, H)
        c = jnp.tile(params["c_init"], (1, bs, 1))
    else:
        h, c = h_state

    # Pad batch to the f32 sublane granularity (8) for full vreg/MXU row utilization.
    b_pad = max(8, ((bs + 7) // 8) * 8)
    pad = b_pad - bs
    x = jnp.transpose(seq, (1, 0, 2)).astype(jnp.float32)   # time-major (T, B, K)
    if pad:
        x = jnp.pad(x, ((0, 0), (0, pad), (0, 0)))
        h = jnp.pad(h, ((0, 0), (0, pad), (0, 0)))
        c = jnp.pad(c, ((0, 0), (0, pad), (0, 0)))

    h_last, c_last = [], []
    for l in range(L - 1):
        x, hT, cT = lstm_layer_pallas(x, h[l], c[l],
                                      params["Wih_g"][l], params["Whh_g"][l], params["b_g"][l])
        h_last.append(hT)
        c_last.append(cT)

    logits_tm, hT, cT = lstm_head_pallas(
        x, h[L - 1], c[L - 1],
        params["Wih_g"][L - 1], params["Whh_g"][L - 1], params["b_g"][L - 1],
        params["W1_T"], params["b1"], params["W2_T"], params["b2"])
    h_last.append(hT)
    c_last.append(cT)

    logits = jnp.transpose(logits_tm, (1, 0, 2))[:bs]        # back to (B, T, K)
    hT_all = jnp.stack(h_last)[:, :bs]
    cT_all = jnp.stack(c_last)[:, :bs]
    return logits, (hT_all, cT_all)


# --------------------------------------------------------------------------------------
# Pure-JAX reference for validation
# --------------------------------------------------------------------------------------
def forward_ref(params, seq):
    bs, T, K = seq.shape
    L, H = params["num_layers"], params["hidden_dim"]
    x = jnp.transpose(seq, (1, 0, 2)).astype(jnp.float32)
    h_last, c_last = [], []
    for l in range(L):
        h0 = jnp.tile(params["h_init"][l], (bs, 1))
        c0 = jnp.tile(params["c_init"][l], (bs, 1))
        wih, whh, b = params["Wih_g"][l], params["Whh_g"][l], params["b_g"][l]

        def step(carry, x_t):
            hp, cp = carry
            i = x_t @ wih[0] + hp @ whh[0] + b[0]
            f = x_t @ wih[1] + hp @ whh[1] + b[1]
            g = x_t @ wih[2] + hp @ whh[2] + b[2]
            o = x_t @ wih[3] + hp @ whh[3] + b[3]
            cn = jax.nn.sigmoid(f) * cp + jax.nn.sigmoid(i) * jnp.tanh(g)
            hn = jax.nn.sigmoid(o) * jnp.tanh(cn)
            return (hn, cn), hn

        (hT, cT), x = lax.scan(step, (h0, c0), x)
        h_last.append(hT)
        c_last.append(cT)
    flat = jnp.transpose(x, (1, 0, 2)).reshape(bs * T, H)
    hid = jnp.maximum(flat @ params["W1_T"] + params["b1"], 0.0)
    logits = hid @ params["W2_T"] + params["b2"]
    return logits.reshape(bs, T, K), (jnp.stack(h_last), jnp.stack(c_last))


if __name__ == "__main__":
    key = jax.random.PRNGKey(0)
    kp, kx, kp2 = jax.random.split(key, 3)

    B, T, K, H = 2, 8, 16, 32
    params = init_params(kp, K=K, hidden_dim=H, num_layers=1)
    seq = jax.random.normal(kx, (B, T, K), jnp.float32)

    logits, (hT, cT) = autoregressive_forward(params, seq)
    jax.block_until_ready((logits, hT, cT))

    ref_logits, (ref_hT, ref_cT) = forward_ref(params, seq)
    assert logits.shape == (B, T, K) and hT.shape == (1, B, H) and cT.shape == (1, B, H)
    assert jnp.allclose(logits, ref_logits, atol=1e-5, rtol=1e-5)
    assert jnp.allclose(hT, ref_hT, atol=1e-5, rtol=1e-5)
    assert jnp.allclose(cT, ref_cT, atol=1e-5, rtol=1e-5)

    # Also exercise the num_layers > 1 path (layer 0 uses the non-fused layer kernel).
    params2 = init_params(kp2, K=K, hidden_dim=H, num_layers=2)
    logits2, (hT2, cT2) = autoregressive_forward(params2, seq)
    jax.block_until_ready((logits2, hT2, cT2))
    ref2, (rh2, rc2) = forward_ref(params2, seq)
    assert jnp.allclose(logits2, ref2, atol=1e-5, rtol=1e-5)
    assert jnp.allclose(hT2, rh2, atol=1e-5, rtol=1e-5)
    assert jnp.allclose(cT2, rc2, atol=1e-5, rtol=1e-5)

    print("KERNEL_OK")
</pallas_src>

<mosaic_0001>
module attributes {stable_mosaic.version = 11 : i64} {
  func.func @lstm_head_kernel(%arg0: memref<8x8x16xf32, #tpu.memory_space<vmem>>, %arg1: memref<8x32xf32, #tpu.memory_space<vmem>>, %arg2: memref<8x32xf32, #tpu.memory_space<vmem>>, %arg3: memref<4x16x32xf32, #tpu.memory_space<vmem>>, %arg4: memref<4x32x32xf32, #tpu.memory_space<vmem>>, %arg5: memref<4x1x32xf32, #tpu.memory_space<vmem>>, %arg6: memref<32x16xf32, #tpu.memory_space<vmem>>, %arg7: memref<1x16xf32, #tpu.memory_space<vmem>>, %arg8: memref<16x16xf32, #tpu.memory_space<vmem>>, %arg9: memref<1x16xf32, #tpu.memory_space<vmem>>, %arg10: memref<8x8x16xf32, #tpu.memory_space<vmem>>, %arg11: memref<8x32xf32, #tpu.memory_space<vmem>>, %arg12: memref<8x32xf32, #tpu.memory_space<vmem>>, %arg13: memref<32x8x32xf32, #tpu.memory_space<vmem>>, %arg14: memref<8x8x32xf32, #tpu.memory_space<vmem>>) attributes {dimension_semantics = [], scalar_prefetch = 0 : i64, scratch_operands = 2 : i64, tpu.core_type = #tpu.core_type<tc>} {
    %c0 = arith.constant 0 : index
    %c0_0 = arith.constant 0 : index
    %c0_1 = arith.constant 0 : index
    %0 = vector.load %arg0[%c0, %c0_0, %c0_1] : memref<8x8x16xf32, #tpu.memory_space<vmem>>, vector<8x8x16xf32>
    %1 = vector.shape_cast %0 : vector<8x8x16xf32> to vector<64x16xf32>
    %c0_2 = arith.constant 0 : index
    %c0_3 = arith.constant 0 : index
    %2 = vector.load %arg1[%c0_2, %c0_3] : memref<8x32xf32, #tpu.memory_space<vmem>>, vector<8x32xf32>
    %c0_4 = arith.constant 0 : index
    %c0_5 = arith.constant 0 : index
    %3 = vector.load %arg2[%c0_4, %c0_5] : memref<8x32xf32, #tpu.memory_space<vmem>>, vector<8x32xf32>
    %c0_6 = arith.constant 0 : index
    %c0_7 = arith.constant 0 : index
    %c0_8 = arith.constant 0 : index
    %4 = vector.load %arg3[%c0_6, %c0_7, %c0_8] : memref<4x16x32xf32, #tpu.memory_space<vmem>>, vector<1x16x32xf32>
    %5 = vector.shape_cast %4 : vector<1x16x32xf32> to vector<16x32xf32>
    %cst = arith.constant dense<0.000000e+00> : vector<64x32xf32>
    %6 = tpu.matmul %1, %5, %cst {dimension_numbers = #tpu.dot_dimension_numbers<[1], [0], [0], [1], [0, 0, 1, 1], [], []>} : vector<64x16xf32>, vector<16x32xf32>, vector<64x32xf32> -> vector<64x32xf32>
    %c0_9 = arith.constant 0 : index
    %c0_10 = arith.constant 0 : index
    %c0_11 = arith.constant 0 : index
    %7 = vector.load %arg5[%c0_9, %c0_10, %c0_11] : memref<4x1x32xf32, #tpu.memory_space<vmem>>, vector<1x1x32xf32>
    %8 = vector.shape_cast %7 : vector<1x1x32xf32> to vector<1x32xf32>
    %9 = vector.broadcast %8 : vector<1x32xf32> to vector<64x32xf32>
    %10 = arith.addf %6, %9 : vector<64x32xf32>
    %11 = vector.shape_cast %10 : vector<64x32xf32> to vector<8x8x32xf32>
    %c0_12 = arith.constant 0 : index
    %c0_13 = arith.constant 0 : index
    %c0_14 = arith.constant 0 : index
    %12 = vector.load %arg13[%c0_12, %c0_13, %c0_14] : memref<32x8x32xf32, #tpu.memory_space<vmem>>, vector<8x8x32xf32>
    tpu.vector_store %arg13[%c0_12, %c0_13, %c0_14], %11 {strides = array<i32>} : memref<32x8x32xf32, #tpu.memory_space<vmem>>, vector<8x8x32xf32>,
    %c1 = arith.constant 1 : index
    %c0_15 = arith.constant 0 : index
    %c0_16 = arith.constant 0 : index
    %13 = vector.load %arg3[%c1, %c0_15, %c0_16] : memref<4x16x32xf32, #tpu.memory_space<vmem>>, vector<1x16x32xf32>
    %14 = vector.shape_cast %13 : vector<1x16x32xf32> to vector<16x32xf32>
    %cst_17 = arith.constant dense<0.000000e+00> : vector<64x32xf32>
    %15 = tpu.matmul %1, %14, %cst_17 {dimension_numbers = #tpu.dot_dimension_numbers<[1], [0], [0], [1], [0, 0, 1, 1], [], []>} : vector<64x16xf32>, vector<16x32xf32>, vector<64x32xf32> -> vector<64x32xf32>
    %c1_18 = arith.constant 1 : index
    %c0_19 = arith.constant 0 : index
    %c0_20 = arith.constant 0 : index
    %16 = vector.load %arg5[%c1_18, %c0_19, %c0_20] : memref<4x1x32xf32, #tpu.memory_space<vmem>>, vector<1x1x32xf32>
    %17 = vector.shape_cast %16 : vector<1x1x32xf32> to vector<1x32xf32>
    %18 = vector.broadcast %17 : vector<1x32xf32> to vector<64x32xf32>
    %19 = arith.addf %15, %18 : vector<64x32xf32>
    %20 = vector.shape_cast %19 : vector<64x32xf32> to vector<8x8x32xf32>
    %c8 = arith.constant 8 : index
    %c0_21 = arith.constant 0 : index
    %c0_22 = arith.constant 0 : index
    %21 = vector.load %arg13[%c8, %c0_21, %c0_22] : memref<32x8x32xf32, #tpu.memory_space<vmem>>, vector<8x8x32xf32>
    tpu.vector_store %arg13[%c8, %c0_21, %c0_22], %20 {strides = array<i32>} : memref<32x8x32xf32, #tpu.memory_space<vmem>>, vector<8x8x32xf32>,
    %c2 = arith.constant 2 : index
    %c0_23 = arith.constant 0 : index
    %c0_24 = arith.constant 0 : index
    %22 = vector.load %arg3[%c2, %c0_23, %c0_24] : memref<4x16x32xf32, #tpu.memory_space<vmem>>, vector<1x16x32xf32>
    %23 = vector.shape_cast %22 : vector<1x16x32xf32> to vector<16x32xf32>
    %cst_25 = arith.constant dense<0.000000e+00> : vector<64x32xf32>
    %24 = tpu.matmul %1, %23, %cst_25 {dimension_numbers = #tpu.dot_dimension_numbers<[1], [0], [0], [1], [0, 0, 1, 1], [], []>} : vector<64x16xf32>, vector<16x32xf32>, vector<64x32xf32> -> vector<64x32xf32>
    %c2_26 = arith.constant 2 : index
    %c0_27 = arith.constant 0 : index
    %c0_28 = arith.constant 0 : index
    %25 = vector.load %arg5[%c2_26, %c0_27, %c0_28] : memref<4x1x32xf32, #tpu.memory_space<vmem>>, vector<1x1x32xf32>
    %26 = vector.shape_cast %25 : vector<1x1x32xf32> to vector<1x32xf32>
    %27 = vector.broadcast %26 : vector<1x32xf32> to vector<64x32xf32>
    %28 = arith.addf %24, %27 : vector<64x32xf32>
    %29 = vector.shape_cast %28 : vector<64x32xf32> to vector<8x8x32xf32>
    %c16 = arith.constant 16 : index
    %c0_29 = arith.constant 0 : index
    %c0_30 = arith.constant 0 : index
    %30 = vector.load %arg13[%c16, %c0_29, %c0_30] : memref<32x8x32xf32, #tpu.memory_space<vmem>>, vector<8x8x32xf32>
    tpu.vector_store %arg13[%c16, %c0_29, %c0_30], %29 {strides = array<i32>} : memref<32x8x32xf32, #tpu.memory_space<vmem>>, vector<8x8x32xf32>,
    %c3 = arith.constant 3 : index
    %c0_31 = arith.constant 0 : index
    %c0_32 = arith.constant 0 : index
    %31 = vector.load %arg3[%c3, %c0_31, %c0_32] : memref<4x16x32xf32, #tpu.memory_space<vmem>>, vector<1x16x32xf32>
    %32 = vector.shape_cast %31 : vector<1x16x32xf32> to vector<16x32xf32>
    %cst_33 = arith.constant dense<0.000000e+00> : vector<64x32xf32>
    %33 = tpu.matmul %1, %32, %cst_33 {dimension_numbers = #tpu.dot_dimension_numbers<[1], [0], [0], [1], [0, 0, 1, 1], [], []>} : vector<64x16xf32>, vector<16x32xf32>, vector<64x32xf32> -> vector<64x32xf32>
    %c3_34 = arith.constant 3 : index
    %c0_35 = arith.constant 0 : index
    %c0_36 = arith.constant 0 : index
    %34 = vector.load %arg5[%c3_34, %c0_35, %c0_36] : memref<4x1x32xf32, #tpu.memory_space<vmem>>, vector<1x1x32xf32>
    %35 = vector.shape_cast %34 : vector<1x1x32xf32> to vector<1x32xf32>
    %36 = vector.broadcast %35 : vector<1x32xf32> to vector<64x32xf32>
    %37 = arith.addf %33, %36 : vector<64x32xf32>
    %38 = vector.shape_cast %37 : vector<64x32xf32> to vector<8x8x32xf32>
    %c24 = arith.constant 24 : index
    %c0_37 = arith.constant 0 : index
    %c0_38 = arith.constant 0 : index
    %39 = vector.load %arg13[%c24, %c0_37, %c0_38] : memref<32x8x32xf32, #tpu.memory_space<vmem>>, vector<8x8x32xf32>
    tpu.vector_store %arg13[%c24, %c0_37, %c0_38], %38 {strides = array<i32>} : memref<32x8x32xf32, #tpu.memory_space<vmem>>, vector<8x8x32xf32>,
    %c0_i32 = arith.constant 0 : i32
    %c0_i32_39 = arith.constant 0 : i32
    %40 = arith.addi %c0_i32_39, %c0_i32 : i32
    %41 = arith.index_cast %40 : i32 to index
    %c0_40 = arith.constant 0 : index
    %c0_41 = arith.constant 0 : index
    %42 = vector.load %arg13[%41, %c0_40, %c0_41] : memref<32x8x32xf32, #tpu.memory_space<vmem>>, vector<1x8x32xf32>
    %43 = vector.shape_cast %42 : vector<1x8x32xf32> to vector<8x32xf32>
    %c0_42 = arith.constant 0 : index
    %c0_43 = arith.constant 0 : index
    %c0_44 = arith.constant 0 : index
    %44 = vector.load %arg4[%c0_42, %c0_43, %c0_44] : memref<4x32x32xf32, #tpu.memory_space<vmem>>, vector<1x32x32xf32>
    %45 = vector.shape_cast %44 : vector<1x32x32xf32> to vector<32x32xf32>
    %cst_45 = arith.constant dense<0.000000e+00> : vector<8x32xf32>
    %46 = tpu.matmul %2, %45, %cst_45 {dimension_numbers = #tpu.dot_dimension_numbers<[1], [0], [0], [1], [0, 0, 1, 1], [], []>} : vector<8x32xf32>, vector<32x32xf32>, vector<8x32xf32> -> vector<8x32xf32>
    %47 = arith.addf %43, %46 : vector<8x32xf32>
    %c8_i32 = arith.constant 8 : i32
    %48 = arith.addi %c8_i32, %c0_i32 : i32
    %49 = arith.index_cast %48 : i32 to index
    %c0_46 = arith.constant 0 : index
    %c0_47 = arith.constant 0 : index
    %50 = vector.load %arg13[%49, %c0_46, %c0_47] : memref<32x8x32xf32, #tpu.memory_space<vmem>>, vector<1x8x32xf32>
    %51 = vector.shape_cast %50 : vector<1x8x32xf32> to vector<8x32xf32>
    %c1_48 = arith.constant 1 : index
    %c0_49 = arith.constant 0 : index
    %c0_50 = arith.constant 0 : index
    %52 = vector.load %arg4[%c1_48, %c0_49, %c0_50] : memref<4x32x32xf32, #tpu.memory_space<vmem>>, vector<1x32x32xf32>
    %53 = vector.shape_cast %52 : vector<1x32x32xf32> to vector<32x32xf32>
    %cst_51 = arith.constant dense<0.000000e+00> : vector<8x32xf32>
    %54 = tpu.matmul %2, %53, %cst_51 {dimension_numbers = #tpu.dot_dimension_numbers<[1], [0], [0], [1], [0, 0, 1, 1], [], []>} : vector<8x32xf32>, vector<32x32xf32>, vector<8x32xf32> -> vector<8x32xf32>
    %55 = arith.addf %51, %54 : vector<8x32xf32>
    %c16_i32 = arith.constant 16 : i32
    %56 = arith.addi %c16_i32, %c0_i32 : i32
    %57 = arith.index_cast %56 : i32 to index
    %c0_52 = arith.constant 0 : index
    %c0_53 = arith.constant 0 : index
    %58 = vector.load %arg13[%57, %c0_52, %c0_53] : memref<32x8x32xf32, #tpu.memory_space<vmem>>, vector<1x8x32xf32>
    %59 = vector.shape_cast %58 : vector<1x8x32xf32> to vector<8x32xf32>
    %c2_54 = arith.constant 2 : index
    %c0_55 = arith.constant 0 : index
    %c0_56 = arith.constant 0 : index
    %60 = vector.load %arg4[%c2_54, %c0_55, %c0_56] : memref<4x32x32xf32, #tpu.memory_space<vmem>>, vector<1x32x32xf32>
    %61 = vector.shape_cast %60 : vector<1x32x32xf32> to vector<32x32xf32>
    %cst_57 = arith.constant dense<0.000000e+00> : vector<8x32xf32>
    %62 = tpu.matmul %2, %61, %cst_57 {dimension_numbers = #tpu.dot_dimension_numbers<[1], [0], [0], [1], [0, 0, 1, 1], [], []>} : vector<8x32xf32>, vector<32x32xf32>, vector<8x32xf32> -> vector<8x32xf32>
    %63 = arith.addf %59, %62 : vector<8x32xf32>
    %c24_i32 = arith.constant 24 : i32
    %64 = arith.addi %c24_i32, %c0_i32 : i32
    %65 = arith.index_cast %64 : i32 to index
    %c0_58 = arith.constant 0 : index
    %c0_59 = arith.constant 0 : index
    %66 = vector.load %arg13[%65, %c0_58, %c0_59] : memref<32x8x32xf32, #tpu.memory_space<vmem>>, vector<1x8x32xf32>
    %67 = vector.shape_cast %66 : vector<1x8x32xf32> to vector<8x32xf32>
    %c3_60 = arith.constant 3 : index
    %c0_61 = arith.constant 0 : index
    %c0_62 = arith.constant 0 : index
    %68 = vector.load %arg4[%c3_60, %c0_61, %c0_62] : memref<4x32x32xf32, #tpu.memory_space<vmem>>, vector<1x32x32xf32>
    %69 = vector.shape_cast %68 : vector<1x32x32xf32> to vector<32x32xf32>
    %cst_63 = arith.constant dense<0.000000e+00> : vector<8x32xf32>
    %70 = tpu.matmul %2, %69, %cst_63 {dimension_numbers = #tpu.dot_dimension_numbers<[1], [0], [0], [1], [0, 0, 1, 1], [], []>} : vector<8x32xf32>, vector<32x32xf32>, vector<8x32xf32> -> vector<8x32xf32>
    %71 = arith.addf %67, %70 : vector<8x32xf32>
    %72 = arith.negf %47 : vector<8x32xf32>
    %73 = math.exp %72 : vector<8x32xf32>
    %cst_64 = arith.constant 1.000000e+00 : f32
    %74 = vector.broadcast %cst_64 : f32 to vector<8x32xf32>
    %75 = arith.addf %74, %73 : vector<8x32xf32>
    %76 = arith.divf %74, %75 : vector<8x32xf32>
    %77 = arith.negf %55 : vector<8x32xf32>
    %78 = math.exp %77 : vector<8x32xf32>
    %cst_65 = arith.constant 1.000000e+00 : f32
    %79 = vector.broadcast %cst_65 : f32 to vector<8x32xf32>
    %80 = arith.addf %79, %78 : vector<8x32xf32>
    %81 = arith.divf %79, %80 : vector<8x32xf32>
    %82 = math.tanh %63 : vector<8x32xf32>
    %83 = arith.negf %71 : vector<8x32xf32>
    %84 = math.exp %83 : vector<8x32xf32>
    %cst_66 = arith.constant 1.000000e+00 : f32
    %85 = vector.broadcast %cst_66 : f32 to vector<8x32xf32>
    %86 = arith.addf %85, %84 : vector<8x32xf32>
    %87 = arith.divf %85, %86 : vector<8x32xf32>
    %88 = arith.mulf %81, %3 : vector<8x32xf32>
    %89 = arith.mulf %76, %82 : vector<8x32xf32>
    %90 = arith.addf %88, %89 : vector<8x32xf32>
    %91 = math.tanh %90 : vector<8x32xf32>
    %92 = arith.mulf %87, %91 : vector<8x32xf32>
    %93 = arith.index_cast %c0_i32 : i32 to index
    %c0_67 = arith.constant 0 : index
    %c0_68 = arith.constant 0 : index
    %94 = vector.load %arg14[%93, %c0_67, %c0_68] : memref<8x8x32xf32, #tpu.memory_space<vmem>>, vector<1x8x32xf32>
    %95 = vector.shape_cast %94 : vector<1x8x32xf32> to vector<8x32xf32>
    %96 = vector.shape_cast %92 : vector<8x32xf32> to vector<1x8x32xf32>
    tpu.vector_store %arg14[%93, %c0_67, %c0_68], %96 {strides = array<i32>} : memref<8x8x32xf32, #tpu.memory_space<vmem>>, vector<1x8x32xf32>,
    %c1_i32 = arith.constant 1 : i32
    %c0_i32_69 = arith.constant 0 : i32
    %97 = arith.addi %c0_i32_69, %c1_i32 : i32
    %98 = arith.index_cast %97 : i32 to index
    %c0_70 = arith.constant 0 : index
    %c0_71 = arith.constant 0 : index
    %99 = vector.load %arg13[%98, %c0_70, %c0_71] : memref<32x8x32xf32, #tpu.memory_space<vmem>>, vector<1x8x32xf32>
    %100 = vector.shape_cast %99 : vector<1x8x32xf32> to vector<8x32xf32>
    %c0_72 = arith.constant 0 : index
    %c0_73 = arith.constant 0 : index
    %c0_74 = arith.constant 0 : index
    %101 = vector.load %arg4[%c0_72, %c0_73, %c0_74] : memref<4x32x32xf32, #tpu.memory_space<vmem>>, vector<1x32x32xf32>
    %102 = vector.shape_cast %101 : vector<1x32x32xf32> to vector<32x32xf32>
    %cst_75 = arith.constant dense<0.000000e+00> : vector<8x32xf32>
    %103 = tpu.matmul %92, %102, %cst_75 {dimension_numbers = #tpu.dot_dimension_numbers<[1], [0], [0], [1], [0, 0, 1, 1], [], []>} : vector<8x32xf32>, vector<32x32xf32>, vector<8x32xf32> -> vector<8x32xf32>
    %104 = arith.addf %100, %103 : vector<8x32xf32>
    %c8_i32_76 = arith.constant 8 : i32
    %105 = arith.addi %c8_i32_76, %c1_i32 : i32
    %106 = arith.index_cast %105 : i32 to index
    %c0_77 = arith.constant 0 : index
    %c0_78 = arith.constant 0 : index
    %107 = vector.load %arg13[%106, %c0_77, %c0_78] : memref<32x8x32xf32, #tpu.memory_space<vmem>>, vector<1x8x32xf32>
    %108 = vector.shape_cast %107 : vector<1x8x32xf32> to vector<8x32xf32>
    %c1_79 = arith.constant 1 : index
    %c0_80 = arith.constant 0 : index
    %c0_81 = arith.constant 0 : index
    %109 = vector.load %arg4[%c1_79, %c0_80, %c0_81] : memref<4x32x32xf32, #tpu.memory_space<vmem>>, vector<1x32x32xf32>
    %110 = vector.shape_cast %109 : vector<1x32x32xf32> to vector<32x32xf32>
    %cst_82 = arith.constant dense<0.000000e+00> : vector<8x32xf32>
    %111 = tpu.matmul %92, %110, %cst_82 {dimension_numbers = #tpu.dot_dimension_numbers<[1], [0], [0], [1], [0, 0, 1, 1], [], []>} : vector<8x32xf32>, vector<32x32xf32>, vector<8x32xf32> -> vector<8x32xf32>
    %112 = arith.addf %108, %111 : vector<8x32xf32>
    %c16_i32_83 = arith.constant 16 : i32
    %113 = arith.addi %c16_i32_83, %c1_i32 : i32
    %114 = arith.index_cast %113 : i32 to index
    %c0_84 = arith.constant 0 : index
    %c0_85 = arith.constant 0 : index
    %115 = vector.load %arg13[%114, %c0_84, %c0_85] : memref<32x8x32xf32, #tpu.memory_space<vmem>>, vector<1x8x32xf32>
    %116 = vector.shape_cast %115 : vector<1x8x32xf32> to vector<8x32xf32>
    %c2_86 = arith.constant 2 : index
    %c0_87 = arith.constant 0 : index
    %c0_88 = arith.constant 0 : index
    %117 = vector.load %arg4[%c2_86, %c0_87, %c0_88] : memref<4x32x32xf32, #tpu.memory_space<vmem>>, vector<1x32x32xf32>
    %118 = vector.shape_cast %117 : vector<1x32x32xf32> to vector<32x32xf32>
    %cst_89 = arith.constant dense<0.000000e+00> : vector<8x32xf32>
    %119 = tpu.matmul %92, %118, %cst_89 {dimension_numbers = #tpu.dot_dimension_numbers<[1], [0], [0], [1], [0, 0, 1, 1], [], []>} : vector<8x32xf32>, vector<32x32xf32>, vector<8x32xf32> -> vector<8x32xf32>
    %120 = arith.addf %116, %119 : vector<8x32xf32>
    %c24_i32_90 = arith.constant 24 : i32
    %121 = arith.addi %c24_i32_90, %c1_i32 : i32
    %122 = arith.index_cast %121 : i32 to index
    %c0_91 = arith.constant 0 : index
    %c0_92 = arith.constant 0 : index
    %123 = vector.load %arg13[%122, %c0_91, %c0_92] : memref<32x8x32xf32, #tpu.memory_space<vmem>>, vector<1x8x32xf32>
    %124 = vector.shape_cast %123 : vector<1x8x32xf32> to vector<8x32xf32>
    %c3_93 = arith.constant 3 : index
    %c0_94 = arith.constant 0 : index
    %c0_95 = arith.constant 0 : index
    %125 = vector.load %arg4[%c3_93, %c0_94, %c0_95] : memref<4x32x32xf32, #tpu.memory_space<vmem>>, vector<1x32x32xf32>
    %126 = vector.shape_cast %125 : vector<1x32x32xf32> to vector<32x32xf32>
    %cst_96 = arith.constant dense<0.000000e+00> : vector<8x32xf32>
    %127 = tpu.matmul %92, %126, %cst_96 {dimension_numbers = #tpu.dot_dimension_numbers<[1], [0], [0], [1], [0, 0, 1, 1], [], []>} : vector<8x32xf32>, vector<32x32xf32>, vector<8x32xf32> -> vector<8x32xf32>
    %128 = arith.addf %124, %127 : vector<8x32xf32>
    %129 = arith.negf %104 : vector<8x32xf32>
    %130 = math.exp %129 : vector<8x32xf32>
    %cst_97 = arith.constant 1.000000e+00 : f32
    %131 = vector.broadcast %cst_97 : f32 to vector<8x32xf32>
    %132 = arith.addf %131, %130 : vector<8x32xf32>
    %133 = arith.divf %131, %132 : vector<8x32xf32>
    %134 = arith.negf %112 : vector<8x32xf32>
    %135 = math.exp %134 : vector<8x32xf32>
    %cst_98 = arith.constant 1.000000e+00 : f32
    %136 = vector.broadcast %cst_98 : f32 to vector<8x32xf32>
    %137 = arith.addf %136, %135 : vector<8x32xf32>
    %138 = arith.divf %136, %137 : vector<8x32xf32>
    %139 = math.tanh %120 : vector<8x32xf32>
    %140 = arith.negf %128 : vector<8x32xf32>
    %141 = math.exp %140 : vector<8x32xf32>
    %cst_99 = arith.constant 1.000000e+00 : f32
    %142 = vector.broadcast %cst_99 : f32 to vector<8x32xf32>
    %143 = arith.addf %142, %141 : vector<8x32xf32>
    %144 = arith.divf %142, %143 : vector<8x32xf32>
    %145 = arith.mulf %138, %90 : vector<8x32xf32>
    %146 = arith.mulf %133, %139 : vector<8x32xf32>
    %147 = arith.addf %145, %146 : vector<8x32xf32>
    %148 = math.tanh %147 : vector<8x32xf32>
    %149 = arith.mulf %144, %148 : vector<8x32xf32>
    %150 = arith.index_cast %c1_i32 : i32 to index
    %c0_100 = arith.constant 0 : index
    %c0_101 = arith.constant 0 : index
    %151 = vector.load %arg14[%150, %c0_100, %c0_101] : memref<8x8x32xf32, #tpu.memory_space<vmem>>, vector<1x8x32xf32>
    %152 = vector.shape_cast %151 : vector<1x8x32xf32> to vector<8x32xf32>
    %153 = vector.shape_cast %149 : vector<8x32xf32> to vector<1x8x32xf32>
    tpu.vector_store %arg14[%150, %c0_100, %c0_101], %153 {strides = array<i32>} : memref<8x8x32xf32, #tpu.memory_space<vmem>>, vector<1x8x32xf32>,
    %c2_i32 = arith.constant 2 : i32
    %c0_i32_102 = arith.constant 0 : i32
    %154 = arith.addi %c0_i32_102, %c2_i32 : i32
    %155 = arith.index_cast %154 : i32 to index
    %c0_103 = arith.constant 0 : index
    %c0_104 = arith.constant 0 : index
    %156 = vector.load %arg13[%155, %c0_103, %c0_104] : memref<32x8x32xf32, #tpu.memory_space<vmem>>, vector<1x8x32xf32>
    %157 = vector.shape_cast %156 : vector<1x8x32xf32> to vector<8x32xf32>
    %c0_105 = arith.constant 0 : index
    %c0_106 = arith.constant 0 : index
    %c0_107 = arith.constant 0 : index
    %158 = vector.load %arg4[%c0_105, %c0_106, %c0_107] : memref<4x32x32xf32, #tpu.memory_space<vmem>>, vector<1x32x32xf32>
    %159 = vector.shape_cast %158 : vector<1x32x32xf32> to vector<32x32xf32>
    %cst_108 = arith.constant dense<0.000000e+00> : vector<8x32xf32>
    %160 = tpu.matmul %149, %159, %cst_108 {dimension_numbers = #tpu.dot_dimension_numbers<[1], [0], [0], [1], [0, 0, 1, 1], [], []>} : vector<8x32xf32>, vector<32x32xf32>, vector<8x32xf32> -> vector<8x32xf32>
    %161 = arith.addf %157, %160 : vector<8x32xf32>
    %c8_i32_109 = arith.constant 8 : i32
    %162 = arith.addi %c8_i32_109, %c2_i32 : i32
    %163 = arith.index_cast %162 : i32 to index
    %c0_110 = arith.constant 0 : index
    %c0_111 = arith.constant 0 : index
    %164 = vector.load %arg13[%163, %c0_110, %c0_111] : memref<32x8x32xf32, #tpu.memory_space<vmem>>, vector<1x8x32xf32>
    %165 = vector.shape_cast %164 : vector<1x8x32xf32> to vector<8x32xf32>
    %c1_112 = arith.constant 1 : index
    %c0_113 = arith.constant 0 : index
    %c0_114 = arith.constant 0 : index
    %166 = vector.load %arg4[%c1_112, %c0_113, %c0_114] : memref<4x32x32xf32, #tpu.memory_space<vmem>>, vector<1x32x32xf32>
    %167 = vector.shape_cast %166 : vector<1x32x32xf32> to vector<32x32xf32>
    %cst_115 = arith.constant dense<0.000000e+00> : vector<8x32xf32>
    %168 = tpu.matmul %149, %167, %cst_115 {dimension_numbers = #tpu.dot_dimension_numbers<[1], [0], [0], [1], [0, 0, 1, 1], [], []>} : vector<8x32xf32>, vector<32x32xf32>, vector<8x32xf32> -> vector<8x32xf32>
    %169 = arith.addf %165, %168 : vector<8x32xf32>
    %c16_i32_116 = arith.constant 16 : i32
    %170 = arith.addi %c16_i32_116, %c2_i32 : i32
    %171 = arith.index_cast %170 : i32 to index
    %c0_117 = arith.constant 0 : index
    %c0_118 = arith.constant 0 : index
    %172 = vector.load %arg13[%171, %c0_117, %c0_118] : memref<32x8x32xf32, #tpu.memory_space<vmem>>, vector<1x8x32xf32>
    %173 = vector.shape_cast %172 : vector<1x8x32xf32> to vector<8x32xf32>
    %c2_119 = arith.constant 2 : index
    %c0_120 = arith.constant 0 : index
    %c0_121 = arith.constant 0 : index
    %174 = vector.load %arg4[%c2_119, %c0_120, %c0_121] : memref<4x32x32xf32, #tpu.memory_space<vmem>>, vector<1x32x32xf32>
    %175 = vector.shape_cast %174 : vector<1x32x32xf32> to vector<32x32xf32>
    %cst_122 = arith.constant dense<0.000000e+00> : vector<8x32xf32>
    %176 = tpu.matmul %149, %175, %cst_122 {dimension_numbers = #tpu.dot_dimension_numbers<[1], [0], [0], [1], [0, 0, 1, 1], [], []>} : vector<8x32xf32>, vector<32x32xf32>, vector<8x32xf32> -> vector<8x32xf32>
    %177 = arith.addf %173, %176 : vector<8x32xf32>
    %c24_i32_123 = arith.constant 24 : i32
    %178 = arith.addi %c24_i32_123, %c2_i32 : i32
    %179 = arith.index_cast %178 : i32 to index
    %c0_124 = arith.constant 0 : index
    %c0_125 = arith.constant 0 : index
    %180 = vector.load %arg13[%179, %c0_124, %c0_125] : memref<32x8x32xf32, #tpu.memory_space<vmem>>, vector<1x8x32xf32>
    %181 = vector.shape_cast %180 : vector<1x8x32xf32> to vector<8x32xf32>
    %c3_126 = arith.constant 3 : index
    %c0_127 = arith.constant 0 : index
    %c0_128 = arith.constant 0 : index
    %182 = vector.load %arg4[%c3_126, %c0_127, %c0_128] : memref<4x32x32xf32, #tpu.memory_space<vmem>>, vector<1x32x32xf32>
    %183 = vector.shape_cast %182 : vector<1x32x32xf32> to vector<32x32xf32>
    %cst_129 = arith.constant dense<0.000000e+00> : vector<8x32xf32>
    %184 = tpu.matmul %149, %183, %cst_129 {dimension_numbers = #tpu.dot_dimension_numbers<[1], [0], [0], [1], [0, 0, 1, 1], [], []>} : vector<8x32xf32>, vector<32x32xf32>, vector<8x32xf32> -> vector<8x32xf32>
    %185 = arith.addf %181, %184 : vector<8x32xf32>
    %186 = arith.negf %161 : vector<8x32xf32>
    %187 = math.exp %186 : vector<8x32xf32>
    %cst_130 = arith.constant 1.000000e+00 : f32
    %188 = vector.broadcast %cst_130 : f32 to vector<8x32xf32>
    %189 = arith.addf %188, %187 : vector<8x32xf32>
    %190 = arith.divf %188, %189 : vector<8x32xf32>
    %191 = arith.negf %169 : vector<8x32xf32>
    %192 = math.exp %191 : vector<8x32xf32>
    %cst_131 = arith.constant 1.000000e+00 : f32
    %193 = vector.broadcast %cst_131 : f32 to vector<8x32xf32>
    %194 = arith.addf %193, %192 : vector<8x32xf32>
    %195 = arith.divf %193, %194 : vector<8x32xf32>
    %196 = math.tanh %177 : vector<8x32xf32>
    %197 = arith.negf %185 : vector<8x32xf32>
    %198 = math.exp %197 : vector<8x32xf32>
    %cst_132 = arith.constant 1.000000e+00 : f32
    %199 = vector.broadcast %cst_132 : f32 to vector<8x32xf32>
    %200 = arith.addf %199, %198 : vector<8x32xf32>
    %201 = arith.divf %199, %200 : vector<8x32xf32>
    %202 = arith.mulf %195, %147 : vector<8x32xf32>
    %203 = arith.mulf %190, %196 : vector<8x32xf32>
    %204 = arith.addf %202, %203 : vector<8x32xf32>
    %205 = math.tanh %204 : vector<8x32xf32>
    %206 = arith.mulf %201, %205 : vector<8x32xf32>
    %207 = arith.index_cast %c2_i32 : i32 to index
    %c0_133 = arith.constant 0 : index
    %c0_134 = arith.constant 0 : index
    %208 = vector.load %arg14[%207, %c0_133, %c0_134] : memref<8x8x32xf32, #tpu.memory_space<vmem>>, vector<1x8x32xf32>
    %209 = vector.shape_cast %208 : vector<1x8x32xf32> to vector<8x32xf32>
    %210 = vector.shape_cast %206 : vector<8x32xf32> to vector<1x8x32xf32>
    tpu.vector_store %arg14[%207, %c0_133, %c0_134], %210 {strides = array<i32>} : memref<8x8x32xf32, #tpu.memory_space<vmem>>, vector<1x8x32xf32>,
    %c3_i32 = arith.constant 3 : i32
    %c0_i32_135 = arith.constant 0 : i32
    %211 = arith.addi %c0_i32_135, %c3_i32 : i32
    %212 = arith.index_cast %211 : i32 to index
    %c0_136 = arith.constant 0 : index
    %c0_137 = arith.constant 0 : index
    %213 = vector.load %arg13[%212, %c0_136, %c0_137] : memref<32x8x32xf32, #tpu.memory_space<vmem>>, vector<1x8x32xf32>
    %214 = vector.shape_cast %213 : vector<1x8x32xf32> to vector<8x32xf32>
    %c0_138 = arith.constant 0 : index
    %c0_139 = arith.constant 0 : index
    %c0_140 = arith.constant 0 : index
    %215 = vector.load %arg4[%c0_138, %c0_139, %c0_140] : memref<4x32x32xf32, #tpu.memory_space<vmem>>, vector<1x32x32xf32>
    %216 = vector.shape_cast %215 : vector<1x32x32xf32> to vector<32x32xf32>
    %cst_141 = arith.constant dense<0.000000e+00> : vector<8x32xf32>
    %217 = tpu.matmul %206, %216, %cst_141 {dimension_numbers = #tpu.dot_dimension_numbers<[1], [0], [0], [1], [0, 0, 1, 1], [], []>} : vector<8x32xf32>, vector<32x32xf32>, vector<8x32xf32> -> vector<8x32xf32>
    %218 = arith.addf %214, %217 : vector<8x32xf32>
    %c8_i32_142 = arith.constant 8 : i32
    %219 = arith.addi %c8_i32_142, %c3_i32 : i32
    %220 = arith.index_cast %219 : i32 to index
    %c0_143 = arith.constant 0 : index
    %c0_144 = arith.constant 0 : index
    %221 = vector.load %arg13[%220, %c0_143, %c0_144] : memref<32x8x32xf32, #tpu.memory_space<vmem>>, vector<1x8x32xf32>
    %222 = vector.shape_cast %221 : vector<1x8x32xf32> to vector<8x32xf32>
    %c1_145 = arith.constant 1 : index
    %c0_146 = arith.constant 0 : index
    %c0_147 = arith.constant 0 : index
    %223 = vector.load %arg4[%c1_145, %c0_146, %c0_147] : memref<4x32x32xf32, #tpu.memory_space<vmem>>, vector<1x32x32xf32>
    %224 = vector.shape_cast %223 : vector<1x32x32xf32> to vector<32x32xf32>
    %cst_148 = arith.constant dense<0.000000e+00> : vector<8x32xf32>
    %225 = tpu.matmul %206, %224, %cst_148 {dimension_numbers = #tpu.dot_dimension_numbers<[1], [0], [0], [1], [0, 0, 1, 1], [], []>} : vector<8x32xf32>, vector<32x32xf32>, vector<8x32xf32> -> vector<8x32xf32>
    %226 = arith.addf %222, %225 : vector<8x32xf32>
    %c16_i32_149 = arith.constant 16 : i32
    %227 = arith.addi %c16_i32_149, %c3_i32 : i32
    %228 = arith.index_cast %227 : i32 to index
    %c0_150 = arith.constant 0 : index
    %c0_151 = arith.constant 0 : index
    %229 = vector.load %arg13[%228, %c0_150, %c0_151] : memref<32x8x32xf32, #tpu.memory_space<vmem>>, vector<1x8x32xf32>
    %230 = vector.shape_cast %229 : vector<1x8x32xf32> to vector<8x32xf32>
    %c2_152 = arith.constant 2 : index
    %c0_153 = arith.constant 0 : index
    %c0_154 = arith.constant 0 : index
    %231 = vector.load %arg4[%c2_152, %c0_153, %c0_154] : memref<4x32x32xf32, #tpu.memory_space<vmem>>, vector<1x32x32xf32>
    %232 = vector.shape_cast %231 : vector<1x32x32xf32> to vector<32x32xf32>
    %cst_155 = arith.constant dense<0.000000e+00> : vector<8x32xf32>
    %233 = tpu.matmul %206, %232, %cst_155 {dimension_numbers = #tpu.dot_dimension_numbers<[1], [0], [0], [1], [0, 0, 1, 1], [], []>} : vector<8x32xf32>, vector<32x32xf32>, vector<8x32xf32> -> vector<8x32xf32>
    %234 = arith.addf %230, %233 : vector<8x32xf32>
    %c24_i32_156 = arith.constant 24 : i32
    %235 = arith.addi %c24_i32_156, %c3_i32 : i32
    %236 = arith.index_cast %235 : i32 to index
    %c0_157 = arith.constant 0 : index
    %c0_158 = arith.constant 0 : index
    %237 = vector.load %arg13[%236, %c0_157, %c0_158] : memref<32x8x32xf32, #tpu.memory_space<vmem>>, vector<1x8x32xf32>
    %238 = vector.shape_cast %237 : vector<1x8x32xf32> to vector<8x32xf32>
    %c3_159 = arith.constant 3 : index
    %c0_160 = arith.constant 0 : index
    %c0_161 = arith.constant 0 : index
    %239 = vector.load %arg4[%c3_159, %c0_160, %c0_161] : memref<4x32x32xf32, #tpu.memory_space<vmem>>, vector<1x32x32xf32>
    %240 = vector.shape_cast %239 : vector<1x32x32xf32> to vector<32x32xf32>
    %cst_162 = arith.constant dense<0.000000e+00> : vector<8x32xf32>
    %241 = tpu.matmul %206, %240, %cst_162 {dimension_numbers = #tpu.dot_dimension_numbers<[1], [0], [0], [1], [0, 0, 1, 1], [], []>} : vector<8x32xf32>, vector<32x32xf32>, vector<8x32xf32> -> vector<8x32xf32>
    %242 = arith.addf %238, %241 : vector<8x32xf32>
    %243 = arith.negf %218 : vector<8x32xf32>
    %244 = math.exp %243 : vector<8x32xf32>
    %cst_163 = arith.constant 1.000000e+00 : f32
    %245 = vector.broadcast %cst_163 : f32 to vector<8x32xf32>
    %246 = arith.addf %245, %244 : vector<8x32xf32>
    %247 = arith.divf %245, %246 : vector<8x32xf32>
    %248 = arith.negf %226 : vector<8x32xf32>
    %249 = math.exp %248 : vector<8x32xf32>
    %cst_164 = arith.constant 1.000000e+00 : f32
    %250 = vector.broadcast %cst_164 : f32 to vector<8x32xf32>
    %251 = arith.addf %250, %249 : vector<8x32xf32>
    %252 = arith.divf %250, %251 : vector<8x32xf32>
    %253 = math.tanh %234 : vector<8x32xf32>
    %254 = arith.negf %242 : vector<8x32xf32>
    %255 = math.exp %254 : vector<8x32xf32>
    %cst_165 = arith.constant 1.000000e+00 : f32
    %256 = vector.broadcast %cst_165 : f32 to vector<8x32xf32>
    %257 = arith.addf %256, %255 : vector<8x32xf32>
    %258 = arith.divf %256, %257 : vector<8x32xf32>
    %259 = arith.mulf %252, %204 : vector<8x32xf32>
    %260 = arith.mulf %247, %253 : vector<8x32xf32>
    %261 = arith.addf %259, %260 : vector<8x32xf32>
    %262 = math.tanh %261 : vector<8x32xf32>
    %263 = arith.mulf %258, %262 : vector<8x32xf32>
    %264 = arith.index_cast %c3_i32 : i32 to index
    %c0_166 = arith.constant 0 : index
    %c0_167 = arith.constant 0 : index
    %265 = vector.load %arg14[%264, %c0_166, %c0_167] : memref<8x8x32xf32, #tpu.memory_space<vmem>>, vector<1x8x32xf32>
    %266 = vector.shape_cast %265 : vector<1x8x32xf32> to vector<8x32xf32>
    %267 = vector.shape_cast %263 : vector<8x32xf32> to vector<1x8x32xf32>
    tpu.vector_store %arg14[%264, %c0_166, %c0_167], %267 {strides = array<i32>} : memref<8x8x32xf32, #tpu.memory_space<vmem>>, vector<1x8x32xf32>,
    %c4_i32 = arith.constant 4 : i32
    %c0_i32_168 = arith.constant 0 : i32
    %268 = arith.addi %c0_i32_168, %c4_i32 : i32
    %269 = arith.index_cast %268 : i32 to index
    %c0_169 = arith.constant 0 : index
    %c0_170 = arith.constant 0 : index
    %270 = vector.load %arg13[%269, %c0_169, %c0_170] : memref<32x8x32xf32, #tpu.memory_space<vmem>>, vector<1x8x32xf32>
    %271 = vector.shape_cast %270 : vector<1x8x32xf32> to vector<8x32xf32>
    %c0_171 = arith.constant 0 : index
    %c0_172 = arith.constant 0 : index
    %c0_173 = arith.constant 0 : index
    %272 = vector.load %arg4[%c0_171, %c0_172, %c0_173] : memref<4x32x32xf32, #tpu.memory_space<vmem>>, vector<1x32x32xf32>
    %273 = vector.shape_cast %272 : vector<1x32x32xf32> to vector<32x32xf32>
    %cst_174 = arith.constant dense<0.000000e+00> : vector<8x32xf32>
    %274 = tpu.matmul %263, %273, %cst_174 {dimension_numbers = #tpu.dot_dimension_numbers<[1], [0], [0], [1], [0, 0, 1, 1], [], []>} : vector<8x32xf32>, vector<32x32xf32>, vector<8x32xf32> -> vector<8x32xf32>
    %275 = arith.addf %271, %274 : vector<8x32xf32>
    %c8_i32_175 = arith.constant 8 : i32
    %276 = arith.addi %c8_i32_175, %c4_i32 : i32
    %277 = arith.index_cast %276 : i32 to index
    %c0_176 = arith.constant 0 : index
    %c0_177 = arith.constant 0 : index
    %278 = vector.load %arg13[%277, %c0_176, %c0_177] : memref<32x8x32xf32, #tpu.memory_space<vmem>>, vector<1x8x32xf32>
    %279 = vector.shape_cast %278 : vector<1x8x32xf32> to vector<8x32xf32>
    %c1_178 = arith.constant 1 : index
    %c0_179 = arith.constant 0 : index
    %c0_180 = arith.constant 0 : index
    %280 = vector.load %arg4[%c1_178, %c0_179, %c0_180] : memref<4x32x32xf32, #tpu.memory_space<vmem>>, vector<1x32x32xf32>
    %281 = vector.shape_cast %280 : vector<1x32x32xf32> to vector<32x32xf32>
    %cst_181 = arith.constant dense<0.000000e+00> : vector<8x32xf32>
    %282 = tpu.matmul %263, %281, %cst_181 {dimension_numbers = #tpu.dot_dimension_numbers<[1], [0], [0], [1], [0, 0, 1, 1], [], []>} : vector<8x32xf32>, vector<32x32xf32>, vector<8x32xf32> -> vector<8x32xf32>
    %283 = arith.addf %279, %282 : vector<8x32xf32>
    %c16_i32_182 = arith.constant 16 : i32
    %284 = arith.addi %c16_i32_182, %c4_i32 : i32
    %285 = arith.index_cast %284 : i32 to index
    %c0_183 = arith.constant 0 : index
    %c0_184 = arith.constant 0 : index
    %286 = vector.load %arg13[%285, %c0_183, %c0_184] : memref<32x8x32xf32, #tpu.memory_space<vmem>>, vector<1x8x32xf32>
    %287 = vector.shape_cast %286 : vector<1x8x32xf32> to vector<8x32xf32>
    %c2_185 = arith.constant 2 : index
    %c0_186 = arith.constant 0 : index
    %c0_187 = arith.constant 0 : index
    %288 = vector.load %arg4[%c2_185, %c0_186, %c0_187] : memref<4x32x32xf32, #tpu.memory_space<vmem>>, vector<1x32x32xf32>
    %289 = vector.shape_cast %288 : vector<1x32x32xf32> to vector<32x32xf32>
    %cst_188 = arith.constant dense<0.000000e+00> : vector<8x32xf32>
    %290 = tpu.matmul %263, %289, %cst_188 {dimension_numbers = #tpu.dot_dimension_numbers<[1], [0], [0], [1], [0, 0, 1, 1], [], []>} : vector<8x32xf32>, vector<32x32xf32>, vector<8x32xf32> -> vector<8x32xf32>
    %291 = arith.addf %287, %290 : vector<8x32xf32>
    %c24_i32_189 = arith.constant 24 : i32
    %292 = arith.addi %c24_i32_189, %c4_i32 : i32
    %293 = arith.index_cast %292 : i32 to index
    %c0_190 = arith.constant 0 : index
    %c0_191 = arith.constant 0 : index
    %294 = vector.load %arg13[%293, %c0_190, %c0_191] : memref<32x8x32xf32, #tpu.memory_space<vmem>>, vector<1x8x32xf32>
    %295 = vector.shape_cast %294 : vector<1x8x32xf32> to vector<8x32xf32>
    %c3_192 = arith.constant 3 : index
    %c0_193 = arith.constant 0 : index
    %c0_194 = arith.constant 0 : index
    %296 = vector.load %arg4[%c3_192, %c0_193, %c0_194] : memref<4x32x32xf32, #tpu.memory_space<vmem>>, vector<1x32x32xf32>
    %297 = vector.shape_cast %296 : vector<1x32x32xf32> to vector<32x32xf32>
    %cst_195 = arith.constant dense<0.000000e+00> : vector<8x32xf32>
    %298 = tpu.matmul %263, %297, %cst_195 {dimension_numbers = #tpu.dot_dimension_numbers<[1], [0], [0], [1], [0, 0, 1, 1], [], []>} : vector<8x32xf32>, vector<32x32xf32>, vector<8x32xf32> -> vector<8x32xf32>
    %299 = arith.addf %295, %298 : vector<8x32xf32>
    %300 = arith.negf %275 : vector<8x32xf32>
    %301 = math.exp %300 : vector<8x32xf32>
    %cst_196 = arith.constant 1.000000e+00 : f32
    %302 = vector.broadcast %cst_196 : f32 to vector<8x32xf32>
    %303 = arith.addf %302, %301 : vector<8x32xf32>
    %304 = arith.divf %302, %303 : vector<8x32xf32>
    %305 = arith.negf %283 : vector<8x32xf32>
    %306 = math.exp %305 : vector<8x32xf32>
    %cst_197 = arith.constant 1.000000e+00 : f32
    %307 = vector.broadcast %cst_197 : f32 to vector<8x32xf32>
    %308 = arith.addf %307, %306 : vector<8x32xf32>
    %309 = arith.divf %307, %308 : vector<8x32xf32>
    %310 = math.tanh %291 : vector<8x32xf32>
    %311 = arith.negf %299 : vector<8x32xf32>
    %312 = math.exp %311 : vector<8x32xf32>
    %cst_198 = arith.constant 1.000000e+00 : f32
    %313 = vector.broadcast %cst_198 : f32 to vector<8x32xf32>
    %314 = arith.addf %313, %312 : vector<8x32xf32>
    %315 = arith.divf %313, %314 : vector<8x32xf32>
    %316 = arith.mulf %309, %261 : vector<8x32xf32>
    %317 = arith.mulf %304, %310 : vector<8x32xf32>
    %318 = arith.addf %316, %317 : vector<8x32xf32>
    %319 = math.tanh %318 : vector<8x32xf32>
    %320 = arith.mulf %315, %319 : vector<8x32xf32>
    %321 = arith.index_cast %c4_i32 : i32 to index
    %c0_199 = arith.constant 0 : index
    %c0_200 = arith.constant 0 : index
    %322 = vector.load %arg14[%321, %c0_199, %c0_200] : memref<8x8x32xf32, #tpu.memory_space<vmem>>, vector<1x8x32xf32>
    %323 = vector.shape_cast %322 : vector<1x8x32xf32> to vector<8x32xf32>
    %324 = vector.shape_cast %320 : vector<8x32xf32> to vector<1x8x32xf32>
    tpu.vector_store %arg14[%321, %c0_199, %c0_200], %324 {strides = array<i32>} : memref<8x8x32xf32, #tpu.memory_space<vmem>>, vector<1x8x32xf32>,
    %c5_i32 = arith.constant 5 : i32
    %c0_i32_201 = arith.constant 0 : i32
    %325 = arith.addi %c0_i32_201, %c5_i32 : i32
    %326 = arith.index_cast %325 : i32 to index
    %c0_202 = arith.constant 0 : index
    %c0_203 = arith.constant 0 : index
    %327 = vector.load %arg13[%326, %c0_202, %c0_203] : memref<32x8x32xf32, #tpu.memory_space<vmem>>, vector<1x8x32xf32>
    %328 = vector.shape_cast %327 : vector<1x8x32xf32> to vector<8x32xf32>
    %c0_204 = arith.constant 0 : index
    %c0_205 = arith.constant 0 : index
    %c0_206 = arith.constant 0 : index
    %329 = vector.load %arg4[%c0_204, %c0_205, %c0_206] : memref<4x32x32xf32, #tpu.memory_space<vmem>>, vector<1x32x32xf32>
    %330 = vector.shape_cast %329 : vector<1x32x32xf32> to vector<32x32xf32>
    %cst_207 = arith.constant dense<0.000000e+00> : vector<8x32xf32>
    %331 = tpu.matmul %320, %330, %cst_207 {dimension_numbers = #tpu.dot_dimension_numbers<[1], [0], [0], [1], [0, 0, 1, 1], [], []>} : vector<8x32xf32>, vector<32x32xf32>, vector<8x32xf32> -> vector<8x32xf32>
    %332 = arith.addf %328, %331 : vector<8x32xf32>
    %c8_i32_208 = arith.constant 8 : i32
    %333 = arith.addi %c8_i32_208, %c5_i32 : i32
    %334 = arith.index_cast %333 : i32 to index
    %c0_209 = arith.constant 0 : index
    %c0_210 = arith.constant 0 : index
    %335 = vector.load %arg13[%334, %c0_209, %c0_210] : memref<32x8x32xf32, #tpu.memory_space<vmem>>, vector<1x8x32xf32>
    %336 = vector.shape_cast %335 : vector<1x8x32xf32> to vector<8x32xf32>
    %c1_211 = arith.constant 1 : index
    %c0_212 = arith.constant 0 : index
    %c0_213 = arith.constant 0 : index
    %337 = vector.load %arg4[%c1_211, %c0_212, %c0_213] : memref<4x32x32xf32, #tpu.memory_space<vmem>>, vector<1x32x32xf32>
    %338 = vector.shape_cast %337 : vector<1x32x32xf32> to vector<32x32xf32>
    %cst_214 = arith.constant dense<0.000000e+00> : vector<8x32xf32>
    %339 = tpu.matmul %320, %338, %cst_214 {dimension_numbers = #tpu.dot_dimension_numbers<[1], [0], [0], [1], [0, 0, 1, 1], [], []>} : vector<8x32xf32>, vector<32x32xf32>, vector<8x32xf32> -> vector<8x32xf32>
    %340 = arith.addf %336, %339 : vector<8x32xf32>
    %c16_i32_215 = arith.constant 16 : i32
    %341 = arith.addi %c16_i32_215, %c5_i32 : i32
    %342 = arith.index_cast %341 : i32 to index
    %c0_216 = arith.constant 0 : index
    %c0_217 = arith.constant 0 : index
    %343 = vector.load %arg13[%342, %c0_216, %c0_217] : memref<32x8x32xf32, #tpu.memory_space<vmem>>, vector<1x8x32xf32>
    %344 = vector.shape_cast %343 : vector<1x8x32xf32> to vector<8x32xf32>
    %c2_218 = arith.constant 2 : index
    %c0_219 = arith.constant 0 : index
    %c0_220 = arith.constant 0 : index
    %345 = vector.load %arg4[%c2_218, %c0_219, %c0_220] : memref<4x32x32xf32, #tpu.memory_space<vmem>>, vector<1x32x32xf32>
    %346 = vector.shape_cast %345 : vector<1x32x32xf32> to vector<32x32xf32>
    %cst_221 = arith.constant dense<0.000000e+00> : vector<8x32xf32>
    %347 = tpu.matmul %320, %346, %cst_221 {dimension_numbers = #tpu.dot_dimension_numbers<[1], [0], [0], [1], [0, 0, 1, 1], [], []>} : vector<8x32xf32>, vector<32x32xf32>, vector<8x32xf32> -> vector<8x32xf32>
    %348 = arith.addf %344, %347 : vector<8x32xf32>
    %c24_i32_222 = arith.constant 24 : i32
    %349 = arith.addi %c24_i32_222, %c5_i32 : i32
    %350 = arith.index_cast %349 : i32 to index
    %c0_223 = arith.constant 0 : index
    %c0_224 = arith.constant 0 : index
    %351 = vector.load %arg13[%350, %c0_223, %c0_224] : memref<32x8x32xf32, #tpu.memory_space<vmem>>, vector<1x8x32xf32>
    %352 = vector.shape_cast %351 : vector<1x8x32xf32> to vector<8x32xf32>
    %c3_225 = arith.constant 3 : index
    %c0_226 = arith.constant 0 : index
    %c0_227 = arith.constant 0 : index
    %353 = vector.load %arg4[%c3_225, %c0_226, %c0_227] : memref<4x32x32xf32, #tpu.memory_space<vmem>>, vector<1x32x32xf32>
    %354 = vector.shape_cast %353 : vector<1x32x32xf32> to vector<32x32xf32>
    %cst_228 = arith.constant dense<0.000000e+00> : vector<8x32xf32>
    %355 = tpu.matmul %320, %354, %cst_228 {dimension_numbers = #tpu.dot_dimension_numbers<[1], [0], [0], [1], [0, 0, 1, 1], [], []>} : vector<8x32xf32>, vector<32x32xf32>, vector<8x32xf32> -> vector<8x32xf32>
    %356 = arith.addf %352, %355 : vector<8x32xf32>
    %357 = arith.negf %332 : vector<8x32xf32>
    %358 = math.exp %357 : vector<8x32xf32>
    %cst_229 = arith.constant 1.000000e+00 : f32
    %359 = vector.broadcast %cst_229 : f32 to vector<8x32xf32>
    %360 = arith.addf %359, %358 : vector<8x32xf32>
    %361 = arith.divf %359, %360 : vector<8x32xf32>
    %362 = arith.negf %340 : vector<8x32xf32>
    %363 = math.exp %362 : vector<8x32xf32>
    %cst_230 = arith.constant 1.000000e+00 : f32
    %364 = vector.broadcast %cst_230 : f32 to vector<8x32xf32>
    %365 = arith.addf %364, %363 : vector<8x32xf32>
    %366 = arith.divf %364, %365 : vector<8x32xf32>
    %367 = math.tanh %348 : vector<8x32xf32>
    %368 = arith.negf %356 : vector<8x32xf32>
    %369 = math.exp %368 : vector<8x32xf32>
    %cst_231 = arith.constant 1.000000e+00 : f32
    %370 = vector.broadcast %cst_231 : f32 to vector<8x32xf32>
    %371 = arith.addf %370, %369 : vector<8x32xf32>
    %372 = arith.divf %370, %371 : vector<8x32xf32>
    %373 = arith.mulf %366, %318 : vector<8x32xf32>
    %374 = arith.mulf %361, %367 : vector<8x32xf32>
    %375 = arith.addf %373, %374 : vector<8x32xf32>
    %376 = math.tanh %375 : vector<8x32xf32>
    %377 = arith.mulf %372, %376 : vector<8x32xf32>
    %378 = arith.index_cast %c5_i32 : i32 to index
    %c0_232 = arith.constant 0 : index
    %c0_233 = arith.constant 0 : index
    %379 = vector.load %arg14[%378, %c0_232, %c0_233] : memref<8x8x32xf32, #tpu.memory_space<vmem>>, vector<1x8x32xf32>
    %380 = vector.shape_cast %379 : vector<1x8x32xf32> to vector<8x32xf32>
    %381 = vector.shape_cast %377 : vector<8x32xf32> to vector<1x8x32xf32>
    tpu.vector_store %arg14[%378, %c0_232, %c0_233], %381 {strides = array<i32>} : memref<8x8x32xf32, #tpu.memory_space<vmem>>, vector<1x8x32xf32>,
    %c6_i32 = arith.constant 6 : i32
    %c0_i32_234 = arith.constant 0 : i32
    %382 = arith.addi %c0_i32_234, %c6_i32 : i32
    %383 = arith.index_cast %382 : i32 to index
    %c0_235 = arith.constant 0 : index
    %c0_236 = arith.constant 0 : index
    %384 = vector.load %arg13[%383, %c0_235, %c0_236] : memref<32x8x32xf32, #tpu.memory_space<vmem>>, vector<1x8x32xf32>
    %385 = vector.shape_cast %384 : vector<1x8x32xf32> to vector<8x32xf32>
    %c0_237 = arith.constant 0 : index
    %c0_238 = arith.constant 0 : index
    %c0_239 = arith.constant 0 : index
    %386 = vector.load %arg4[%c0_237, %c0_238, %c0_239] : memref<4x32x32xf32, #tpu.memory_space<vmem>>, vector<1x32x32xf32>
    %387 = vector.shape_cast %386 : vector<1x32x32xf32> to vector<32x32xf32>
    %cst_240 = arith.constant dense<0.000000e+00> : vector<8x32xf32>
    %388 = tpu.matmul %377, %387, %cst_240 {dimension_numbers = #tpu.dot_dimension_numbers<[1], [0], [0], [1], [0, 0, 1, 1], [], []>} : vector<8x32xf32>, vector<32x32xf32>, vector<8x32xf32> -> vector<8x32xf32>
    %389 = arith.addf %385, %388 : vector<8x32xf32>
    %c8_i32_241 = arith.constant 8 : i32
    %390 = arith.addi %c8_i32_241, %c6_i32 : i32
    %391 = arith.index_cast %390 : i32 to index
    %c0_242 = arith.constant 0 : index
    %c0_243 = arith.constant 0 : index
    %392 = vector.load %arg13[%391, %c0_242, %c0_243] : memref<32x8x32xf32, #tpu.memory_space<vmem>>, vector<1x8x32xf32>
    %393 = vector.shape_cast %392 : vector<1x8x32xf32> to vector<8x32xf32>
    %c1_244 = arith.constant 1 : index
    %c0_245 = arith.constant 0 : index
    %c0_246 = arith.constant 0 : index
    %394 = vector.load %arg4[%c1_244, %c0_245, %c0_246] : memref<4x32x32xf32, #tpu.memory_space<vmem>>, vector<1x32x32xf32>
    %395 = vector.shape_cast %394 : vector<1x32x32xf32> to vector<32x32xf32>
    %cst_247 = arith.constant dense<0.000000e+00> : vector<8x32xf32>
    %396 = tpu.matmul %377, %395, %cst_247 {dimension_numbers = #tpu.dot_dimension_numbers<[1], [0], [0], [1], [0, 0, 1, 1], [], []>} : vector<8x32xf32>, vector<32x32xf32>, vector<8x32xf32> -> vector<8x32xf32>
    %397 = arith.addf %393, %396 : vector<8x32xf32>
    %c16_i32_248 = arith.constant 16 : i32
    %398 = arith.addi %c16_i32_248, %c6_i32 : i32
    %399 = arith.index_cast %398 : i32 to index
    %c0_249 = arith.constant 0 : index
    %c0_250 = arith.constant 0 : index
    %400 = vector.load %arg13[%399, %c0_249, %c0_250] : memref<32x8x32xf32, #tpu.memory_space<vmem>>, vector<1x8x32xf32>
    %401 = vector.shape_cast %400 : vector<1x8x32xf32> to vector<8x32xf32>
    %c2_251 = arith.constant 2 : index
    %c0_252 = arith.constant 0 : index
    %c0_253 = arith.constant 0 : index
    %402 = vector.load %arg4[%c2_251, %c0_252, %c0_253] : memref<4x32x32xf32, #tpu.memory_space<vmem>>, vector<1x32x32xf32>
    %403 = vector.shape_cast %402 : vector<1x32x32xf32> to vector<32x32xf32>
    %cst_254 = arith.constant dense<0.000000e+00> : vector<8x32xf32>
    %404 = tpu.matmul %377, %403, %cst_254 {dimension_numbers = #tpu.dot_dimension_numbers<[1], [0], [0], [1], [0, 0, 1, 1], [], []>} : vector<8x32xf32>, vector<32x32xf32>, vector<8x32xf32> -> vector<8x32xf32>
    %405 = arith.addf %401, %404 : vector<8x32xf32>
    %c24_i32_255 = arith.constant 24 : i32
    %406 = arith.addi %c24_i32_255, %c6_i32 : i32
    %407 = arith.index_cast %406 : i32 to index
    %c0_256 = arith.constant 0 : index
    %c0_257 = arith.constant 0 : index
    %408 = vector.load %arg13[%407, %c0_256, %c0_257] : memref<32x8x32xf32, #tpu.memory_space<vmem>>, vector<1x8x32xf32>
    %409 = vector.shape_cast %408 : vector<1x8x32xf32> to vector<8x32xf32>
    %c3_258 = arith.constant 3 : index
    %c0_259 = arith.constant 0 : index
    %c0_260 = arith.constant 0 : index
    %410 = vector.load %arg4[%c3_258, %c0_259, %c0_260] : memref<4x32x32xf32, #tpu.memory_space<vmem>>, vector<1x32x32xf32>
    %411 = vector.shape_cast %410 : vector<1x32x32xf32> to vector<32x32xf32>
    %cst_261 = arith.constant dense<0.000000e+00> : vector<8x32xf32>
    %412 = tpu.matmul %377, %411, %cst_261 {dimension_numbers = #tpu.dot_dimension_numbers<[1], [0], [0], [1], [0, 0, 1, 1], [], []>} : vector<8x32xf32>, vector<32x32xf32>, vector<8x32xf32> -> vector<8x32xf32>
    %413 = arith.addf %409, %412 : vector<8x32xf32>
    %414 = arith.negf %389 : vector<8x32xf32>
    %415 = math.exp %414 : vector<8x32xf32>
    %cst_262 = arith.constant 1.000000e+00 : f32
    %416 = vector.broadcast %cst_262 : f32 to vector<8x32xf32>
    %417 = arith.addf %416, %415 : vector<8x32xf32>
    %418 = arith.divf %416, %417 : vector<8x32xf32>
    %419 = arith.negf %397 : vector<8x32xf32>
    %420 = math.exp %419 : vector<8x32xf32>
    %cst_263 = arith.constant 1.000000e+00 : f32
    %421 = vector.broadcast %cst_263 : f32 to vector<8x32xf32>
    %422 = arith.addf %421, %420 : vector<8x32xf32>
    %423 = arith.divf %421, %422 : vector<8x32xf32>
    %424 = math.tanh %405 : vector<8x32xf32>
    %425 = arith.negf %413 : vector<8x32xf32>
    %426 = math.exp %425 : vector<8x32xf32>
    %cst_264 = arith.constant 1.000000e+00 : f32
    %427 = vector.broadcast %cst_264 : f32 to vector<8x32xf32>
    %428 = arith.addf %427, %426 : vector<8x32xf32>
    %429 = arith.divf %427, %428 : vector<8x32xf32>
    %430 = arith.mulf %423, %375 : vector<8x32xf32>
    %431 = arith.mulf %418, %424 : vector<8x32xf32>
    %432 = arith.addf %430, %431 : vector<8x32xf32>
    %433 = math.tanh %432 : vector<8x32xf32>
    %434 = arith.mulf %429, %433 : vector<8x32xf32>
    %435 = arith.index_cast %c6_i32 : i32 to index
    %c0_265 = arith.constant 0 : index
    %c0_266 = arith.constant 0 : index
    %436 = vector.load %arg14[%435, %c0_265, %c0_266] : memref<8x8x32xf32, #tpu.memory_space<vmem>>, vector<1x8x32xf32>
    %437 = vector.shape_cast %436 : vector<1x8x32xf32> to vector<8x32xf32>
    %438 = vector.shape_cast %434 : vector<8x32xf32> to vector<1x8x32xf32>
    tpu.vector_store %arg14[%435, %c0_265, %c0_266], %438 {strides = array<i32>} : memref<8x8x32xf32, #tpu.memory_space<vmem>>, vector<1x8x32xf32>,
    %c7_i32 = arith.constant 7 : i32
    %c0_i32_267 = arith.constant 0 : i32
    %439 = arith.addi %c0_i32_267, %c7_i32 : i32
    %440 = arith.index_cast %439 : i32 to index
    %c0_268 = arith.constant 0 : index
    %c0_269 = arith.constant 0 : index
    %441 = vector.load %arg13[%440, %c0_268, %c0_269] : memref<32x8x32xf32, #tpu.memory_space<vmem>>, vector<1x8x32xf32>
    %442 = vector.shape_cast %441 : vector<1x8x32xf32> to vector<8x32xf32>
    %c0_270 = arith.constant 0 : index
    %c0_271 = arith.constant 0 : index
    %c0_272 = arith.constant 0 : index
    %443 = vector.load %arg4[%c0_270, %c0_271, %c0_272] : memref<4x32x32xf32, #tpu.memory_space<vmem>>, vector<1x32x32xf32>
    %444 = vector.shape_cast %443 : vector<1x32x32xf32> to vector<32x32xf32>
    %cst_273 = arith.constant dense<0.000000e+00> : vector<8x32xf32>
    %445 = tpu.matmul %434, %444, %cst_273 {dimension_numbers = #tpu.dot_dimension_numbers<[1], [0], [0], [1], [0, 0, 1, 1], [], []>} : vector<8x32xf32>, vector<32x32xf32>, vector<8x32xf32> -> vector<8x32xf32>
    %446 = arith.addf %442, %445 : vector<8x32xf32>
    %c8_i32_274 = arith.constant 8 : i32
    %447 = arith.addi %c8_i32_274, %c7_i32 : i32
    %448 = arith.index_cast %447 : i32 to index
    %c0_275 = arith.constant 0 : index
    %c0_276 = arith.constant 0 : index
    %449 = vector.load %arg13[%448, %c0_275, %c0_276] : memref<32x8x32xf32, #tpu.memory_space<vmem>>, vector<1x8x32xf32>
    %450 = vector.shape_cast %449 : vector<1x8x32xf32> to vector<8x32xf32>
    %c1_277 = arith.constant 1 : index
    %c0_278 = arith.constant 0 : index
    %c0_279 = arith.constant 0 : index
    %451 = vector.load %arg4[%c1_277, %c0_278, %c0_279] : memref<4x32x32xf32, #tpu.memory_space<vmem>>, vector<1x32x32xf32>
    %452 = vector.shape_cast %451 : vector<1x32x32xf32> to vector<32x32xf32>
    %cst_280 = arith.constant dense<0.000000e+00> : vector<8x32xf32>
    %453 = tpu.matmul %434, %452, %cst_280 {dimension_numbers = #tpu.dot_dimension_numbers<[1], [0], [0], [1], [0, 0, 1, 1], [], []>} : vector<8x32xf32>, vector<32x32xf32>, vector<8x32xf32> -> vector<8x32xf32>
    %454 = arith.addf %450, %453 : vector<8x32xf32>
    %c16_i32_281 = arith.constant 16 : i32
    %455 = arith.addi %c16_i32_281, %c7_i32 : i32
    %456 = arith.index_cast %455 : i32 to index
    %c0_282 = arith.constant 0 : index
    %c0_283 = arith.constant 0 : index
    %457 = vector.load %arg13[%456, %c0_282, %c0_283] : memref<32x8x32xf32, #tpu.memory_space<vmem>>, vector<1x8x32xf32>
    %458 = vector.shape_cast %457 : vector<1x8x32xf32> to vector<8x32xf32>
    %c2_284 = arith.constant 2 : index
    %c0_285 = arith.constant 0 : index
    %c0_286 = arith.constant 0 : index
    %459 = vector.load %arg4[%c2_284, %c0_285, %c0_286] : memref<4x32x32xf32, #tpu.memory_space<vmem>>, vector<1x32x32xf32>
    %460 = vector.shape_cast %459 : vector<1x32x32xf32> to vector<32x32xf32>
    %cst_287 = arith.constant dense<0.000000e+00> : vector<8x32xf32>
    %461 = tpu.matmul %434, %460, %cst_287 {dimension_numbers = #tpu.dot_dimension_numbers<[1], [0], [0], [1], [0, 0, 1, 1], [], []>} : vector<8x32xf32>, vector<32x32xf32>, vector<8x32xf32> -> vector<8x32xf32>
    %462 = arith.addf %458, %461 : vector<8x32xf32>
    %c24_i32_288 = arith.constant 24 : i32
    %463 = arith.addi %c24_i32_288, %c7_i32 : i32
    %464 = arith.index_cast %463 : i32 to index
    %c0_289 = arith.constant 0 : index
    %c0_290 = arith.constant 0 : index
    %465 = vector.load %arg13[%464, %c0_289, %c0_290] : memref<32x8x32xf32, #tpu.memory_space<vmem>>, vector<1x8x32xf32>
    %466 = vector.shape_cast %465 : vector<1x8x32xf32> to vector<8x32xf32>
    %c3_291 = arith.constant 3 : index
    %c0_292 = arith.constant 0 : index
    %c0_293 = arith.constant 0 : index
    %467 = vector.load %arg4[%c3_291, %c0_292, %c0_293] : memref<4x32x32xf32, #tpu.memory_space<vmem>>, vector<1x32x32xf32>
    %468 = vector.shape_cast %467 : vector<1x32x32xf32> to vector<32x32xf32>
    %cst_294 = arith.constant dense<0.000000e+00> : vector<8x32xf32>
    %469 = tpu.matmul %434, %468, %cst_294 {dimension_numbers = #tpu.dot_dimension_numbers<[1], [0], [0], [1], [0, 0, 1, 1], [], []>} : vector<8x32xf32>, vector<32x32xf32>, vector<8x32xf32> -> vector<8x32xf32>
    %470 = arith.addf %466, %469 : vector<8x32xf32>
    %471 = arith.negf %446 : vector<8x32xf32>
    %472 = math.exp %471 : vector<8x32xf32>
    %cst_295 = arith.constant 1.000000e+00 : f32
    %473 = vector.broadcast %cst_295 : f32 to vector<8x32xf32>
    %474 = arith.addf %473, %472 : vector<8x32xf32>
    %475 = arith.divf %473, %474 : vector<8x32xf32>
    %476 = arith.negf %454 : vector<8x32xf32>
    %477 = math.exp %476 : vector<8x32xf32>
    %cst_296 = arith.constant 1.000000e+00 : f32
    %478 = vector.broadcast %cst_296 : f32 to vector<8x32xf32>
    %479 = arith.addf %478, %477 : vector<8x32xf32>
    %480 = arith.divf %478, %479 : vector<8x32xf32>
    %481 = math.tanh %462 : vector<8x32xf32>
    %482 = arith.negf %470 : vector<8x32xf32>
    %483 = math.exp %482 : vector<8x32xf32>
    %cst_297 = arith.constant 1.000000e+00 : f32
    %484 = vector.broadcast %cst_297 : f32 to vector<8x32xf32>
    %485 = arith.addf %484, %483 : vector<8x32xf32>
    %486 = arith.divf %484, %485 : vector<8x32xf32>
    %487 = arith.mulf %480, %432 : vector<8x32xf32>
    %488 = arith.mulf %475, %481 : vector<8x32xf32>
    %489 = arith.addf %487, %488 : vector<8x32xf32>
    %490 = math.tanh %489 : vector<8x32xf32>
    %491 = arith.mulf %486, %490 : vector<8x32xf32>
    %492 = arith.index_cast %c7_i32 : i32 to index
    %c0_298 = arith.constant 0 : index
    %c0_299 = arith.constant 0 : index
    %493 = vector.load %arg14[%492, %c0_298, %c0_299] : memref<8x8x32xf32, #tpu.memory_space<vmem>>, vector<1x8x32xf32>
    %494 = vector.shape_cast %493 : vector<1x8x32xf32> to vector<8x32xf32>
    %495 = vector.shape_cast %491 : vector<8x32xf32> to vector<1x8x32xf32>
    tpu.vector_store %arg14[%492, %c0_298, %c0_299], %495 {strides = array<i32>} : memref<8x8x32xf32, #tpu.memory_space<vmem>>, vector<1x8x32xf32>,
    %c8_i32_300 = arith.constant 8 : i32
    %c0_301 = arith.constant 0 : index
    %c0_302 = arith.constant 0 : index
    %c0_303 = arith.constant 0 : index
    %496 = vector.load %arg14[%c0_301, %c0_302, %c0_303] : memref<8x8x32xf32, #tpu.memory_space<vmem>>, vector<8x8x32xf32>
    %497 = vector.shape_cast %496 : vector<8x8x32xf32> to vector<64x32xf32>
    %c0_304 = arith.constant 0 : index
    %c0_305 = arith.constant 0 : index
    %498 = vector.load %arg6[%c0_304, %c0_305] : memref<32x16xf32, #tpu.memory_space<vmem>>, vector<32x16xf32>
    %cst_306 = arith.constant dense<0.000000e+00> : vector<64x16xf32>
    %499 = tpu.matmul %497, %498, %cst_306 {dimension_numbers = #tpu.dot_dimension_numbers<[1], [0], [0], [1], [0, 0, 1, 1], [], []>} : vector<64x32xf32>, vector<32x16xf32>, vector<64x16xf32> -> vector<64x16xf32>
    %c0_307 = arith.constant 0 : index
    %c0_308 = arith.constant 0 : index
    %500 = vector.load %arg7[%c0_307, %c0_308] : memref<1x16xf32, #tpu.memory_space<vmem>>, vector<1x16xf32>
    %501 = vector.broadcast %500 : vector<1x16xf32> to vector<64x16xf32>
    %502 = arith.addf %499, %501 : vector<64x16xf32>
    %cst_309 = arith.constant 0.000000e+00 : f32
    %503 = vector.broadcast %cst_309 : f32 to vector<64x16xf32>
    %504 = arith.maximumf %502, %503 : vector<64x16xf32>
    %c0_310 = arith.constant 0 : index
    %c0_311 = arith.constant 0 : index
    %505 = vector.load %arg8[%c0_310, %c0_311] : memref<16x16xf32, #tpu.memory_space<vmem>>, vector<16x16xf32>
    %cst_312 = arith.constant dense<0.000000e+00> : vector<64x16xf32>
    %506 = tpu.matmul %504, %505, %cst_312 {dimension_numbers = #tpu.dot_dimension_numbers<[1], [0], [0], [1], [0, 0, 1, 1], [], []>} : vector<64x16xf32>, vector<16x16xf32>, vector<64x16xf32> -> vector<64x16xf32>
    %c0_313 = arith.constant 0 : index
    %c0_314 = arith.constant 0 : index
    %507 = vector.load %arg9[%c0_313, %c0_314] : memref<1x16xf32, #tpu.memory_space<vmem>>, vector<1x16xf32>
    %508 = vector.broadcast %507 : vector<1x16xf32> to vector<64x16xf32>
    %509 = arith.addf %506, %508 : vector<64x16xf32>
    %510 = vector.shape_cast %509 : vector<64x16xf32> to vector<8x8x16xf32>
    %c0_315 = arith.constant 0 : index
    %c0_316 = arith.constant 0 : index
    %c0_317 = arith.constant 0 : index
    %511 = vector.load %arg10[%c0_315, %c0_316, %c0_317] : memref<8x8x16xf32, #tpu.memory_space<vmem>>, vector<8x8x16xf32>
    tpu.vector_store %arg10[%c0_315, %c0_316, %c0_317], %510 {strides = array<i32>} : memref<8x8x16xf32, #tpu.memory_space<vmem>>, vector<8x8x16xf32>,
    %c0_318 = arith.constant 0 : index
    %c0_319 = arith.constant 0 : index
    %512 = vector.load %arg11[%c0_318, %c0_319] : memref<8x32xf32, #tpu.memory_space<vmem>>, vector<8x32xf32>
    tpu.vector_store %arg11[%c0_318, %c0_319], %491 {strides = array<i32>} : memref<8x32xf32, #tpu.memory_space<vmem>>, vector<8x32xf32>,
    %c0_320 = arith.constant 0 : index
    %c0_321 = arith.constant 0 : index
    %513 = vector.load %arg12[%c0_320, %c0_321] : memref<8x32xf32, #tpu.memory_space<vmem>>, vector<8x32xf32>
    tpu.vector_store %arg12[%c0_320, %c0_321], %489 {strides = array<i32>} : memref<8x32xf32, #tpu.memory_space<vmem>>, vector<8x32xf32>,
    return
  }
}

</mosaic_0001>

<llo_original>
// kernel: tpu_custom_call.1
$region0: #{tpu_custom_call.1}
  #allocation0 [shape = 'u32[]', space=smem, size = 0x4, offset = 0x4, fixed_abs, tag = 'smem constant byte address 0x4 - core index']
  #allocation1 [shape = 'u32[144,128]{1,0:T(1,128)}', space=vmem, size = 0x12000, scoped, tag = 'internal scratch']
  #allocation2 [shape = 'f32[32,8,32]{2,1,0:T(8,128)}', space=vmem, size = 0x20000, scoped, tag = 'scratch operand']
  #allocation3 [shape = 'f32[8,8,32]{2,1,0:T(8,128)}', space=vmem, size = 0x8000, scoped, tag = 'scratch operand']
  %s0 = inlined_call_operand.hbm [shape: f32[8,8,16], index: 0, kind: input, shape index: {}]
  %s1 = inlined_call_operand.vmem [shape: f32[8,32], index: 1, kind: input, shape index: {}]
  %s2 = inlined_call_operand.vmem [shape: f32[8,32], index: 2, kind: input, shape index: {}]
  %s3 = inlined_call_operand.hbm [shape: f32[4,16,32], index: 3, kind: input, shape index: {}]
  %s4 = inlined_call_operand.hbm [shape: f32[4,32,32], index: 4, kind: input, shape index: {}]
  %s5 = inlined_call_operand.vmem [shape: f32[4,1,32], index: 5, kind: input, shape index: {}]
  %s6 = inlined_call_operand.vmem [shape: f32[32,16], index: 6, kind: input, shape index: {}]
  %s7 = inlined_call_operand.vmem [shape: f32[1,16], index: 7, kind: input, shape index: {}]
  %s8 = inlined_call_operand.vmem [shape: f32[16,16], index: 8, kind: input, shape index: {}]
  %s9 = inlined_call_operand.vmem [shape: f32[1,16], index: 9, kind: input, shape index: {}]
  %s10 = inlined_call_operand.hbm [shape: f32[8,8,16], index: 10, kind: output, shape index: {0}]
  %s11 = inlined_call_operand.hbm [shape: f32[8,32], index: 11, kind: output, shape index: {1}]
  %s12 = inlined_call_operand.hbm [shape: f32[8,32], index: 12, kind: output, shape index: {2}]
  %13 = xla_tuple %s10, %s11, %s12
  %s14 = sld [smem:[#allocation0]]
  $region78: #{tpu_custom_call.1} parent=0
    _
  %s16 = ssub.s32 1, %s14
  %s17 = scalar_select 0, %s16, %s14
  $region1: #{tpu_custom_call.1} parent=0
    #allocation4 [shape = 'u8[32768]{0}', space=vmem, size = 0x8000, scoped, tag = 'input window, operand 0, single buffered']
    #allocation5 [shape = 's32[1]{0}', space=sflag, size = 0x4, scoped, tag = 'scoped memory for tpu_custom_call.1']
    #allocation6 [shape = 's32[1]{0}', space=sflag, size = 0x4, scoped, tag = 'scoped memory for tpu_custom_call.1']
    #allocation7 [shape = 'u8[32768]{0}', space=vmem, size = 0x8000, scoped, tag = 'input window, operand 3, single buffered']
    #allocation8 [shape = 's32[1]{0}', space=sflag, size = 0x4, scoped, tag = 'scoped memory for tpu_custom_call.1']
    #allocation9 [shape = 'u8[65536]{0}', space=vmem, size = 0x10000, scoped, tag = 'input window, operand 4, single buffered']
    #allocation10 [shape = 'u8[32768]{0}', space=vmem, size = 0x8000, scoped, tag = 'output window, operand 0, single buffered']
    #allocation11 [shape = 'u8[4096]{0}', space=vmem, size = 0x1000, scoped, tag = 'output window, operand 1, single buffered']
    #allocation12 [shape = 's32[1]{0}', space=sflag, size = 0x4, scoped, tag = 'scoped memory for tpu_custom_call.1']
    #allocation13 [shape = 'u8[4096]{0}', space=vmem, size = 0x1000, scoped, tag = 'output window, operand 2, single buffered']
    %18 = vsyncpa [#allocation5], 0
    %19 = vsyncpa [#allocation8], 0
    %20 = vsyncpa [#allocation6], 0
    %21 = vsyncpa [#allocation12], 0
    // Predicated region
    $region2: #{tpu_custom_call.1} parent=1 // pred_check
      _
    $region3: #{tpu_custom_call.1} parent=1 // pred_check_branch
      %23 = sbr.rel (0) target = $region5
    $region4: #{tpu_custom_call.1} parent=1 // pred_region
      %s25 = ssub.s32 1024, 1024
      %26 = vsyncadd [#allocation5], %s25
      %s27 = sshll.u32 [#allocation4], 4
      %s28 = int_to_ptr.vmem [resolvable:$true] %s27
      %33 = dma.hbm_to_vmem [thread:$0]  %s0, 1024, %s28, [#allocation5], 128, 128, 8
    $region5: #{tpu_custom_call.1} parent=1 // pred_fallthru
      _
    // Predicated region
    $region6: #{tpu_custom_call.1} parent=1 // pred_check
      _
    $region7: #{tpu_custom_call.1} parent=1 // pred_check_branch
      %35 = sbr.rel (0) target = $region9
    $region8: #{tpu_custom_call.1} parent=1 // pred_region
      _
    $region9: #{tpu_custom_call.1} parent=1 // pred_fallthru
      _
    // Predicated region
    $region10: #{tpu_custom_call.1} parent=1 // pred_check
      _
    $region11: #{tpu_custom_call.1} parent=1 // pred_check_branch
      %37 = sbr.rel (0) target = $region13
    $region12: #{tpu_custom_call.1} parent=1 // pred_region
      _
    $region13: #{tpu_custom_call.1} parent=1 // pred_fallthru
      _
    // Predicated region
    $region14: #{tpu_custom_call.1} parent=1 // pred_check
      _
    $region15: #{tpu_custom_call.1} parent=1 // pred_check_branch
      %39 = sbr.rel (0) target = $region17
    $region16: #{tpu_custom_call.1} parent=1 // pred_region
      %s41 = ssub.s32 1024, 1024
      %42 = vsyncadd [#allocation8], %s41
      %s43 = sshll.u32 [#allocation7], 4
      %s44 = int_to_ptr.vmem [resolvable:$true] %s43
      %49 = dma.hbm_to_vmem [thread:$0]  %s3, 1024, %s44, [#allocation8], 128, 128, 8
    $region17: #{tpu_custom_call.1} parent=1 // pred_fallthru
      _
    // Predicated region
    $region18: #{tpu_custom_call.1} parent=1 // pred_check
      _
    $region19: #{tpu_custom_call.1} parent=1 // pred_check_branch
      %51 = sbr.rel (0) target = $region21
    $region20: #{tpu_custom_call.1} parent=1 // pred_region
      %s53 = ssub.s32 2048, 2048
      %54 = vsyncadd [#allocation8], %s53
      %s55 = sshll.u32 [#allocation9], 4
      %s56 = int_to_ptr.vmem [resolvable:$true] %s55
      %61 = dma.hbm_to_vmem [thread:$0]  %s4, 2048, %s56, [#allocation8], 128, 128, 8
    $region21: #{tpu_custom_call.1} parent=1 // pred_fallthru
      _
    // Predicated region
    $region22: #{tpu_custom_call.1} parent=1 // pred_check
      _
    $region23: #{tpu_custom_call.1} parent=1 // pred_check_branch
      %63 = sbr.rel (0) target = $region25
    $region24: #{tpu_custom_call.1} parent=1 // pred_region
      _
    $region25: #{tpu_custom_call.1} parent=1 // pred_fallthru
      _
    // Predicated region
    $region26: #{tpu_custom_call.1} parent=1 // pred_check
      _
    $region27: #{tpu_custom_call.1} parent=1 // pred_check_branch
      %65 = sbr.rel (0) target = $region29
    $region28: #{tpu_custom_call.1} parent=1 // pred_region
      _
    $region29: #{tpu_custom_call.1} parent=1 // pred_fallthru
      _
    // Predicated region
    $region30: #{tpu_custom_call.1} parent=1 // pred_check
      _
    $region31: #{tpu_custom_call.1} parent=1 // pred_check_branch
      %67 = sbr.rel (0) target = $region33
    $region32: #{tpu_custom_call.1} parent=1 // pred_region
      _
    $region33: #{tpu_custom_call.1} parent=1 // pred_fallthru
      _
    // Predicated region
    $region34: #{tpu_custom_call.1} parent=1 // pred_check
      _
    $region35: #{tpu_custom_call.1} parent=1 // pred_check_branch
      %69 = sbr.rel (0) target = $region37
    $region36: #{tpu_custom_call.1} parent=1 // pred_region
      _
    $region37: #{tpu_custom_call.1} parent=1 // pred_fallthru
      _
    // Predicated region
    $region38: #{tpu_custom_call.1} parent=1 // pred_check
      _
    $region39: #{tpu_custom_call.1} parent=1 // pred_check_branch
      %71 = sbr.rel (0) target = $region41
    $region40: #{tpu_custom_call.1} parent=1 // pred_region
      _
    $region41: #{tpu_custom_call.1} parent=1 // pred_fallthru
      _
    // Predicated region
    $region42: #{tpu_custom_call.1} parent=1 // pred_check
      _
    $region43: #{tpu_custom_call.1} parent=1 // pred_check_branch
      %73 = sbr.rel (0) target = $region45
    $region44: #{tpu_custom_call.1} parent=1 // pred_region
      %74 = dma.done [#allocation5], 1024
    $region45: #{tpu_custom_call.1} parent=1 // pred_fallthru
      _
    // Predicated region
    $region46: #{tpu_custom_call.1} parent=1 // pred_check
      _
    $region47: #{tpu_custom_call.1} parent=1 // pred_check_branch
      %76 = sbr.rel (0) target = $region49
    $region48: #{tpu_custom_call.1} parent=1 // pred_region
      %77 = dma.done [#allocation8], 1024
    $region49: #{tpu_custom_call.1} parent=1 // pred_fallthru
      _
    // Predicated region
    $region50: #{tpu_custom_call.1} parent=1 // pred_check
      _
    $region51: #{tpu_custom_call.1} parent=1 // pred_check_branch
      %79 = sbr.rel (0) target = $region53
    $region52: #{tpu_custom_call.1} parent=1 // pred_region
      %80 = dma.done [#allocation8], 2048
    $region53: #{tpu_custom_call.1} parent=1 // pred_fallthru
      _
    %v81 = vld [vmem:[#allocation4] sm:$0xff]
    %v82 = vld [vmem:[#allocation4 + $0x8] sm:$0xff]
    %v83 = vld [vmem:[#allocation4 + $0x10] sm:$0xff]
    %v84 = vld [vmem:[#allocation4 + $0x18] sm:$0xff]
    %v85 = vld [vmem:[#allocation4 + $0x20] sm:$0xff]
    %v86 = vld [vmem:[#allocation4 + $0x28] sm:$0xff]
    %v87 = vld [vmem:[#allocation4 + $0x30] sm:$0xff]
    %v88 = vld [vmem:[#allocation4 + $0x38] sm:$0xff]
    %v89 = vld [vmem:[%s1] sm:$0xff]
    %v90 = vld [vmem:[%s2] sm:$0xff]
    %v91 = vld [vmem:[#allocation7] sm:$0xff]
    %v92 = vld [vmem:[#allocation7 + $0x8] sm:$0xff]
    %v93 = vld [vmem:[%s5] sm:$0x1]
    %v95 = vlaneseq
    %v96 = vshrl.u32 %v95, 7
    %v97 = vsub.s32 0, %v96
    %v98 = vrot.slane %v93, %v97
    %vm100 = vcmask 130048
    %v102 = vsel %vm100, %v81, 0
    %v105 = vsel %vm100, %v82, 0
    %v108 = vsel %vm100, %v83, 0
    %v111 = vsel %vm100, %v84, 0
    %v114 = vsel %vm100, %v85, 0
    %v117 = vsel %vm100, %v86, 0
    %v120 = vsel %vm100, %v87, 0
    %v123 = vsel %vm100, %v88, 0
    %125 = vmatprep.subr.mxu0 0.0
    %126 = vmatpush1.msra.mxu0 %v91
    %127 = vmatprep.subr.mxu0 0.0
    %128 = vmatpush1.msra.mxu0 %v92
    %129 = vmatprep.subr.mxu0 0.0
    %130 = vmatpush1.msra.mxu0 0.0
    %131 = vmatprep.subr.mxu0 0.0
    %132 = vmatpush1.msra.mxu0 0.0
    %133 = vmatprep.subr.mxu0 0.0
    %134 = vmatpush1.msra.mxu0 0.0
    %135 = vmatprep.subr.mxu0 0.0
    %136 = vmatpush1.msra.mxu0 0.0
    %137 = vmatprep.subr.mxu0 0.0
    %138 = vmatpush1.msra.mxu0 0.0
    %139 = vmatprep.subr.mxu0 0.0
    %140 = vmatpush1.msra.mxu0 0.0
    %141 = vmatprep.subr.mxu0 0.0
    %142 = vmatpush1.msra.mxu0 0.0
    %143 = vmatprep.subr.mxu0 0.0
    %144 = vmatpush1.msra.mxu0 0.0
    %145 = vmatprep.subr.mxu0 0.0
    %146 = vmatpush1.msra.mxu0 0.0
    %147 = vmatprep.subr.mxu0 0.0
    %148 = vmatpush1.msra.mxu0 0.0
    %149 = vmatprep.subr.mxu0 0.0
    %150 = vmatpush1.msra.mxu0 0.0
    %151 = vmatprep.subr.mxu0 0.0
    %152 = vmatpush1.msra.mxu0 0.0
    %153 = vmatprep.subr.mxu0 0.0
    %154 = vmatpush1.msra.mxu0 0.0
    %155 = vmatprep.subr.mxu0 0.0
    %156 = vmatpush1.msra.mxu0 0.0
    %157 = vmatprep.subr.mxu0 0.0
    %158 = vmatpush1.msra.mxu0 0.0
    %159 = vmatprep.subr.mxu0 0.0
    %160 = vmatpush1.msra.mxu0 0.0
    %161 = vmatprep.subr.mxu0 0.0
    %162 = vmatpush1.msra.mxu0 0.0
    %163 = vmatprep.subr.mxu0 0.0
    %164 = vmatpush1.msra.mxu0 0.0
    %165 = vmatprep.subr.mxu0 0.0
    %166 = vmatpush1.msra.mxu0 0.0
    %167 = vmatprep.subr.mxu0 0.0
    %168 = vmatpush1.msra.mxu0 0.0
    %169 = vmatprep.subr.mxu0 0.0
    %170 = vmatpush1.msra.mxu0 0.0
    %171 = vmatprep.subr.mxu0 0.0
    %172 = vmatpush1.msra.mxu0 0.0
    %173 = vmatprep.subr.mxu0 0.0
    %174 = vmatpush1.msra.mxu0 0.0
    %175 = vmatprep.subr.mxu0 0.0
    %176 = vmatpush1.msra.mxu0 0.0
    %177 = vmatprep.subr.mxu0 0.0
    %178 = vmatpush1.msra.mxu0 0.0
    %179 = vmatprep.subr.mxu0 0.0
    %180 = vmatpush1.msra.mxu0 0.0
    %181 = vmatprep.subr.mxu0 0.0
    %182 = vmatpush1.msra.mxu0 0.0
    %183 = vmatprep.subr.mxu0 0.0
    %184 = vmatpush1.msra.mxu0 0.0
    %185 = vmatprep.subr.mxu0 0.0
    %186 = vmatpush1.msra.mxu0 0.0
    %187 = vmatprep.subr.mxu0 0.0
    %188 = vmatpush1.msra.mxu0 0.0
    %189 = vmatprep.mubr.f32.mxu0 0.0
    %190 = vmatmul.mubr.f32.gmra.mrb[0].mxu0 %v102
    %v191 = vpop.f32.mrb[0].mxu0
    %v192 = vadd.f32 %v98, %v191
    %v193 = vpop.f32.mrb[0].mxu0
    %194 = vmatprep.mubr.f32.mxu0 0.0
    %195 = vmatmul.mubr.f32.gmra.mrb[0].mxu0 %v105
    %v196 = vpop.f32.mrb[0].mxu0
    %v197 = vadd.f32 %v98, %v196
    %v198 = vpop.f32.mrb[0].mxu0
    %199 = vmatprep.mubr.f32.mxu0 0.0
    %200 = vmatmul.mubr.f32.gmra.mrb[0].mxu0 %v108
    %v201 = vpop.f32.mrb[0].mxu0
    %v202 = vadd.f32 %v98, %v201
    %v203 = vpop.f32.mrb[0].mxu0
    %204 = vmatprep.mubr.f32.mxu0 0.0
    %205 = vmatmul.mubr.f32.gmra.mrb[0].mxu0 %v111
    %v206 = vpop.f32.mrb[0].mxu0
    %v207 = vadd.f32 %v98, %v206
    %v208 = vpop.f32.mrb[0].mxu0
    %209 = vmatprep.mubr.f32.mxu0 0.0
    %210 = vmatmul.mubr.f32.gmra.mrb[0].mxu0 %v114
    %v211 = vpop.f32.mrb[0].mxu0
    %v212 = vadd.f32 %v98, %v211
    %v213 = vpop.f32.mrb[0].mxu0
    %214 = vmatprep.mubr.f32.mxu0 0.0
    %215 = vmatmul.mubr.f32.gmra.mrb[0].mxu0 %v117
    %v216 = vpop.f32.mrb[0].mxu0
    %v217 = vadd.f32 %v98, %v216
    %v218 = vpop.f32.mrb[0].mxu0
    %219 = vmatprep.mubr.f32.mxu0 0.0
    %220 = vmatmul.mubr.f32.gmra.mrb[0].mxu0 %v120
    %v221 = vpop.f32.mrb[0].mxu0
    %v222 = vadd.f32 %v98, %v221
    %v223 = vpop.f32.mrb[0].mxu0
    %224 = vmatprep.mubr.f32.mxu0 0.0
    %225 = vmatmul.mubr.f32.gmra.mrb[0].mxu0 %v123
    %v226 = vpop.f32.mrb[0].mxu0
    %v227 = vadd.f32 %v98, %v226
    %v228 = vpop.f32.mrb[0].mxu0
    %229 = vdwg.mxu0
    %vm230 = vcmask 261120
    %231 = vst.msk [vmem:[#allocation2] sm:$0xff] %vm230, %v192
    %232 = vst.msk [vmem:[#allocation2 + $0x8] sm:$0xff] %vm230, %v197
    %233 = vst.msk [vmem:[#allocation2 + $0x10] sm:$0xff] %vm230, %v202
    %234 = vst.msk [vmem:[#allocation2 + $0x18] sm:$0xff] %vm230, %v207
    %235 = vst.msk [vmem:[#allocation2 + $0x20] sm:$0xff] %vm230, %v212
    %236 = vst.msk [vmem:[#allocation2 + $0x28] sm:$0xff] %vm230, %v217
    %237 = vst.msk [vmem:[#allocation2 + $0x30] sm:$0xff] %vm230, %v222
    %238 = vst.msk [vmem:[#allocation2 + $0x38] sm:$0xff] %vm230, %v227
    %s239 = scalar_lea.vmem [#allocation7], 16
    %v240 = vld [vmem:[%s239] sm:$0xff]
    %v241 = vld [vmem:[%s239 + $0x8] sm:$0xff]
    %s242 = scalar_lea.vmem %s5, 1
    %v243 = vld [vmem:[%s242] sm:$0x1]
    %v245 = vlaneseq
    %v246 = vshrl.u32 %v245, 7
    %v247 = vsub.s32 0, %v246
    %v248 = vrot.slane %v243, %v247
    %250 = vmatprep.subr.mxu0 0.0
    %251 = vmatpush1.msra.mxu0 %v240
    %252 = vmatprep.subr.mxu0 0.0
    %253 = vmatpush1.msra.mxu0 %v241
    %254 = vmatprep.subr.mxu0 0.0
    %255 = vmatpush1.msra.mxu0 0.0
    %256 = vmatprep.subr.mxu0 0.0
    %257 = vmatpush1.msra.mxu0 0.0
    %258 = vmatprep.subr.mxu0 0.0
    %259 = vmatpush1.msra.mxu0 0.0
    %260 = vmatprep.subr.mxu0 0.0
    %261 = vmatpush1.msra.mxu0 0.0
    %262 = vmatprep.subr.mxu0 0.0
    %263 = vmatpush1.msra.mxu0 0.0
    %264 = vmatprep.subr.mxu0 0.0
    %265 = vmatpush1.msra.mxu0 0.0
    %266 = vmatprep.subr.mxu0 0.0
    %267 = vmatpush1.msra.mxu0 0.0
    %268 = vmatprep.subr.mxu0 0.0
    %269 = vmatpush1.msra.mxu0 0.0
    %270 = vmatprep.subr.mxu0 0.0
    %271 = vmatpush1.msra.mxu0 0.0
    %272 = vmatprep.subr.mxu0 0.0
    %273 = vmatpush1.msra.mxu0 0.0
    %274 = vmatprep.subr.mxu0 0.0
    %275 = vmatpush1.msra.mxu0 0.0
    %276 = vmatprep.subr.mxu0 0.0
    %277 = vmatpush1.msra.mxu0 0.0
    %278 = vmatprep.subr.mxu0 0.0
    %279 = vmatpush1.msra.mxu0 0.0
    %280 = vmatprep.subr.mxu0 0.0
    %281 = vmatpush1.msra.mxu0 0.0
    %282 = vmatprep.subr.mxu0 0.0
    %283 = vmatpush1.msra.mxu0 0.0
    %284 = vmatprep.subr.mxu0 0.0
    %285 = vmatpush1.msra.mxu0 0.0
    %286 = vmatprep.subr.mxu0 0.0
    %287 = vmatpush1.msra.mxu0 0.0
    %288 = vmatprep.subr.mxu0 0.0
    %289 = vmatpush1.msra.mxu0 0.0
    %290 = vmatprep.subr.mxu0 0.0
    %291 = vmatpush1.msra.mxu0 0.0
    %292 = vmatprep.subr.mxu0 0.0
    %293 = vmatpush1.msra.mxu0 0.0
    %294 = vmatprep.subr.mxu0 0.0
    %295 = vmatpush1.msra.mxu0 0.0
    %296 = vmatprep.subr.mxu0 0.0
    %297 = vmatpush1.msra.mxu0 0.0
    %298 = vmatprep.subr.mxu0 0.0
    %299 = vmatpush1.msra.mxu0 0.0
    %300 = vmatprep.subr.mxu0 0.0
    %301 = vmatpush1.msra.mxu0 0.0
    %302 = vmatprep.subr.mxu0 0.0
    %303 = vmatpush1.msra.mxu0 0.0
    %304 = vmatprep.subr.mxu0 0.0
    %305 = vmatpush1.msra.mxu0 0.0
    %306 = vmatprep.subr.mxu0 0.0
    %307 = vmatpush1.msra.mxu0 0.0
    %308 = vmatprep.subr.mxu0 0.0
    %309 = vmatpush1.msra.mxu0 0.0
    %310 = vmatprep.subr.mxu0 0.0
    %311 = vmatpush1.msra.mxu0 0.0
    %312 = vmatprep.subr.mxu0 0.0
    %313 = vmatpush1.msra.mxu0 0.0
    %314 = vmatprep.mubr.f32.mxu0 0.0
    %315 = vmatmul.mubr.f32.gmra.mrb[0].mxu0 %v102
    %v316 = vpop.f32.mrb[0].mxu0
    %v317 = vadd.f32 %v248, %v316
    %v318 = vpop.f32.mrb[0].mxu0
    %319 = vmatprep.mubr.f32.mxu0 0.0
    %320 = vmatmul.mubr.f32.gmra.mrb[0].mxu0 %v105
    %v321 = vpop.f32.mrb[0].mxu0
    %v322 = vadd.f32 %v248, %v321
    %v323 = vpop.f32.mrb[0].mxu0
    %324 = vmatprep.mubr.f32.mxu0 0.0
    %325 = vmatmul.mubr.f32.gmra.mrb[0].mxu0 %v108
    %v326 = vpop.f32.mrb[0].mxu0
    %v327 = vadd.f32 %v248, %v326
    %v328 = vpop.f32.mrb[0].mxu0
    %329 = vmatprep.mubr.f32.mxu0 0.0
    %330 = vmatmul.mubr.f32.gmra.mrb[0].mxu0 %v111
    %v331 = vpop.f32.mrb[0].mxu0
    %v332 = vadd.f32 %v248, %v331
    %v333 = vpop.f32.mrb[0].mxu0
    %334 = vmatprep.mubr.f32.mxu0 0.0
    %335 = vmatmul.mubr.f32.gmra.mrb[0].mxu0 %v114
    %v336 = vpop.f32.mrb[0].mxu0
    %v337 = vadd.f32 %v248, %v336
    %v338 = vpop.f32.mrb[0].mxu0
    %339 = vmatprep.mubr.f32.mxu0 0.0
    %340 = vmatmul.mubr.f32.gmra.mrb[0].mxu0 %v117
    %v341 = vpop.f32.mrb[0].mxu0
    %v342 = vadd.f32 %v248, %v341
    %v343 = vpop.f32.mrb[0].mxu0
    %344 = vmatprep.mubr.f32.mxu0 0.0
    %345 = vmatmul.mubr.f32.gmra.mrb[0].mxu0 %v120
    %v346 = vpop.f32.mrb[0].mxu0
    %v347 = vadd.f32 %v248, %v346
    %v348 = vpop.f32.mrb[0].mxu0
    %349 = vmatprep.mubr.f32.mxu0 0.0
    %350 = vmatmul.mubr.f32.gmra.mrb[0].mxu0 %v123
    %v351 = vpop.f32.mrb[0].mxu0
    %v352 = vadd.f32 %v248, %v351
    %v353 = vpop.f32.mrb[0].mxu0
    %354 = vdwg.mxu0
    %s355 = scalar_lea.vmem [#allocation2], 64
    %356 = vst.msk [vmem:[%s355] sm:$0xff] %vm230, %v317
    %357 = vst.msk [vmem:[%s355 + $0x8] sm:$0xff] %vm230, %v322
    %358 = vst.msk [vmem:[%s355 + $0x10] sm:$0xff] %vm230, %v327
    %359 = vst.msk [vmem:[%s355 + $0x18] sm:$0xff] %vm230, %v332
    %360 = vst.msk [vmem:[%s355 + $0x20] sm:$0xff] %vm230, %v337
    %361 = vst.msk [vmem:[%s355 + $0x28] sm:$0xff] %vm230, %v342
    %362 = vst.msk [vmem:[%s355 + $0x30] sm:$0xff] %vm230, %v347
    %363 = vst.msk [vmem:[%s355 + $0x38] sm:$0xff] %vm230, %v352
    %s364 = scalar_lea.vmem [#allocation7], 32
    %v365 = vld [vmem:[%s364] sm:$0xff]
    %v366 = vld [vmem:[%s364 + $0x8] sm:$0xff]
    %s367 = scalar_lea.vmem %s5, 2
    %v368 = vld [vmem:[%s367] sm:$0x1]
    %v370 = vlaneseq
    %v371 = vshrl.u32 %v370, 7
    %v372 = vsub.s32 0, %v371
    %v373 = vrot.slane %v368, %v372
    %375 = vmatprep.subr.mxu0 0.0
    %376 = vmatpush1.msra.mxu0 %v365
    %377 = vmatprep.subr.mxu0 0.0
    %378 = vmatpush1.msra.mxu0 %v366
    %379 = vmatprep.subr.mxu0 0.0
    %380 = vmatpush1.msra.mxu0 0.0
    %381 = vmatprep.subr.mxu0 0.0
    %382 = vmatpush1.msra.mxu0 0.0
    %383 = vmatprep.subr.mxu0 0.0
    %384 = vmatpush1.msra.mxu0 0.0
    %385 = vmatprep.subr.mxu0 0.0
    %386 = vmatpush1.msra.mxu0 0.0
    %387 = vmatprep.subr.mxu0 0.0
    %388 = vmatpush1.msra.mxu0 0.0
    %389 = vmatprep.subr.mxu0 0.0
    %390 = vmatpush1.msra.mxu0 0.0
    %391 = vmatprep.subr.mxu0 0.0
    %392 = vmatpush1.msra.mxu0 0.0
    %393 = vmatprep.subr.mxu0 0.0
    %394 = vmatpush1.msra.mxu0 0.0
    %395 = vmatprep.subr.mxu0 0.0
    %396 = vmatpush1.msra.mxu0 0.0
    %397 = vmatprep.subr.mxu0 0.0
    %398 = vmatpush1.msra.mxu0 0.0
    %399 = vmatprep.subr.mxu0 0.0
    %400 = vmatpush1.msra.mxu0 0.0
    %401 = vmatprep.subr.mxu0 0.0
    %402 = vmatpush1.msra.mxu0 0.0
    %403 = vmatprep.subr.mxu0 0.0
    %404 = vmatpush1.msra.mxu0 0.0
    %405 = vmatprep.subr.mxu0 0.0
    %406 = vmatpush1.msra.mxu0 0.0
    %407 = vmatprep.subr.mxu0 0.0
    %408 = vmatpush1.msra.mxu0 0.0
    %409 = vmatprep.subr.mxu0 0.0
    %410 = vmatpush1.msra.mxu0 0.0
    %411 = vmatprep.subr.mxu0 0.0
    %412 = vmatpush1.msra.mxu0 0.0
    %413 = vmatprep.subr.mxu0 0.0
    %414 = vmatpush1.msra.mxu0 0.0
    %415 = vmatprep.subr.mxu0 0.0
    %416 = vmatpush1.msra.mxu0 0.0
    %417 = vmatprep.subr.mxu0 0.0
    %418 = vmatpush1.msra.mxu0 0.0
    %419 = vmatprep.subr.mxu0 0.0
    %420 = vmatpush1.msra.mxu0 0.0
    %421 = vmatprep.subr.mxu0 0.0
    %422 = vmatpush1.msra.mxu0 0.0
    %423 = vmatprep.subr.mxu0 0.0
    %424 = vmatpush1.msra.mxu0 0.0
    %425 = vmatprep.subr.mxu0 0.0
    %426 = vmatpush1.msra.mxu0 0.0
    %427 = vmatprep.subr.mxu0 0.0
    %428 = vmatpush1.msra.mxu0 0.0
    %429 = vmatprep.subr.mxu0 0.0
    %430 = vmatpush1.msra.mxu0 0.0
    %431 = vmatprep.subr.mxu0 0.0
    %432 = vmatpush1.msra.mxu0 0.0
    %433 = vmatprep.subr.mxu0 0.0
    %434 = vmatpush1.msra.mxu0 0.0
    %435 = vmatprep.subr.mxu0 0.0
    %436 = vmatpush1.msra.mxu0 0.0
    %437 = vmatprep.subr.mxu0 0.0
    %438 = vmatpush1.msra.mxu0 0.0
    %439 = vmatprep.mubr.f32.mxu0 0.0
    %440 = vmatmul.mubr.f32.gmra.mrb[0].mxu0 %v102
    %v441 = vpop.f32.mrb[0].mxu0
    %v442 = vadd.f32 %v373, %v441
    %v443 = vpop.f32.mrb[0].mxu0
    %444 = vmatprep.mubr.f32.mxu0 0.0
    %445 = vmatmul.mubr.f32.gmra.mrb[0].mxu0 %v105
    %v446 = vpop.f32.mrb[0].mxu0
    %v447 = vadd.f32 %v373, %v446
    %v448 = vpop.f32.mrb[0].mxu0
    %449 = vmatprep.mubr.f32.mxu0 0.0
    %450 = vmatmul.mubr.f32.gmra.mrb[0].mxu0 %v108
    %v451 = vpop.f32.mrb[0].mxu0
    %v452 = vadd.f32 %v373, %v451
    %v453 = vpop.f32.mrb[0].mxu0
    %454 = vmatprep.mubr.f32.mxu0 0.0
    %455 = vmatmul.mubr.f32.gmra.mrb[0].mxu0 %v111
    %v456 = vpop.f32.mrb[0].mxu0
    %v457 = vadd.f32 %v373, %v456
    %v458 = vpop.f32.mrb[0].mxu0
    %459 = vmatprep.mubr.f32.mxu0 0.0
    %460 = vmatmul.mubr.f32.gmra.mrb[0].mxu0 %v114
    %v461 = vpop.f32.mrb[0].mxu0
    %v462 = vadd.f32 %v373, %v461
    %v463 = vpop.f32.mrb[0].mxu0
    %464 = vmatprep.mubr.f32.mxu0 0.0
    %465 = vmatmul.mubr.f32.gmra.mrb[0].mxu0 %v117
    %v466 = vpop.f32.mrb[0].mxu0
    %v467 = vadd.f32 %v373, %v466
    %v468 = vpop.f32.mrb[0].mxu0
    %469 = vmatprep.mubr.f32.mxu0 0.0
    %470 = vmatmul.mubr.f32.gmra.mrb[0].mxu0 %v120
    %v471 = vpop.f32.mrb[0].mxu0
    %v472 = vadd.f32 %v373, %v471
    %v473 = vpop.f32.mrb[0].mxu0
    %474 = vmatprep.mubr.f32.mxu0 0.0
    %475 = vmatmul.mubr.f32.gmra.mrb[0].mxu0 %v123
    %v476 = vpop.f32.mrb[0].mxu0
    %v477 = vadd.f32 %v373, %v476
    %v478 = vpop.f32.mrb[0].mxu0
    %479 = vdwg.mxu0
    %s480 = scalar_lea.vmem [#allocation2], 128
    %481 = vst.msk [vmem:[%s480] sm:$0xff] %vm230, %v442
    %482 = vst.msk [vmem:[%s480 + $0x8] sm:$0xff] %vm230, %v447
    %483 = vst.msk [vmem:[%s480 + $0x10] sm:$0xff] %vm230, %v452
    %484 = vst.msk [vmem:[%s480 + $0x18] sm:$0xff] %vm230, %v457
    %485 = vst.msk [vmem:[%s480 + $0x20] sm:$0xff] %vm230, %v462
    %486 = vst.msk [vmem:[%s480 + $0x28] sm:$0xff] %vm230, %v467
    %487 = vst.msk [vmem:[%s480 + $0x30] sm:$0xff] %vm230, %v472
    %488 = vst.msk [vmem:[%s480 + $0x38] sm:$0xff] %vm230, %v477
    %s489 = scalar_lea.vmem [#allocation7], 48
    %v490 = vld [vmem:[%s489] sm:$0xff]
    %v491 = vld [vmem:[%s489 + $0x8] sm:$0xff]
    %s492 = scalar_lea.vmem %s5, 3
    %v493 = vld [vmem:[%s492] sm:$0x1]
    %v495 = vlaneseq
    %v496 = vshrl.u32 %v495, 7
    %v497 = vsub.s32 0, %v496
    %v498 = vrot.slane %v493, %v497
    %500 = vmatprep.subr.mxu0 0.0
    %501 = vmatpush1.msra.mxu0 %v490
    %502 = vmatprep.subr.mxu0 0.0
    %503 = vmatpush1.msra.mxu0 %v491
    %504 = vmatprep.subr.mxu0 0.0
    %505 = vmatpush1.msra.mxu0 0.0
    %506 = vmatprep.subr.mxu0 0.0
    %507 = vmatpush1.msra.mxu0 0.0
    %508 = vmatprep.subr.mxu0 0.0
    %509 = vmatpush1.msra.mxu0 0.0
    %510 = vmatprep.subr.mxu0 0.0
    %511 = vmatpush1.msra.mxu0 0.0
    %512 = vmatprep.subr.mxu0 0.0
    %513 = vmatpush1.msra.mxu0 0.0
    %514 = vmatprep.subr.mxu0 0.0
    %515 = vmatpush1.msra.mxu0 0.0
    %516 = vmatprep.subr.mxu0 0.0
    %517 = vmatpush1.msra.mxu0 0.0
    %518 = vmatprep.subr.mxu0 0.0
    %519 = vmatpush1.msra.mxu0 0.0
    %520 = vmatprep.subr.mxu0 0.0
    %521 = vmatpush1.msra.mxu0 0.0
    %522 = vmatprep.subr.mxu0 0.0
    %523 = vmatpush1.msra.mxu0 0.0
    %524 = vmatprep.subr.mxu0 0.0
    %525 = vmatpush1.msra.mxu0 0.0
    %526 = vmatprep.subr.mxu0 0.0
    %527 = vmatpush1.msra.mxu0 0.0
    %528 = vmatprep.subr.mxu0 0.0
    %529 = vmatpush1.msra.mxu0 0.0
    %530 = vmatprep.subr.mxu0 0.0
    %531 = vmatpush1.msra.mxu0 0.0
    %532 = vmatprep.subr.mxu0 0.0
    %533 = vmatpush1.msra.mxu0 0.0
    %534 = vmatprep.subr.mxu0 0.0
    %535 = vmatpush1.msra.mxu0 0.0
    %536 = vmatprep.subr.mxu0 0.0
    %537 = vmatpush1.msra.mxu0 0.0
    %538 = vmatprep.subr.mxu0 0.0
    %539 = vmatpush1.msra.mxu0 0.0
    %540 = vmatprep.subr.mxu0 0.0
    %541 = vmatpush1.msra.mxu0 0.0
    %542 = vmatprep.subr.mxu0 0.0
    %543 = vmatpush1.msra.mxu0 0.0
    %544 = vmatprep.subr.mxu0 0.0
    %545 = vmatpush1.msra.mxu0 0.0
    %546 = vmatprep.subr.mxu0 0.0
    %547 = vmatpush1.msra.mxu0 0.0
    %548 = vmatprep.subr.mxu0 0.0
    %549 = vmatpush1.msra.mxu0 0.0
    %550 = vmatprep.subr.mxu0 0.0
    %551 = vmatpush1.msra.mxu0 0.0
    %552 = vmatprep.subr.mxu0 0.0
    %553 = vmatpush1.msra.mxu0 0.0
    %554 = vmatprep.subr.mxu0 0.0
    %555 = vmatpush1.msra.mxu0 0.0
    %556 = vmatprep.subr.mxu0 0.0
    %557 = vmatpush1.msra.mxu0 0.0
    %558 = vmatprep.subr.mxu0 0.0
    %559 = vmatpush1.msra.mxu0 0.0
    %560 = vmatprep.subr.mxu0 0.0
    %561 = vmatpush1.msra.mxu0 0.0
    %562 = vmatprep.subr.mxu0 0.0
    %563 = vmatpush1.msra.mxu0 0.0
    %564 = vmatprep.mubr.f32.mxu0 0.0
    %565 = vmatmul.mubr.f32.gmra.mrb[0].mxu0 %v102
    %v566 = vpop.f32.mrb[0].mxu0
    %v567 = vadd.f32 %v498, %v566
    %v568 = vpop.f32.mrb[0].mxu0
    %569 = vmatprep.mubr.f32.mxu0 0.0
    %570 = vmatmul.mubr.f32.gmra.mrb[0].mxu0 %v105
    %v571 = vpop.f32.mrb[0].mxu0
    %v572 = vadd.f32 %v498, %v571
    %v573 = vpop.f32.mrb[0].mxu0
    %574 = vmatprep.mubr.f32.mxu0 0.0
    %575 = vmatmul.mubr.f32.gmra.mrb[0].mxu0 %v108
    %v576 = vpop.f32.mrb[0].mxu0
    %v577 = vadd.f32 %v498, %v576
    %v578 = vpop.f32.mrb[0].mxu0
    %579 = vmatprep.mubr.f32.mxu0 0.0
    %580 = vmatmul.mubr.f32.gmra.mrb[0].mxu0 %v111
    %v581 = vpop.f32.mrb[0].mxu0
    %v582 = vadd.f32 %v498, %v581
    %v583 = vpop.f32.mrb[0].mxu0
    %584 = vmatprep.mubr.f32.mxu0 0.0
    %585 = vmatmul.mubr.f32.gmra.mrb[0].mxu0 %v114
    %v586 = vpop.f32.mrb[0].mxu0
    %v587 = vadd.f32 %v498, %v586
    %v588 = vpop.f32.mrb[0].mxu0
    %589 = vmatprep.mubr.f32.mxu0 0.0
    %590 = vmatmul.mubr.f32.gmra.mrb[0].mxu0 %v117
    %v591 = vpop.f32.mrb[0].mxu0
    %v592 = vadd.f32 %v498, %v591
    %v593 = vpop.f32.mrb[0].mxu0
    %594 = vmatprep.mubr.f32.mxu0 0.0
    %595 = vmatmul.mubr.f32.gmra.mrb[0].mxu0 %v120
    %v596 = vpop.f32.mrb[0].mxu0
    %v597 = vadd.f32 %v498, %v596
    %v598 = vpop.f32.mrb[0].mxu0
    %599 = vmatprep.mubr.f32.mxu0 0.0
    %600 = vmatmul.mubr.f32.gmra.mrb[0].mxu0 %v123
    %v601 = vpop.f32.mrb[0].mxu0
    %v602 = vadd.f32 %v498, %v601
    %v603 = vpop.f32.mrb[0].mxu0
    %604 = vdwg.mxu0
    %s605 = scalar_lea.vmem [#allocation2], 192
    %606 = vst.msk [vmem:[%s605] sm:$0xff] %vm230, %v567
    %607 = vst.msk [vmem:[%s605 + $0x8] sm:$0xff] %vm230, %v572
    %608 = vst.msk [vmem:[%s605 + $0x10] sm:$0xff] %vm230, %v577
    %609 = vst.msk [vmem:[%s605 + $0x18] sm:$0xff] %vm230, %v582
    %610 = vst.msk [vmem:[%s605 + $0x20] sm:$0xff] %vm230, %v587
    %611 = vst.msk [vmem:[%s605 + $0x28] sm:$0xff] %vm230, %v592
    %612 = vst.msk [vmem:[%s605 + $0x30] sm:$0xff] %vm230, %v597
    %613 = vst.msk [vmem:[%s605 + $0x38] sm:$0xff] %vm230, %v602
    %v614 = vld [vmem:[#allocation2] sm:$0xff]
    %v615 = vld [vmem:[#allocation9] sm:$0xff]
    %v616 = vld [vmem:[#allocation9 + $0x8] sm:$0xff]
    %v617 = vld [vmem:[#allocation9 + $0x10] sm:$0xff]
    %v618 = vld [vmem:[#allocation9 + $0x18] sm:$0xff]
    %v620 = vsel %vm230, %v89, 0
    %622 = vmatprep.subr.mxu0 0.0
    %623 = vmatpush1.msra.mxu0 %v615
    %624 = vmatprep.subr.mxu0 0.0
    %625 = vmatpush1.msra.mxu0 %v616
    %626 = vmatprep.subr.mxu0 0.0
    %627 = vmatpush1.msra.mxu0 %v617
    %628 = vmatprep.subr.mxu0 0.0
    %629 = vmatpush1.msra.mxu0 %v618
    %630 = vmatprep.subr.mxu0 0.0
    %631 = vmatpush1.msra.mxu0 0.0
    %632 = vmatprep.subr.mxu0 0.0
    %633 = vmatpush1.msra.mxu0 0.0
    %634 = vmatprep.subr.mxu0 0.0
    %635 = vmatpush1.msra.mxu0 0.0
    %636 = vmatprep.subr.mxu0 0.0
    %637 = vmatpush1.msra.mxu0 0.0
    %638 = vmatprep.subr.mxu0 0.0
    %639 = vmatpush1.msra.mxu0 0.0
    %640 = vmatprep.subr.mxu0 0.0
    %641 = vmatpush1.msra.mxu0 0.0
    %642 = vmatprep.subr.mxu0 0.0
    %643 = vmatpush1.msra.mxu0 0.0
    %644 = vmatprep.subr.mxu0 0.0
    %645 = vmatpush1.msra.mxu0 0.0
    %646 = vmatprep.subr.mxu0 0.0
    %647 = vmatpush1.msra.mxu0 0.0
    %648 = vmatprep.subr.mxu0 0.0
    %649 = vmatpush1.msra.mxu0 0.0
    %650 = vmatprep.subr.mxu0 0.0
    %651 = vmatpush1.msra.mxu0 0.0
    %652 = vmatprep.subr.mxu0 0.0
    %653 = vmatpush1.msra.mxu0 0.0
    %654 = vmatprep.subr.mxu0 0.0
    %655 = vmatpush1.msra.mxu0 0.0
    %656 = vmatprep.subr.mxu0 0.0
    %657 = vmatpush1.msra.mxu0 0.0
    %658 = vmatprep.subr.mxu0 0.0
    %659 = vmatpush1.msra.mxu0 0.0
    %660 = vmatprep.subr.mxu0 0.0
    %661 = vmatpush1.msra.mxu0 0.0
    %662 = vmatprep.subr.mxu0 0.0
    %663 = vmatpush1.msra.mxu0 0.0
    %664 = vmatprep.subr.mxu0 0.0
    %665 = vmatpush1.msra.mxu0 0.0
    %666 = vmatprep.subr.mxu0 0.0
    %667 = vmatpush1.msra.mxu0 0.0
    %668 = vmatprep.subr.mxu0 0.0
    %669 = vmatpush1.msra.mxu0 0.0
    %670 = vmatprep.subr.mxu0 0.0
    %671 = vmatpush1.msra.mxu0 0.0
    %672 = vmatprep.subr.mxu0 0.0
    %673 = vmatpush1.msra.mxu0 0.0
    %674 = vmatprep.subr.mxu0 0.0
    %675 = vmatpush1.msra.mxu0 0.0
    %676 = vmatprep.subr.mxu0 0.0
    %677 = vmatpush1.msra.mxu0 0.0
    %678 = vmatprep.subr.mxu0 0.0
    %679 = vmatpush1.msra.mxu0 0.0
    %680 = vmatprep.subr.mxu0 0.0
    %681 = vmatpush1.msra.mxu0 0.0
    %682 = vmatprep.subr.mxu0 0.0
    %683 = vmatpush1.msra.mxu0 0.0
    %684 = vmatprep.subr.mxu0 0.0
    %685 = vmatpush1.msra.mxu0 0.0
    %686 = vmatprep.mubr.f32.mxu0 0.0
    %687 = vmatmul.mubr.f32.gmra.mrb[0].mxu0 %v620
    %v688 = vpop.f32.mrb[0].mxu0
    %v689 = vadd.f32 0.0, %v688
    %v690 = vpop.f32.mrb[0].mxu0
    %691 = vdwg.mxu0
    %v692 = vadd.f32 %v614, %v689
    %v693 = vld [vmem:[%s355] sm:$0xff]
    %s694 = scalar_lea.vmem [#allocation9], 32
    %v695 = vld [vmem:[%s694] sm:$0xff]
    %v696 = vld [vmem:[%s694 + $0x8] sm:$0xff]
    %v697 = vld [vmem:[%s694 + $0x10] sm:$0xff]
    %v698 = vld [vmem:[%s694 + $0x18] sm:$0xff]
    %699 = vmatprep.subr.mxu0 0.0
    %700 = vmatpush1.msra.mxu0 %v695
    %701 = vmatprep.subr.mxu0 0.0
    %702 = vmatpush1.msra.mxu0 %v696
    %703 = vmatprep.subr.mxu0 0.0
    %704 = vmatpush1.msra.mxu0 %v697
    %705 = vmatprep.subr.mxu0 0.0
    %706 = vmatpush1.msra.mxu0 %v698
    %707 = vmatprep.subr.mxu0 0.0
    %708 = vmatpush1.msra.mxu0 0.0
    %709 = vmatprep.subr.mxu0 0.0
    %710 = vmatpush1.msra.mxu0 0.0
    %711 = vmatprep.subr.mxu0 0.0
    %712 = vmatpush1.msra.mxu0 0.0
    %713 = vmatprep.subr.mxu0 0.0
    %714 = vmatpush1.msra.mxu0 0.0
    %715 = vmatprep.subr.mxu0 0.0
    %716 = vmatpush1.msra.mxu0 0.0
    %717 = vmatprep.subr.mxu0 0.0
    %718 = vmatpush1.msra.mxu0 0.0
    %719 = vmatprep.subr.mxu0 0.0
    %720 = vmatpush1.msra.mxu0 0.0
    %721 = vmatprep.subr.mxu0 0.0
    %722 = vmatpush1.msra.mxu0 0.0
    %723 = vmatprep.subr.mxu0 0.0
    %724 = vmatpush1.msra.mxu0 0.0
    %725 = vmatprep.subr.mxu0 0.0
    %726 = vmatpush1.msra.mxu0 0.0
    %727 = vmatprep.subr.mxu0 0.0
    %728 = vmatpush1.msra.mxu0 0.0
    %729 = vmatprep.subr.mxu0 0.0
    %730 = vmatpush1.msra.mxu0 0.0
    %731 = vmatprep.subr.mxu0 0.0
    %732 = vmatpush1.msra.mxu0 0.0
    %733 = vmatprep.subr.mxu0 0.0
    %734 = vmatpush1.msra.mxu0 0.0
    %735 = vmatprep.subr.mxu0 0.0
    %736 = vmatpush1.msra.mxu0 0.0
    %737 = vmatprep.subr.mxu0 0.0
    %738 = vmatpush1.msra.mxu0 0.0
    %739 = vmatprep.subr.mxu0 0.0
    %740 = vmatpush1.msra.mxu0 0.0
    %741 = vmatprep.subr.mxu0 0.0
    %742 = vmatpush1.msra.mxu0 0.0
    %743 = vmatprep.subr.mxu0 0.0
    %744 = vmatpush1.msra.mxu0 0.0
    %745 = vmatprep.subr.mxu0 0.0
    %746 = vmatpush1.msra.mxu0 0.0
    %747 = vmatprep.subr.mxu0 0.0
    %748 = vmatpush1.msra.mxu0 0.0
    %749 = vmatprep.subr.mxu0 0.0
    %750 = vmatpush1.msra.mxu0 0.0
    %751 = vmatprep.subr.mxu0 0.0
    %752 = vmatpush1.msra.mxu0 0.0
    %753 = vmatprep.subr.mxu0 0.0
    %754 = vmatpush1.msra.mxu0 0.0
    %755 = vmatprep.subr.mxu0 0.0
    %756 = vmatpush1.msra.mxu0 0.0
    %757 = vmatprep.subr.mxu0 0.0
    %758 = vmatpush1.msra.mxu0 0.0
    %759 = vmatprep.subr.mxu0 0.0
    %760 = vmatpush1.msra.mxu0 0.0
    %761 = vmatprep.subr.mxu0 0.0
    %762 = vmatpush1.msra.mxu0 0.0
    %763 = vmatprep.mubr.f32.mxu0 0.0
    %764 = vmatmul.mubr.f32.gmra.mrb[0].mxu0 %v620
    %v765 = vpop.f32.mrb[0].mxu0
    %v766 = vadd.f32 0.0, %v765
    %v767 = vpop.f32.mrb[0].mxu0
    %768 = vdwg.mxu0
    %v769 = vadd.f32 %v693, %v766
    %v770 = vld [vmem:[%s480] sm:$0xff]
    %s771 = scalar_lea.vmem [#allocation9], 64
    %v772 = vld [vmem:[%s771] sm:$0xff]
    %v773 = vld [vmem:[%s771 + $0x8] sm:$0xff]
    %v774 = vld [vmem:[%s771 + $0x10] sm:$0xff]
    %v775 = vld [vmem:[%s771 + $0x18] sm:$0xff]
    %776 = vmatprep.subr.mxu0 0.0
    %777 = vmatpush1.msra.mxu0 %v772
    %778 = vmatprep.subr.mxu0 0.0
    %779 = vmatpush1.msra.mxu0 %v773
    %780 = vmatprep.subr.mxu0 0.0
    %781 = vmatpush1.msra.mxu0 %v774
    %782 = vmatprep.subr.mxu0 0.0
    %783 = vmatpush1.msra.mxu0 %v775
    %784 = vmatprep.subr.mxu0 0.0
    %785 = vmatpush1.msra.mxu0 0.0
    %786 = vmatprep.subr.mxu0 0.0
    %787 = vmatpush1.msra.mxu0 0.0
    %788 = vmatprep.subr.mxu0 0.0
    %789 = vmatpush1.msra.mxu0 0.0
    %790 = vmatprep.subr.mxu0 0.0
    %791 = vmatpush1.msra.mxu0 0.0
    %792 = vmatprep.subr.mxu0 0.0
    %793 = vmatpush1.msra.mxu0 0.0
    %794 = vmatprep.subr.mxu0 0.0
    %795 = vmatpush1.msra.mxu0 0.0
    %796 = vmatprep.subr.mxu0 0.0
    %797 = vmatpush1.msra.mxu0 0.0
    %798 = vmatprep.subr.mxu0 0.0
    %799 = vmatpush1.msra.mxu0 0.0
    %800 = vmatprep.subr.mxu0 0.0
    %801 = vmatpush1.msra.mxu0 0.0
    %802 = vmatprep.subr.mxu0 0.0
    %803 = vmatpush1.msra.mxu0 0.0
    %804 = vmatprep.subr.mxu0 0.0
    %805 = vmatpush1.msra.mxu0 0.0
    %806 = vmatprep.subr.mxu0 0.0
    %807 = vmatpush1.msra.mxu0 0.0
    %808 = vmatprep.subr.mxu0 0.0
    %809 = vmatpush1.msra.mxu0 0.0
    %810 = vmatprep.subr.mxu0 0.0
    %811 = vmatpush1.msra.mxu0 0.0
    %812 = vmatprep.subr.mxu0 0.0
    %813 = vmatpush1.msra.mxu0 0.0
    %814 = vmatprep.subr.mxu0 0.0
    %815 = vmatpush1.msra.mxu0 0.0
    %816 = vmatprep.subr.mxu0 0.0
    %817 = vmatpush1.msra.mxu0 0.0
    %818 = vmatprep.subr.mxu0 0.0
    %819 = vmatpush1.msra.mxu0 0.0
    %820 = vmatprep.subr.mxu0 0.0
    %821 = vmatpush1.msra.mxu0 0.0
    %822 = vmatprep.subr.mxu0 0.0
    %823 = vmatpush1.msra.mxu0 0.0
    %824 = vmatprep.subr.mxu0 0.0
    %825 = vmatpush1.msra.mxu0 0.0
    %826 = vmatprep.subr.mxu0 0.0
    %827 = vmatpush1.msra.mxu0 0.0
    %828 = vmatprep.subr.mxu0 0.0
    %829 = vmatpush1.msra.mxu0 0.0
    %830 = vmatprep.subr.mxu0 0.0
    %831 = vmatpush1.msra.mxu0 0.0
    %832 = vmatprep.subr.mxu0 0.0
    %833 = vmatpush1.msra.mxu0 0.0
    %834 = vmatprep.subr.mxu0 0.0
    %835 = vmatpush1.msra.mxu0 0.0
    %836 = vmatprep.subr.mxu0 0.0
    %837 = vmatpush1.msra.mxu0 0.0
    %838 = vmatprep.subr.mxu0 0.0
    %839 = vmatpush1.msra.mxu0 0.0
    %840 = vmatprep.mubr.f32.mxu0 0.0
    %841 = vmatmul.mubr.f32.gmra.mrb[0].mxu0 %v620
    %v842 = vpop.f32.mrb[0].mxu0
    %v843 = vadd.f32 0.0, %v842
    %v844 = vpop.f32.mrb[0].mxu0
    %845 = vdwg.mxu0
    %v846 = vadd.f32 %v770, %v843
    %v847 = vld [vmem:[%s605] sm:$0xff]
    %s848 = scalar_lea.vmem [#allocation9], 96
    %v849 = vld [vmem:[%s848] sm:$0xff]
    %v850 = vld [vmem:[%s848 + $0x8] sm:$0xff]
    %v851 = vld [vmem:[%s848 + $0x10] sm:$0xff]
    %v852 = vld [vmem:[%s848 + $0x18] sm:$0xff]
    %853 = vmatprep.subr.mxu0 0.0
    %854 = vmatpush1.msra.mxu0 %v849
    %855 = vmatprep.subr.mxu0 0.0
    %856 = vmatpush1.msra.mxu0 %v850
    %857 = vmatprep.subr.mxu0 0.0
    %858 = vmatpush1.msra.mxu0 %v851
    %859 = vmatprep.subr.mxu0 0.0
    %860 = vmatpush1.msra.mxu0 %v852
    %861 = vmatprep.subr.mxu0 0.0
    %862 = vmatpush1.msra.mxu0 0.0
    %863 = vmatprep.subr.mxu0 0.0
    %864 = vmatpush1.msra.mxu0 0.0
    %865 = vmatprep.subr.mxu0 0.0
    %866 = vmatpush1.msra.mxu0 0.0
    %867 = vmatprep.subr.mxu0 0.0
    %868 = vmatpush1.msra.mxu0 0.0
    %869 = vmatprep.subr.mxu0 0.0
    %870 = vmatpush1.msra.mxu0 0.0
    %871 = vmatprep.subr.mxu0 0.0
    %872 = vmatpush1.msra.mxu0 0.0
    %873 = vmatprep.subr.mxu0 0.0
    %874 = vmatpush1.msra.mxu0 0.0
    %875 = vmatprep.subr.mxu0 0.0
    %876 = vmatpush1.msra.mxu0 0.0
    %877 = vmatprep.subr.mxu0 0.0
    %878 = vmatpush1.msra.mxu0 0.0
    %879 = vmatprep.subr.mxu0 0.0
    %880 = vmatpush1.msra.mxu0 0.0
    %881 = vmatprep.subr.mxu0 0.0
    %882 = vmatpush1.msra.mxu0 0.0
    %883 = vmatprep.subr.mxu0 0.0
    %884 = vmatpush1.msra.mxu0 0.0
    %885 = vmatprep.subr.mxu0 0.0
    %886 = vmatpush1.msra.mxu0 0.0
    %887 = vmatprep.subr.mxu0 0.0
    %888 = vmatpush1.msra.mxu0 0.0
    %889 = vmatprep.subr.mxu0 0.0
    %890 = vmatpush1.msra.mxu0 0.0
    %891 = vmatprep.subr.mxu0 0.0
    %892 = vmatpush1.msra.mxu0 0.0
    %893 = vmatprep.subr.mxu0 0.0
    %894 = vmatpush1.msra.mxu0 0.0
    %895 = vmatprep.subr.mxu0 0.0
    %896 = vmatpush1.msra.mxu0 0.0
    %897 = vmatprep.subr.mxu0 0.0
    %898 = vmatpush1.msra.mxu0 0.0
    %899 = vmatprep.subr.mxu0 0.0
    %900 = vmatpush1.msra.mxu0 0.0
    %901 = vmatprep.subr.mxu0 0.0
    %902 = vmatpush1.msra.mxu0 0.0
    %903 = vmatprep.subr.mxu0 0.0
    %904 = vmatpush1.msra.mxu0 0.0
    %905 = vmatprep.subr.mxu0 0.0
    %906 = vmatpush1.msra.mxu0 0.0
    %907 = vmatprep.subr.mxu0 0.0
    %908 = vmatpush1.msra.mxu0 0.0
    %909 = vmatprep.subr.mxu0 0.0
    %910 = vmatpush1.msra.mxu0 0.0
    %911 = vmatprep.subr.mxu0 0.0
    %912 = vmatpush1.msra.mxu0 0.0
    %913 = vmatprep.subr.mxu0 0.0
    %914 = vmatpush1.msra.mxu0 0.0
    %915 = vmatprep.subr.mxu0 0.0
    %916 = vmatpush1.msra.mxu0 0.0
    %917 = vmatprep.mubr.f32.mxu0 0.0
    %918 = vmatmul.mubr.f32.gmra.mrb[0].mxu0 %v620
    %v919 = vpop.f32.mrb[0].mxu0
    %v920 = vadd.f32 0.0, %v919
    %v921 = vpop.f32.mrb[0].mxu0
    %922 = vdwg.mxu0
    %v923 = vadd.f32 %v847, %v920
    %v924 = vxor.u32 %v692, 2147483648
    %v925 = vmul.f32 %v924, 1.442695
    %v926 = vpow.pop %v925
    %v927 = vadd.f32 %v926, 1.0
    %v928 = vrcp.pop %v927
    %v929 = vmul.f32 1.0, %v928
    %v930 = vxor.u32 %v769, 2147483648
    %v931 = vmul.f32 %v930, 1.442695
    %v932 = vpow.pop %v931
    %v933 = vadd.f32 %v932, 1.0
    %v934 = vrcp.pop %v933
    %v935 = vmul.f32 1.0, %v934
    %v936 = vtanh.pop %v846
    %v937 = vxor.u32 %v923, 2147483648
    %v938 = vmul.f32 %v937, 1.442695
    %v939 = vpow.pop %v938
    %v940 = vadd.f32 %v939, 1.0
    %v941 = vrcp.pop %v940
    %v942 = vmul.f32 1.0, %v941
    %v943 = vmul.f32 %v935, %v90
    %v944 = vmul.f32 %v929, %v936
    %v945 = vadd.f32 %v943, %v944
    %v946 = vtanh.pop %v945
    %v947 = vmul.f32 %v942, %v946
    %948 = vst.msk [vmem:[#allocation3] sm:$0xff] %vm230, %v947
    %s949 = scalar_lea.vmem [#allocation2], 8
    %v950 = vld [vmem:[%s949] sm:$0xff]
    %v951 = vld [vmem:[#allocation9] sm:$0xff]
    %v952 = vld [vmem:[#allocation9 + $0x8] sm:$0xff]
    %v953 = vld [vmem:[#allocation9 + $0x10] sm:$0xff]
    %v954 = vld [vmem:[#allocation9 + $0x18] sm:$0xff]
    %v956 = vsel %vm230, %v947, 0
    %958 = vmatprep.subr.mxu0 0.0
    %959 = vmatpush1.msra.mxu0 %v951
    %960 = vmatprep.subr.mxu0 0.0
    %961 = vmatpush1.msra.mxu0 %v952
    %962 = vmatprep.subr.mxu0 0.0
    %963 = vmatpush1.msra.mxu0 %v953
    %964 = vmatprep.subr.mxu0 0.0
    %965 = vmatpush1.msra.mxu0 %v954
    %966 = vmatprep.subr.mxu0 0.0
    %967 = vmatpush1.msra.mxu0 0.0
    %968 = vmatprep.subr.mxu0 0.0
    %969 = vmatpush1.msra.mxu0 0.0
    %970 = vmatprep.subr.mxu0 0.0
    %971 = vmatpush1.msra.mxu0 0.0
    %972 = vmatprep.subr.mxu0 0.0
    %973 = vmatpush1.msra.mxu0 0.0
    %974 = vmatprep.subr.mxu0 0.0
    %975 = vmatpush1.msra.mxu0 0.0
    %976 = vmatprep.subr.mxu0 0.0
    %977 = vmatpush1.msra.mxu0 0.0
    %978 = vmatprep.subr.mxu0 0.0
    %979 = vmatpush1.msra.mxu0 0.0
    %980 = vmatprep.subr.mxu0 0.0
    %981 = vmatpush1.msra.mxu0 0.0
    %982 = vmatprep.subr.mxu0 0.0
    %983 = vmatpush1.msra.mxu0 0.0
    %984 = vmatprep.subr.mxu0 0.0
    %985 = vmatpush1.msra.mxu0 0.0
    %986 = vmatprep.subr.mxu0 0.0
    %987 = vmatpush1.msra.mxu0 0.0
    %988 = vmatprep.subr.mxu0 0.0
    %989 = vmatpush1.msra.mxu0 0.0
    %990 = vmatprep.subr.mxu0 0.0
    %991 = vmatpush1.msra.mxu0 0.0
    %992 = vmatprep.subr.mxu0 0.0
    %993 = vmatpush1.msra.mxu0 0.0
    %994 = vmatprep.subr.mxu0 0.0
    %995 = vmatpush1.msra.mxu0 0.0
    %996 = vmatprep.subr.mxu0 0.0
    %997 = vmatpush1.msra.mxu0 0.0
    %998 = vmatprep.subr.mxu0 0.0
    %999 = vmatpush1.msra.mxu0 0.0
    %1000 = vmatprep.subr.mxu0 0.0
    %1001 = vmatpush1.msra.mxu0 0.0
    %1002 = vmatprep.subr.mxu0 0.0
    %1003 = vmatpush1.msra.mxu0 0.0
    %1004 = vmatprep.subr.mxu0 0.0
    %1005 = vmatpush1.msra.mxu0 0.0
    %1006 = vmatprep.subr.mxu0 0.0
    %1007 = vmatpush1.msra.mxu0 0.0
    %1008 = vmatprep.subr.mxu0 0.0
    %1009 = vmatpush1.msra.mxu0 0.0
    %1010 = vmatprep.subr.mxu0 0.0
    %1011 = vmatpush1.msra.mxu0 0.0
    %1012 = vmatprep.subr.mxu0 0.0
    %1013 = vmatpush1.msra.mxu0 0.0
    %1014 = vmatprep.subr.mxu0 0.0
    %1015 = vmatpush1.msra.mxu0 0.0
    %1016 = vmatprep.subr.mxu0 0.0
    %1017 = vmatpush1.msra.mxu0 0.0
    %1018 = vmatprep.subr.mxu0 0.0
    %1019 = vmatpush1.msra.mxu0 0.0
    %1020 = vmatprep.subr.mxu0 0.0
    %1021 = vmatpush1.msra.mxu0 0.0
    %1022 = vmatprep.mubr.f32.mxu0 0.0
    %1023 = vmatmul.mubr.f32.gmra.mrb[0].mxu0 %v956
    %v1024 = vpop.f32.mrb[0].mxu0
    %v1025 = vadd.f32 0.0, %v1024
    %v1026 = vpop.f32.mrb[0].mxu0
    %1027 = vdwg.mxu0
    %v1028 = vadd.f32 %v950, %v1025
    %s1029 = scalar_lea.vmem [#allocation2], 72
    %v1030 = vld [vmem:[%s1029] sm:$0xff]
    %v1031 = vld [vmem:[%s694] sm:$0xff]
    %v1032 = vld [vmem:[%s694 + $0x8] sm:$0xff]
    %v1033 = vld [vmem:[%s694 + $0x10] sm:$0xff]
    %v1034 = vld [vmem:[%s694 + $0x18] sm:$0xff]
    %1035 = vmatprep.subr.mxu0 0.0
    %1036 = vmatpush1.msra.mxu0 %v1031
    %1037 = vmatprep.subr.mxu0 0.0
    %1038 = vmatpush1.msra.mxu0 %v1032
    %1039 = vmatprep.subr.mxu0 0.0
    %1040 = vmatpush1.msra.mxu0 %v1033
    %1041 = vmatprep.subr.mxu0 0.0
    %1042 = vmatpush1.msra.mxu0 %v1034
    %1043 = vmatprep.subr.mxu0 0.0
    %1044 = vmatpush1.msra.mxu0 0.0
    %1045 = vmatprep.subr.mxu0 0.0
    %1046 = vmatpush1.msra.mxu0 0.0
    %1047 = vmatprep.subr.mxu0 0.0
    %1048 = vmatpush1.msra.mxu0 0.0
    %1049 = vmatprep.subr.mxu0 0.0
    %1050 = vmatpush1.msra.mxu0 0.0
    %1051 = vmatprep.subr.mxu0 0.0
    %1052 = vmatpush1.msra.mxu0 0.0
    %1053 = vmatprep.subr.mxu0 0.0
    %1054 = vmatpush1.msra.mxu0 0.0
    %1055 = vmatprep.subr.mxu0 0.0
    %1056 = vmatpush1.msra.mxu0 0.0
    %1057 = vmatprep.subr.mxu0 0.0
    %1058 = vmatpush1.msra.mxu0 0.0
    %1059 = vmatprep.subr.mxu0 0.0
    %1060 = vmatpush1.msra.mxu0 0.0
    %1061 = vmatprep.subr.mxu0 0.0
    %1062 = vmatpush1.msra.mxu0 0.0
    %1063 = vmatprep.subr.mxu0 0.0
    %1064 = vmatpush1.msra.mxu0 0.0
    %1065 = vmatprep.subr.mxu0 0.0
    %1066 = vmatpush1.msra.mxu0 0.0
    %1067 = vmatprep.subr.mxu0 0.0
    %1068 = vmatpush1.msra.mxu0 0.0
    %1069 = vmatprep.subr.mxu0 0.0
    %1070 = vmatpush1.msra.mxu0 0.0
    %1071 = vmatprep.subr.mxu0 0.0
    %1072 = vmatpush1.msra.mxu0 0.0
    %1073 = vmatprep.subr.mxu0 0.0
    %1074 = vmatpush1.msra.mxu0 0.0
    %1075 = vmatprep.subr.mxu0 0.0
    %1076 = vmatpush1.msra.mxu0 0.0
    %1077 = vmatprep.subr.mxu0 0.0
    %1078 = vmatpush1.msra.mxu0 0.0
    %1079 = vmatprep.subr.mxu0 0.0
    %1080 = vmatpush1.msra.mxu0 0.0
    %1081 = vmatprep.subr.mxu0 0.0
    %1082 = vmatpush1.msra.mxu0 0.0
    %1083 = vmatprep.subr.mxu0 0.0
    %1084 = vmatpush1.msra.mxu0 0.0
    %1085 = vmatprep.subr.mxu0 0.0
    %1086 = vmatpush1.msra.mxu0 0.0
    %1087 = vmatprep.subr.mxu0 0.0
    %1088 = vmatpush1.msra.mxu0 0.0
    %1089 = vmatprep.subr.mxu0 0.0
    %1090 = vmatpush1.msra.mxu0 0.0
    %1091 = vmatprep.subr.mxu0 0.0
    %1092 = vmatpush1.msra.mxu0 0.0
    %1093 = vmatprep.subr.mxu0 0.0
    %1094 = vmatpush1.msra.mxu0 0.0
    %1095 = vmatprep.subr.mxu0 0.0
    %1096 = vmatpush1.msra.mxu0 0.0
    %1097 = vmatprep.subr.mxu0 0.0
    %1098 = vmatpush1.msra.mxu0 0.0
    %1099 = vmatprep.mubr.f32.mxu0 0.0
    %1100 = vmatmul.mubr.f32.gmra.mrb[0].mxu0 %v956
    %v1101 = vpop.f32.mrb[0].mxu0
    %v1102 = vadd.f32 0.0, %v1101
    %v1103 = vpop.f32.mrb[0].mxu0
    %1104 = vdwg.mxu0
    %v1105 = vadd.f32 %v1030, %v1102
    %s1106 = scalar_lea.vmem [#allocation2], 136
    %v1107 = vld [vmem:[%s1106] sm:$0xff]
    %v1108 = vld [vmem:[%s771] sm:$0xff]
    %v1109 = vld [vmem:[%s771 + $0x8] sm:$0xff]
    %v1110 = vld [vmem:[%s771 + $0x10] sm:$0xff]
    %v1111 = vld [vmem:[%s771 + $0x18] sm:$0xff]
    %1112 = vmatprep.subr.mxu0 0.0
    %1113 = vmatpush1.msra.mxu0 %v1108
    %1114 = vmatprep.subr.mxu0 0.0
    %1115 = vmatpush1.msra.mxu0 %v1109
    %1116 = vmatprep.subr.mxu0 0.0
    %1117 = vmatpush1.msra.mxu0 %v1110
    %1118 = vmatprep.subr.mxu0 0.0
    %1119 = vmatpush1.msra.mxu0 %v1111
    %1120 = vmatprep.subr.mxu0 0.0
    %1121 = vmatpush1.msra.mxu0 0.0
    %1122 = vmatprep.subr.mxu0 0.0
    %1123 = vmatpush1.msra.mxu0 0.0
    %1124 = vmatprep.subr.mxu0 0.0
    %1125 = vmatpush1.msra.mxu0 0.0
    %1126 = vmatprep.subr.mxu0 0.0
    %1127 = vmatpush1.msra.mxu0 0.0
    %1128 = vmatprep.subr.mxu0 0.0
    %1129 = vmatpush1.msra.mxu0 0.0
    %1130 = vmatprep.subr.mxu0 0.0
    %1131 = vmatpush1.msra.mxu0 0.0
    %1132 = vmatprep.subr.mxu0 0.0
    %1133 = vmatpush1.msra.mxu0 0.0
    %1134 = vmatprep.subr.mxu0 0.0
    %1135 = vmatpush1.msra.mxu0 0.0
    %1136 = vmatprep.subr.mxu0 0.0
    %1137 = vmatpush1.msra.mxu0 0.0
    %1138 = vmatprep.subr.mxu0 0.0
    %1139 = vmatpush1.msra.mxu0 0.0
    %1140 = vmatprep.subr.mxu0 0.0
    %1141 = vmatpush1.msra.mxu0 0.0
    %1142 = vmatprep.subr.mxu0 0.0
    %1143 = vmatpush1.msra.mxu0 0.0
    %1144 = vmatprep.subr.mxu0 0.0
    %1145 = vmatpush1.msra.mxu0 0.0
    %1146 = vmatprep.subr.mxu0 0.0
    %1147 = vmatpush1.msra.mxu0 0.0
    %1148 = vmatprep.subr.mxu0 0.0
    %1149 = vmatpush1.msra.mxu0 0.0
    %1150 = vmatprep.subr.mxu0 0.0
    %1151 = vmatpush1.msra.mxu0 0.0
    %1152 = vmatprep.subr.mxu0 0.0
    %1153 = vmatpush1.msra.mxu0 0.0
    %1154 = vmatprep.subr.mxu0 0.0
    %1155 = vmatpush1.msra.mxu0 0.0
    %1156 = vmatprep.subr.mxu0 0.0
    %1157 = vmatpush1.msra.mxu0 0.0
    %1158 = vmatprep.subr.mxu0 0.0
    %1159 = vmatpush1.msra.mxu0 0.0
    %1160 = vmatprep.subr.mxu0 0.0
    %1161 = vmatpush1.msra.mxu0 0.0
    %1162 = vmatprep.subr.mxu0 0.0
    %1163 = vmatpush1.msra.mxu0 0.0
    %1164 = vmatprep.subr.mxu0 0.0
    %1165 = vmatpush1.msra.mxu0 0.0
    %1166 = vmatprep.subr.mxu0 0.0
    %1167 = vmatpush1.msra.mxu0 0.0
    %1168 = vmatprep.subr.mxu0 0.0
    %1169 = vmatpush1.msra.mxu0 0.0
    %1170 = vmatprep.subr.mxu0 0.0
    %1171 = vmatpush1.msra.mxu0 0.0
    %1172 = vmatprep.subr.mxu0 0.0
    %1173 = vmatpush1.msra.mxu0 0.0
    %1174 = vmatprep.subr.mxu0 0.0
    %1175 = vmatpush1.msra.mxu0 0.0
    %1176 = vmatprep.mubr.f32.mxu0 0.0
    %1177 = vmatmul.mubr.f32.gmra.mrb[0].mxu0 %v956
    %v1178 = vpop.f32.mrb[0].mxu0
    %v1179 = vadd.f32 0.0, %v1178
    %v1180 = vpop.f32.mrb[0].mxu0
    %1181 = vdwg.mxu0
    %v1182 = vadd.f32 %v1107, %v1179
    %s1183 = scalar_lea.vmem [#allocation2], 200
    %v1184 = vld [vmem:[%s1183] sm:$0xff]
    %v1185 = vld [vmem:[%s848] sm:$0xff]
    %v1186 = vld [vmem:[%s848 + $0x8] sm:$0xff]
    %v1187 = vld [vmem:[%s848 + $0x10] sm:$0xff]
    %v1188 = vld [vmem:[%s848 + $0x18] sm:$0xff]
    %1189 = vmatprep.subr.mxu0 0.0
    %1190 = vmatpush1.msra.mxu0 %v1185
    %1191 = vmatprep.subr.mxu0 0.0
    %1192 = vmatpush1.msra.mxu0 %v1186
    %1193 = vmatprep.subr.mxu0 0.0
    %1194 = vmatpush1.msra.mxu0 %v1187
    %1195 = vmatprep.subr.mxu0 0.0
    %1196 = vmatpush1.msra.mxu0 %v1188
    %1197 = vmatprep.subr.mxu0 0.0
    %1198 = vmatpush1.msra.mxu0 0.0
    %1199 = vmatprep.subr.mxu0 0.0
    %1200 = vmatpush1.msra.mxu0 0.0
    %1201 = vmatprep.subr.mxu0 0.0
    %1202 = vmatpush1.msra.mxu0 0.0
    %1203 = vmatprep.subr.mxu0 0.0
    %1204 = vmatpush1.msra.mxu0 0.0
    %1205 = vmatprep.subr.mxu0 0.0
    %1206 = vmatpush1.msra.mxu0 0.0
    %1207 = vmatprep.subr.mxu0 0.0
    %1208 = vmatpush1.msra.mxu0 0.0
    %1209 = vmatprep.subr.mxu0 0.0
    %1210 = vmatpush1.msra.mxu0 0.0
    %1211 = vmatprep.subr.mxu0 0.0
    %1212 = vmatpush1.msra.mxu0 0.0
    %1213 = vmatprep.subr.mxu0 0.0
    %1214 = vmatpush1.msra.mxu0 0.0
    %1215 = vmatprep.subr.mxu0 0.0
    %1216 = vmatpush1.msra.mxu0 0.0
    %1217 = vmatprep.subr.mxu0 0.0
    %1218 = vmatpush1.msra.mxu0 0.0
    %1219 = vmatprep.subr.mxu0 0.0
    %1220 = vmatpush1.msra.mxu0 0.0
    %1221 = vmatprep.subr.mxu0 0.0
    %1222 = vmatpush1.msra.mxu0 0.0
    %1223 = vmatprep.subr.mxu0 0.0
    %1224 = vmatpush1.msra.mxu0 0.0
    %1225 = vmatprep.subr.mxu0 0.0
    %1226 = vmatpush1.msra.mxu0 0.0
    %1227 = vmatprep.subr.mxu0 0.0
    %1228 = vmatpush1.msra.mxu0 0.0
    %1229 = vmatprep.subr.mxu0 0.0
    %1230 = vmatpush1.msra.mxu0 0.0
    %1231 = vmatprep.subr.mxu0 0.0
    %1232 = vmatpush1.msra.mxu0 0.0
    %1233 = vmatprep.subr.mxu0 0.0
    %1234 = vmatpush1.msra.mxu0 0.0
    %1235 = vmatprep.subr.mxu0 0.0
    %1236 = vmatpush1.msra.mxu0 0.0
    %1237 = vmatprep.subr.mxu0 0.0
    %1238 = vmatpush1.msra.mxu0 0.0
    %1239 = vmatprep.subr.mxu0 0.0
    %1240 = vmatpush1.msra.mxu0 0.0
    %1241 = vmatprep.subr.mxu0 0.0
    %1242 = vmatpush1.msra.mxu0 0.0
    %1243 = vmatprep.subr.mxu0 0.0
    %1244 = vmatpush1.msra.mxu0 0.0
    %1245 = vmatprep.subr.mxu0 0.0
    %1246 = vmatpush1.msra.mxu0 0.0
    %1247 = vmatprep.subr.mxu0 0.0
    %1248 = vmatpush1.msra.mxu0 0.0
    %1249 = vmatprep.subr.mxu0 0.0
    %1250 = vmatpush1.msra.mxu0 0.0
    %1251 = vmatprep.subr.mxu0 0.0
    %1252 = vmatpush1.msra.mxu0 0.0
    %1253 = vmatprep.mubr.f32.mxu0 0.0
    %1254 = vmatmul.mubr.f32.gmra.mrb[0].mxu0 %v956
    %v1255 = vpop.f32.mrb[0].mxu0
    %v1256 = vadd.f32 0.0, %v1255
    %v1257 = vpop.f32.mrb[0].mxu0
    %1258 = vdwg.mxu0
    %v1259 = vadd.f32 %v1184, %v1256
    %v1260 = vxor.u32 %v1028, 2147483648
    %v1261 = vmul.f32 %v1260, 1.442695
    %v1262 = vpow.pop %v1261
    %v1263 = vadd.f32 %v1262, 1.0
    %v1264 = vrcp.pop %v1263
    %v1265 = vmul.f32 1.0, %v1264
    %v1266 = vxor.u32 %v1105, 2147483648
    %v1267 = vmul.f32 %v1266, 1.442695
    %v1268 = vpow.pop %v1267
    %v1269 = vadd.f32 %v1268, 1.0
    %v1270 = vrcp.pop %v1269
    %v1271 = vmul.f32 1.0, %v1270
    %v1272 = vtanh.pop %v1182
    %v1273 = vxor.u32 %v1259, 2147483648
    %v1274 = vmul.f32 %v1273, 1.442695
    %v1275 = vpow.pop %v1274
    %v1276 = vadd.f32 %v1275, 1.0
    %v1277 = vrcp.pop %v1276
    %v1278 = vmul.f32 1.0, %v1277
    %v1279 = vmul.f32 %v1271, %v945
    %v1280 = vmul.f32 %v1265, %v1272
    %v1281 = vadd.f32 %v1279, %v1280
    %v1282 = vtanh.pop %v1281
    %v1283 = vmul.f32 %v1278, %v1282
    %s1284 = scalar_lea.vmem [#allocation3], 8
    %1285 = vst.msk [vmem:[%s1284] sm:$0xff] %vm230, %v1283
    %s1286 = scalar_lea.vmem [#allocation2], 16
    %v1287 = vld [vmem:[%s1286] sm:$0xff]
    %v1288 = vld [vmem:[#allocation9] sm:$0xff]
    %v1289 = vld [vmem:[#allocation9 + $0x8] sm:$0xff]
    %v1290 = vld [vmem:[#allocation9 + $0x10] sm:$0xff]
    %v1291 = vld [vmem:[#allocation9 + $0x18] sm:$0xff]
    %v1293 = vsel %vm230, %v1283, 0
    %1295 = vmatprep.subr.mxu0 0.0
    %1296 = vmatpush1.msra.mxu0 %v1288
    %1297 = vmatprep.subr.mxu0 0.0
    %1298 = vmatpush1.msra.mxu0 %v1289
    %1299 = vmatprep.subr.mxu0 0.0
    %1300 = vmatpush1.msra.mxu0 %v1290
    %1301 = vmatprep.subr.mxu0 0.0
    %1302 = vmatpush1.msra.mxu0 %v1291
    %1303 = vmatprep.subr.mxu0 0.0
    %1304 = vmatpush1.msra.mxu0 0.0
    %1305 = vmatprep.subr.mxu0 0.0
    %1306 = vmatpush1.msra.mxu0 0.0
    %1307 = vmatprep.subr.mxu0 0.0
    %1308 = vmatpush1.msra.mxu0 0.0
    %1309 = vmatprep.subr.mxu0 0.0
    %1310 = vmatpush1.msra.mxu0 0.0
    %1311 = vmatprep.subr.mxu0 0.0
    %1312 = vmatpush1.msra.mxu0 0.0
    %1313 = vmatprep.subr.mxu0 0.0
    %1314 = vmatpush1.msra.mxu0 0.0
    %1315 = vmatprep.subr.mxu0 0.0
    %1316 = vmatpush1.msra.mxu0 0.0
    %1317 = vmatprep.subr.mxu0 0.0
    %1318 = vmatpush1.msra.mxu0 0.0
    %1319 = vmatprep.subr.mxu0 0.0
    %1320 = vmatpush1.msra.mxu0 0.0
    %1321 = vmatprep.subr.mxu0 0.0
    %1322 = vmatpush1.msra.mxu0 0.0
    %1323 = vmatprep.subr.mxu0 0.0
    %1324 = vmatpush1.msra.mxu0 0.0
    %1325 = vmatprep.subr.mxu0 0.0
    %1326 = vmatpush1.msra.mxu0 0.0
    %1327 = vmatprep.subr.mxu0 0.0
    %1328 = vmatpush1.msra.mxu0 0.0
    %1329 = vmatprep.subr.mxu0 0.0
    %1330 = vmatpush1.msra.mxu0 0.0
    %1331 = vmatprep.subr.mxu0 0.0
    %1332 = vmatpush1.msra.mxu0 0.0
    %1333 = vmatprep.subr.mxu0 0.0
    %1334 = vmatpush1.msra.mxu0 0.0
    %1335 = vmatprep.subr.mxu0 0.0
    %1336 = vmatpush1.msra.mxu0 0.0
    %1337 = vmatprep.subr.mxu0 0.0
    %1338 = vmatpush1.msra.mxu0 0.0
    %1339 = vmatprep.subr.mxu0 0.0
    %1340 = vmatpush1.msra.mxu0 0.0
    %1341 = vmatprep.subr.mxu0 0.0
    %1342 = vmatpush1.msra.mxu0 0.0
    %1343 = vmatprep.subr.mxu0 0.0
    %1344 = vmatpush1.msra.mxu0 0.0
    %1345 = vmatprep.subr.mxu0 0.0
    %1346 = vmatpush1.msra.mxu0 0.0
    %1347 = vmatprep.subr.mxu0 0.0
    %1348 = vmatpush1.msra.mxu0 0.0
    %1349 = vmatprep.subr.mxu0 0.0
    %1350 = vmatpush1.msra.mxu0 0.0
    %1351 = vmatprep.subr.mxu0 0.0
    %1352 = vmatpush1.msra.mxu0 0.0
    %1353 = vmatprep.subr.mxu0 0.0
    %1354 = vmatpush1.msra.mxu0 0.0
    %1355 = vmatprep.subr.mxu0 0.0
    %1356 = vmatpush1.msra.mxu0 0.0
    %1357 = vmatprep.subr.mxu0 0.0
    %1358 = vmatpush1.msra.mxu0 0.0
    %1359 = vmatprep.mubr.f32.mxu0 0.0
    %1360 = vmatmul.mubr.f32.gmra.mrb[0].mxu0 %v1293
    %v1361 = vpop.f32.mrb[0].mxu0
    %v1362 = vadd.f32 0.0, %v1361
    %v1363 = vpop.f32.mrb[0].mxu0
    %1364 = vdwg.mxu0
    %v1365 = vadd.f32 %v1287, %v1362
    %s1366 = scalar_lea.vmem [#allocation2], 80
    %v1367 = vld [vmem:[%s1366] sm:$0xff]
    %v1368 = vld [vmem:[%s694] sm:$0xff]
    %v1369 = vld [vmem:[%s694 + $0x8] sm:$0xff]
    %v1370 = vld [vmem:[%s694 + $0x10] sm:$0xff]
    %v1371 = vld [vmem:[%s694 + $0x18] sm:$0xff]
    %1372 = vmatprep.subr.mxu0 0.0
    %1373 = vmatpush1.msra.mxu0 %v1368
    %1374 = vmatprep.subr.mxu0 0.0
    %1375 = vmatpush1.msra.mxu0 %v1369
    %1376 = vmatprep.subr.mxu0 0.0
    %1377 = vmatpush1.msra.mxu0 %v1370
    %1378 = vmatprep.subr.mxu0 0.0
    %1379 = vmatpush1.msra.mxu0 %v1371
    %1380 = vmatprep.subr.mxu0 0.0
    %1381 = vmatpush1.msra.mxu0 0.0
    %1382 = vmatprep.subr.mxu0 0.0
    %1383 = vmatpush1.msra.mxu0 0.0
    %1384 = vmatprep.subr.mxu0 0.0
    %1385 = vmatpush1.msra.mxu0 0.0
    %1386 = vmatprep.subr.mxu0 0.0
    %1387 = vmatpush1.msra.mxu0 0.0
    %1388 = vmatprep.subr.mxu0 0.0
    %1389 = vmatpush1.msra.mxu0 0.0
    %1390 = vmatprep.subr.mxu0 0.0
    %1391 = vmatpush1.msra.mxu0 0.0
    %1392 = vmatprep.subr.mxu0 0.0
    %1393 = vmatpush1.msra.mxu0 0.0
    %1394 = vmatprep.subr.mxu0 0.0
    %1395 = vmatpush1.msra.mxu0 0.0
    %1396 = vmatprep.subr.mxu0 0.0
    %1397 = vmatpush1.msra.mxu0 0.0
    %1398 = vmatprep.subr.mxu0 0.0
    %1399 = vmatpush1.msra.mxu0 0.0
    %1400 = vmatprep.subr.mxu0 0.0
    %1401 = vmatpush1.msra.mxu0 0.0
    %1402 = vmatprep.subr.mxu0 0.0
    %1403 = vmatpush1.msra.mxu0 0.0
    %1404 = vmatprep.subr.mxu0 0.0
    %1405 = vmatpush1.msra.mxu0 0.0
    %1406 = vmatprep.subr.mxu0 0.0
    %1407 = vmatpush1.msra.mxu0 0.0
    %1408 = vmatprep.subr.mxu0 0.0
    %1409 = vmatpush1.msra.mxu0 0.0
    %1410 = vmatprep.subr.mxu0 0.0
    %1411 = vmatpush1.msra.mxu0 0.0
    %1412 = vmatprep.subr.mxu0 0.0
    %1413 = vmatpush1.msra.mxu0 0.0
    %1414 = vmatprep.subr.mxu0 0.0
    %1415 = vmatpush1.msra.mxu0 0.0
    %1416 = vmatprep.subr.mxu0 0.0
    %1417 = vmatpush1.msra.mxu0 0.0
    %1418 = vmatprep.subr.mxu0 0.0
    %1419 = vmatpush1.msra.mxu0 0.0
    %1420 = vmatprep.subr.mxu0 0.0
    %1421 = vmatpush1.msra.mxu0 0.0
    %1422 = vmatprep.subr.mxu0 0.0
    %1423 = vmatpush1.msra.mxu0 0.0
    %1424 = vmatprep.subr.mxu0 0.0
    %1425 = vmatpush1.msra.mxu0 0.0
    %1426 = vmatprep.subr.mxu0 0.0
    %1427 = vmatpush1.msra.mxu0 0.0
    %1428 = vmatprep.subr.mxu0 0.0
    %1429 = vmatpush1.msra.mxu0 0.0
    %1430 = vmatprep.subr.mxu0 0.0
    %1431 = vmatpush1.msra.mxu0 0.0
    %1432 = vmatprep.subr.mxu0 0.0
    %1433 = vmatpush1.msra.mxu0 0.0
    %1434 = vmatprep.subr.mxu0 0.0
    %1435 = vmatpush1.msra.mxu0 0.0
    %1436 = vmatprep.mubr.f32.mxu0 0.0
    %1437 = vmatmul.mubr.f32.gmra.mrb[0].mxu0 %v1293
    %v1438 = vpop.f32.mrb[0].mxu0
    %v1439 = vadd.f32 0.0, %v1438
    %v1440 = vpop.f32.mrb[0].mxu0
    %1441 = vdwg.mxu0
    %v1442 = vadd.f32 %v1367, %v1439
    %s1443 = scalar_lea.vmem [#allocation2], 144
    %v1444 = vld [vmem:[%s1443] sm:$0xff]
    %v1445 = vld [vmem:[%s771] sm:$0xff]
    %v1446 = vld [vmem:[%s771 + $0x8] sm:$0xff]
    %v1447 = vld [vmem:[%s771 + $0x10] sm:$0xff]
    %v1448 = vld [vmem:[%s771 + $0x18] sm:$0xff]
    %1449 = vmatprep.subr.mxu0 0.0
    %1450 = vmatpush1.msra.mxu0 %v1445
    %1451 = vmatprep.subr.mxu0 0.0
    %1452 = vmatpush1.msra.mxu0 %v1446
    %1453 = vmatprep.subr.mxu0 0.0
    %1454 = vmatpush1.msra.mxu0 %v1447
    %1455 = vmatprep.subr.mxu0 0.0
    %1456 = vmatpush1.msra.mxu0 %v1448
    %1457 = vmatprep.subr.mxu0 0.0
    %1458 = vmatpush1.msra.mxu0 0.0
    %1459 = vmatprep.subr.mxu0 0.0
    %1460 = vmatpush1.msra.mxu0 0.0
    %1461 = vmatprep.subr.mxu0 0.0
    %1462 = vmatpush1.msra.mxu0 0.0
    %1463 = vmatprep.subr.mxu0 0.0
    %1464 = vmatpush1.msra.mxu0 0.0
    %1465 = vmatprep.subr.mxu0 0.0
    %1466 = vmatpush1.msra.mxu0 0.0
    %1467 = vmatprep.subr.mxu0 0.0
    %1468 = vmatpush1.msra.mxu0 0.0
    %1469 = vmatprep.subr.mxu0 0.0
    %1470 = vmatpush1.msra.mxu0 0.0
    %1471 = vmatprep.subr.mxu0 0.0
    %1472 = vmatpush1.msra.mxu0 0.0
    %1473 = vmatprep.subr.mxu0 0.0
    %1474 = vmatpush1.msra.mxu0 0.0
    %1475 = vmatprep.subr.mxu0 0.0
    %1476 = vmatpush1.msra.mxu0 0.0
    %1477 = vmatprep.subr.mxu0 0.0
    %1478 = vmatpush1.msra.mxu0 0.0
    %1479 = vmatprep.subr.mxu0 0.0
    %1480 = vmatpush1.msra.mxu0 0.0
    %1481 = vmatprep.subr.mxu0 0.0
    %1482 = vmatpush1.msra.mxu0 0.0
    %1483 = vmatprep.subr.mxu0 0.0
    %1484 = vmatpush1.msra.mxu0 0.0
    %1485 = vmatprep.subr.mxu0 0.0
    %1486 = vmatpush1.msra.mxu0 0.0
    %1487 = vmatprep.subr.mxu0 0.0
    %1488 = vmatpush1.msra.mxu0 0.0
    %1489 = vmatprep.subr.mxu0 0.0
    %1490 = vmatpush1.msra.mxu0 0.0
    %1491 = vmatprep.subr.mxu0 0.0
    %1492 = vmatpush1.msra.mxu0 0.0
    %1493 = vmatprep.subr.mxu0 0.0
    %1494 = vmatpush1.msra.mxu0 0.0
    %1495 = vmatprep.subr.mxu0 0.0
    %1496 = vmatpush1.msra.mxu0 0.0
    %1497 = vmatprep.subr.mxu0 0.0
    %1498 = vmatpush1.msra.mxu0 0.0
    %1499 = vmatprep.subr.mxu0 0.0
    %1500 = vmatpush1.msra.mxu0 0.0
    %1501 = vmatprep.subr.mxu0 0.0
    %1502 = vmatpush1.msra.mxu0 0.0
    %1503 = vmatprep.subr.mxu0 0.0
    %1504 = vmatpush1.msra.mxu0 0.0
    %1505 = vmatprep.subr.mxu0 0.0
    %1506 = vmatpush1.msra.mxu0 0.0
    %1507 = vmatprep.subr.mxu0 0.0
    %1508 = vmatpush1.msra.mxu0 0.0
    %1509 = vmatprep.subr.mxu0 0.0
    %1510 = vmatpush1.msra.mxu0 0.0
    %1511 = vmatprep.subr.mxu0 0.0
    %1512 = vmatpush1.msra.mxu0 0.0
    %1513 = vmatprep.mubr.f32.mxu0 0.0
    %1514 = vmatmul.mubr.f32.gmra.mrb[0].mxu0 %v1293
    %v1515 = vpop.f32.mrb[0].mxu0
    %v1516 = vadd.f32 0.0, %v1515
    %v1517 = vpop.f32.mrb[0].mxu0
    %1518 = vdwg.mxu0
    %v1519 = vadd.f32 %v1444, %v1516
    %s1520 = scalar_lea.vmem [#allocation2], 208
    %v1521 = vld [vmem:[%s1520] sm:$0xff]
    %v1522 = vld [vmem:[%s848] sm:$0xff]
    %v1523 = vld [vmem:[%s848 + $0x8] sm:$0xff]
    %v1524 = vld [vmem:[%s848 + $0x10] sm:$0xff]
    %v1525 = vld [vmem:[%s848 + $0x18] sm:$0xff]
    %1526 = vmatprep.subr.mxu0 0.0
    %1527 = vmatpush1.msra.mxu0 %v1522
    %1528 = vmatprep.subr.mxu0 0.0
    %1529 = vmatpush1.msra.mxu0 %v1523
    %1530 = vmatprep.subr.mxu0 0.0
    %1531 = vmatpush1.msra.mxu0 %v1524
    %1532 = vmatprep.subr.mxu0 0.0
    %1533 = vmatpush1.msra.mxu0 %v1525
    %1534 = vmatprep.subr.mxu0 0.0
    %1535 = vmatpush1.msra.mxu0 0.0
    %1536 = vmatprep.subr.mxu0 0.0
    %1537 = vmatpush1.msra.mxu0 0.0
    %1538 = vmatprep.subr.mxu0 0.0
    %1539 = vmatpush1.msra.mxu0 0.0
    %1540 = vmatprep.subr.mxu0 0.0
    %1541 = vmatpush1.msra.mxu0 0.0
    %1542 = vmatprep.subr.mxu0 0.0
    %1543 = vmatpush1.msra.mxu0 0.0
    %1544 = vmatprep.subr.mxu0 0.0
    %1545 = vmatpush1.msra.mxu0 0.0
    %1546 = vmatprep.subr.mxu0 0.0
    %1547 = vmatpush1.msra.mxu0 0.0
    %1548 = vmatprep.subr.mxu0 0.0
    %1549 = vmatpush1.msra.mxu0 0.0
    %1550 = vmatprep.subr.mxu0 0.0
    %1551 = vmatpush1.msra.mxu0 0.0
    %1552 = vmatprep.subr.mxu0 0.0
    %1553 = vmatpush1.msra.mxu0 0.0
    %1554 = vmatprep.subr.mxu0 0.0
    %1555 = vmatpush1.msra.mxu0 0.0
    %1556 = vmatprep.subr.mxu0 0.0
    %1557 = vmatpush1.msra.mxu0 0.0
    %1558 = vmatprep.subr.mxu0 0.0
    %1559 = vmatpush1.msra.mxu0 0.0
    %1560 = vmatprep.subr.mxu0 0.0
    %1561 = vmatpush1.msra.mxu0 0.0
    %1562 = vmatprep.subr.mxu0 0.0
    %1563 = vmatpush1.msra.mxu0 0.0
    %1564 = vmatprep.subr.mxu0 0.0
    %1565 = vmatpush1.msra.mxu0 0.0
    %1566 = vmatprep.subr.mxu0 0.0
    %1567 = vmatpush1.msra.mxu0 0.0
    %1568 = vmatprep.subr.mxu0 0.0
    %1569 = vmatpush1.msra.mxu0 0.0
    %1570 = vmatprep.subr.mxu0 0.0
    %1571 = vmatpush1.msra.mxu0 0.0
    %1572 = vmatprep.subr.mxu0 0.0
    %1573 = vmatpush1.msra.mxu0 0.0
    %1574 = vmatprep.subr.mxu0 0.0
    %1575 = vmatpush1.msra.mxu0 0.0
    %1576 = vmatprep.subr.mxu0 0.0
    %1577 = vmatpush1.msra.mxu0 0.0
    %1578 = vmatprep.subr.mxu0 0.0
    %1579 = vmatpush1.msra.mxu0 0.0
    %1580 = vmatprep.subr.mxu0 0.0
    %1581 = vmatpush1.msra.mxu0 0.0
    %1582 = vmatprep.subr.mxu0 0.0
    %1583 = vmatpush1.msra.mxu0 0.0
    %1584 = vmatprep.subr.mxu0 0.0
    %1585 = vmatpush1.msra.mxu0 0.0
    %1586 = vmatprep.subr.mxu0 0.0
    %1587 = vmatpush1.msra.mxu0 0.0
    %1588 = vmatprep.subr.mxu0 0.0
    %1589 = vmatpush1.msra.mxu0 0.0
    %1590 = vmatprep.mubr.f32.mxu0 0.0
    %1591 = vmatmul.mubr.f32.gmra.mrb[0].mxu0 %v1293
    %v1592 = vpop.f32.mrb[0].mxu0
    %v1593 = vadd.f32 0.0, %v1592
    %v1594 = vpop.f32.mrb[0].mxu0
    %1595 = vdwg.mxu0
    %v1596 = vadd.f32 %v1521, %v1593
    %v1597 = vxor.u32 %v1365, 2147483648
    %v1598 = vmul.f32 %v1597, 1.442695
    %v1599 = vpow.pop %v1598
    %v1600 = vadd.f32 %v1599, 1.0
    %v1601 = vrcp.pop %v1600
    %v1602 = vmul.f32 1.0, %v1601
    %v1603 = vxor.u32 %v1442, 2147483648
    %v1604 = vmul.f32 %v1603, 1.442695
    %v1605 = vpow.pop %v1604
    %v1606 = vadd.f32 %v1605, 1.0
    %v1607 = vrcp.pop %v1606
    %v1608 = vmul.f32 1.0, %v1607
    %v1609 = vtanh.pop %v1519
    %v1610 = vxor.u32 %v1596, 2147483648
    %v1611 = vmul.f32 %v1610, 1.442695
    %v1612 = vpow.pop %v1611
    %v1613 = vadd.f32 %v1612, 1.0
    %v1614 = vrcp.pop %v1613
    %v1615 = vmul.f32 1.0, %v1614
    %v1616 = vmul.f32 %v1608, %v1281
    %v1617 = vmul.f32 %v1602, %v1609
    %v1618 = vadd.f32 %v1616, %v1617
    %v1619 = vtanh.pop %v1618
    %v1620 = vmul.f32 %v1615, %v1619
    %s1621 = scalar_lea.vmem [#allocation3], 16
    %1622 = vst.msk [vmem:[%s1621] sm:$0xff] %vm230, %v1620
    %s1623 = scalar_lea.vmem [#allocation2], 24
    %v1624 = vld [vmem:[%s1623] sm:$0xff]
    %v1625 = vld [vmem:[#allocation9] sm:$0xff]
    %v1626 = vld [vmem:[#allocation9 + $0x8] sm:$0xff]
    %v1627 = vld [vmem:[#allocation9 + $0x10] sm:$0xff]
    %v1628 = vld [vmem:[#allocation9 + $0x18] sm:$0xff]
    %v1630 = vsel %vm230, %v1620, 0
    %1632 = vmatprep.subr.mxu0 0.0
    %1633 = vmatpush1.msra.mxu0 %v1625
    %1634 = vmatprep.subr.mxu0 0.0
    %1635 = vmatpush1.msra.mxu0 %v1626
    %1636 = vmatprep.subr.mxu0 0.0
    %1637 = vmatpush1.msra.mxu0 %v1627
    %1638 = vmatprep.subr.mxu0 0.0
    %1639 = vmatpush1.msra.mxu0 %v1628
    %1640 = vmatprep.subr.mxu0 0.0
    %1641 = vmatpush1.msra.mxu0 0.0
    %1642 = vmatprep.subr.mxu0 0.0
    %1643 = vmatpush1.msra.mxu0 0.0
    %1644 = vmatprep.subr.mxu0 0.0
    %1645 = vmatpush1.msra.mxu0 0.0
    %1646 = vmatprep.subr.mxu0 0.0
    %1647 = vmatpush1.msra.mxu0 0.0
    %1648 = vmatprep.subr.mxu0 0.0
    %1649 = vmatpush1.msra.mxu0 0.0
    %1650 = vmatprep.subr.mxu0 0.0
    %1651 = vmatpush1.msra.mxu0 0.0
    %1652 = vmatprep.subr.mxu0 0.0
    %1653 = vmatpush1.msra.mxu0 0.0
    %1654 = vmatprep.subr.mxu0 0.0
    %1655 = vmatpush1.msra.mxu0 0.0
    %1656 = vmatprep.subr.mxu0 0.0
    %1657 = vmatpush1.msra.mxu0 0.0
    %1658 = vmatprep.subr.mxu0 0.0
    %1659 = vmatpush1.msra.mxu0 0.0
    %1660 = vmatprep.subr.mxu0 0.0
    %1661 = vmatpush1.msra.mxu0 0.0
    %1662 = vmatprep.subr.mxu0 0.0
    %1663 = vmatpush1.msra.mxu0 0.0
    %1664 = vmatprep.subr.mxu0 0.0
    %1665 = vmatpush1.msra.mxu0 0.0
    %1666 = vmatprep.subr.mxu0 0.0
    %1667 = vmatpush1.msra.mxu0 0.0
    %1668 = vmatprep.subr.mxu0 0.0
    %1669 = vmatpush1.msra.mxu0 0.0
    %1670 = vmatprep.subr.mxu0 0.0
    %1671 = vmatpush1.msra.mxu0 0.0
    %1672 = vmatprep.subr.mxu0 0.0
    %1673 = vmatpush1.msra.mxu0 0.0
    %1674 = vmatprep.subr.mxu0 0.0
    %1675 = vmatpush1.msra.mxu0 0.0
    %1676 = vmatprep.subr.mxu0 0.0
    %1677 = vmatpush1.msra.mxu0 0.0
    %1678 = vmatprep.subr.mxu0 0.0
    %1679 = vmatpush1.msra.mxu0 0.0
    %1680 = vmatprep.subr.mxu0 0.0
    %1681 = vmatpush1.msra.mxu0 0.0
    %1682 = vmatprep.subr.mxu0 0.0
    %1683 = vmatpush1.msra.mxu0 0.0
    %1684 = vmatprep.subr.mxu0 0.0
    %1685 = vmatpush1.msra.mxu0 0.0
    %1686 = vmatprep.subr.mxu0 0.0
    %1687 = vmatpush1.msra.mxu0 0.0
    %1688 = vmatprep.subr.mxu0 0.0
    %1689 = vmatpush1.msra.mxu0 0.0
    %1690 = vmatprep.subr.mxu0 0.0
    %1691 = vmatpush1.msra.mxu0 0.0
    %1692 = vmatprep.subr.mxu0 0.0
    %1693 = vmatpush1.msra.mxu0 0.0
    %1694 = vmatprep.subr.mxu0 0.0
    %1695 = vmatpush1.msra.mxu0 0.0
    %1696 = vmatprep.mubr.f32.mxu0 0.0
    %1697 = vmatmul.mubr.f32.gmra.mrb[0].mxu0 %v1630
    %v1698 = vpop.f32.mrb[0].mxu0
    %v1699 = vadd.f32 0.0, %v1698
    %v1700 = vpop.f32.mrb[0].mxu0
    %1701 = vdwg.mxu0
    %v1702 = vadd.f32 %v1624, %v1699
    %s1703 = scalar_lea.vmem [#allocation2], 88
    %v1704 = vld [vmem:[%s1703] sm:$0xff]
    %v1705 = vld [vmem:[%s694] sm:$0xff]
    %v1706 = vld [vmem:[%s694 + $0x8] sm:$0xff]
    %v1707 = vld [vmem:[%s694 + $0x10] sm:$0xff]
    %v1708 = vld [vmem:[%s694 + $0x18] sm:$0xff]
    %1709 = vmatprep.subr.mxu0 0.0
    %1710 = vmatpush1.msra.mxu0 %v1705
    %1711 = vmatprep.subr.mxu0 0.0
    %1712 = vmatpush1.msra.mxu0 %v1706
    %1713 = vmatprep.subr.mxu0 0.0
    %1714 = vmatpush1.msra.mxu0 %v1707
    %1715 = vmatprep.subr.mxu0 0.0
    %1716 = vmatpush1.msra.mxu0 %v1708
    %1717 = vmatprep.subr.mxu0 0.0
    %1718 = vmatpush1.msra.mxu0 0.0
    %1719 = vmatprep.subr.mxu0 0.0
    %1720 = vmatpush1.msra.mxu0 0.0
    %1721 = vmatprep.subr.mxu0 0.0
    %1722 = vmatpush1.msra.mxu0 0.0
    %1723 = vmatprep.subr.mxu0 0.0
    %1724 = vmatpush1.msra.mxu0 0.0
    %1725 = vmatprep.subr.mxu0 0.0
    %1726 = vmatpush1.msra.mxu0 0.0
    %1727 = vmatprep.subr.mxu0 0.0
    %1728 = vmatpush1.msra.mxu0 0.0
    %1729 = vmatprep.subr.mxu0 0.0
    %1730 = vmatpush1.msra.mxu0 0.0
    %1731 = vmatprep.subr.mxu0 0.0
    %1732 = vmatpush1.msra.mxu0 0.0
    %1733 = vmatprep.subr.mxu0 0.0
    %1734 = vmatpush1.msra.mxu0 0.0
    %1735 = vmatprep.subr.mxu0 0.0
    %1736 = vmatpush1.msra.mxu0 0.0
    %1737 = vmatprep.subr.mxu0 0.0
    %1738 = vmatpush1.msra.mxu0 0.0
    %1739 = vmatprep.subr.mxu0 0.0
    %1740 = vmatpush1.msra.mxu0 0.0
    %1741 = vmatprep.subr.mxu0 0.0
    %1742 = vmatpush1.msra.mxu0 0.0
    %1743 = vmatprep.subr.mxu0 0.0
    %1744 = vmatpush1.msra.mxu0 0.0
    %1745 = vmatprep.subr.mxu0 0.0
    %1746 = vmatpush1.msra.mxu0 0.0
    %1747 = vmatprep.subr.mxu0 0.0
    %1748 = vmatpush1.msra.mxu0 0.0
    %1749 = vmatprep.subr.mxu0 0.0
    %1750 = vmatpush1.msra.mxu0 0.0
    %1751 = vmatprep.subr.mxu0 0.0
    %1752 = vmatpush1.msra.mxu0 0.0
    %1753 = vmatprep.subr.mxu0 0.0
    %1754 = vmatpush1.msra.mxu0 0.0
    %1755 = vmatprep.subr.mxu0 0.0
    %1756 = vmatpush1.msra.mxu0 0.0
    %1757 = vmatprep.subr.mxu0 0.0
    %1758 = vmatpush1.msra.mxu0 0.0
    %1759 = vmatprep.subr.mxu0 0.0
    %1760 = vmatpush1.msra.mxu0 0.0
    %1761 = vmatprep.subr.mxu0 0.0
    %1762 = vmatpush1.msra.mxu0 0.0
    %1763 = vmatprep.subr.mxu0 0.0
    %1764 = vmatpush1.msra.mxu0 0.0
    %1765 = vmatprep.subr.mxu0 0.0
    %1766 = vmatpush1.msra.mxu0 0.0
    %1767 = vmatprep.subr.mxu0 0.0
    %1768 = vmatpush1.msra.mxu0 0.0
    %1769 = vmatprep.subr.mxu0 0.0
    %1770 = vmatpush1.msra.mxu0 0.0
    %1771 = vmatprep.subr.mxu0 0.0
    %1772 = vmatpush1.msra.mxu0 0.0
    %1773 = vmatprep.mubr.f32.mxu0 0.0
    %1774 = vmatmul.mubr.f32.gmra.mrb[0].mxu0 %v1630
    %v1775 = vpop.f32.mrb[0].mxu0
    %v1776 = vadd.f32 0.0, %v1775
    %v1777 = vpop.f32.mrb[0].mxu0
    %1778 = vdwg.mxu0
    %v1779 = vadd.f32 %v1704, %v1776
    %s1780 = scalar_lea.vmem [#allocation2], 152
    %v1781 = vld [vmem:[%s1780] sm:$0xff]
    %v1782 = vld [vmem:[%s771] sm:$0xff]
    %v1783 = vld [vmem:[%s771 + $0x8] sm:$0xff]
    %v1784 = vld [vmem:[%s771 + $0x10] sm:$0xff]
    %v1785 = vld [vmem:[%s771 + $0x18] sm:$0xff]
    %1786 = vmatprep.subr.mxu0 0.0
    %1787 = vmatpush1.msra.mxu0 %v1782
    %1788 = vmatprep.subr.mxu0 0.0
    %1789 = vmatpush1.msra.mxu0 %v1783
    %1790 = vmatprep.subr.mxu0 0.0
    %1791 = vmatpush1.msra.mxu0 %v1784
    %1792 = vmatprep.subr.mxu0 0.0
    %1793 = vmatpush1.msra.mxu0 %v1785
    %1794 = vmatprep.subr.mxu0 0.0
    %1795 = vmatpush1.msra.mxu0 0.0
    %1796 = vmatprep.subr.mxu0 0.0
    %1797 = vmatpush1.msra.mxu0 0.0
    %1798 = vmatprep.subr.mxu0 0.0
    %1799 = vmatpush1.msra.mxu0 0.0
    %1800 = vmatprep.subr.mxu0 0.0
    %1801 = vmatpush1.msra.mxu0 0.0
    %1802 = vmatprep.subr.mxu0 0.0
    %1803 = vmatpush1.msra.mxu0 0.0
    %1804 = vmatprep.subr.mxu0 0.0
    %1805 = vmatpush1.msra.mxu0 0.0
    %1806 = vmatprep.subr.mxu0 0.0
    %1807 = vmatpush1.msra.mxu0 0.0
    %1808 = vmatprep.subr.mxu0 0.0
    %1809 = vmatpush1.msra.mxu0 0.0
    %1810 = vmatprep.subr.mxu0 0.0
    %1811 = vmatpush1.msra.mxu0 0.0
    %1812 = vmatprep.subr.mxu0 0.0
    %1813 = vmatpush1.msra.mxu0 0.0
    %1814 = vmatprep.subr.mxu0 0.0
    %1815 = vmatpush1.msra.mxu0 0.0
    %1816 = vmatprep.subr.mxu0 0.0
    %1817 = vmatpush1.msra.mxu0 0.0
    %1818 = vmatprep.subr.mxu0 0.0
    %1819 = vmatpush1.msra.mxu0 0.0
    %1820 = vmatprep.subr.mxu0 0.0
    %1821 = vmatpush1.msra.mxu0 0.0
    %1822 = vmatprep.subr.mxu0 0.0
    %1823 = vmatpush1.msra.mxu0 0.0
    %1824 = vmatprep.subr.mxu0 0.0
    %1825 = vmatpush1.msra.mxu0 0.0
    %1826 = vmatprep.subr.mxu0 0.0
    %1827 = vmatpush1.msra.mxu0 0.0
    %1828 = vmatprep.subr.mxu0 0.0
    %1829 = vmatpush1.msra.mxu0 0.0
    %1830 = vmatprep.subr.mxu0 0.0
    %1831 = vmatpush1.msra.mxu0 0.0
    %1832 = vmatprep.subr.mxu0 0.0
    %1833 = vmatpush1.msra.mxu0 0.0
    %1834 = vmatprep.subr.mxu0 0.0
    %1835 = vmatpush1.msra.mxu0 0.0
    %1836 = vmatprep.subr.mxu0 0.0
    %1837 = vmatpush1.msra.mxu0 0.0
    %1838 = vmatprep.subr.mxu0 0.0
    %1839 = vmatpush1.msra.mxu0 0.0
    %1840 = vmatprep.subr.mxu0 0.0
    %1841 = vmatpush1.msra.mxu0 0.0
    %1842 = vmatprep.subr.mxu0 0.0
    %1843 = vmatpush1.msra.mxu0 0.0
    %1844 = vmatprep.subr.mxu0 0.0
    %1845 = vmatpush1.msra.mxu0 0.0
    %1846 = vmatprep.subr.mxu0 0.0
    %1847 = vmatpush1.msra.mxu0 0.0
    %1848 = vmatprep.subr.mxu0 0.0
    %1849 = vmatpush1.msra.mxu0 0.0
    %1850 = vmatprep.mubr.f32.mxu0 0.0
    %1851 = vmatmul.mubr.f32.gmra.mrb[0].mxu0 %v1630
    %v1852 = vpop.f32.mrb[0].mxu0
    %v1853 = vadd.f32 0.0, %v1852
    %v1854 = vpop.f32.mrb[0].mxu0
    %1855 = vdwg.mxu0
    %v1856 = vadd.f32 %v1781, %v1853
    %s1857 = scalar_lea.vmem [#allocation2], 216
    %v1858 = vld [vmem:[%s1857] sm:$0xff]
    %v1859 = vld [vmem:[%s848] sm:$0xff]
    %v1860 = vld [vmem:[%s848 + $0x8] sm:$0xff]
    %v1861 = vld [vmem:[%s848 + $0x10] sm:$0xff]
    %v1862 = vld [vmem:[%s848 + $0x18] sm:$0xff]
    %1863 = vmatprep.subr.mxu0 0.0
    %1864 = vmatpush1.msra.mxu0 %v1859
    %1865 = vmatprep.subr.mxu0 0.0
    %1866 = vmatpush1.msra.mxu0 %v1860
    %1867 = vmatprep.subr.mxu0 0.0
    %1868 = vmatpush1.msra.mxu0 %v1861
    %1869 = vmatprep.subr.mxu0 0.0
    %1870 = vmatpush1.msra.mxu0 %v1862
    %1871 = vmatprep.subr.mxu0 0.0
    %1872 = vmatpush1.msra.mxu0 0.0
    %1873 = vmatprep.subr.mxu0 0.0
    %1874 = vmatpush1.msra.mxu0 0.0
    %1875 = vmatprep.subr.mxu0 0.0
    %1876 = vmatpush1.msra.mxu0 0.0
    %1877 = vmatprep.subr.mxu0 0.0
    %1878 = vmatpush1.msra.mxu0 0.0
    %1879 = vmatprep.subr.mxu0 0.0
    %1880 = vmatpush1.msra.mxu0 0.0
    %1881 = vmatprep.subr.mxu0 0.0
    %1882 = vmatpush1.msra.mxu0 0.0
    %1883 = vmatprep.subr.mxu0 0.0
    %1884 = vmatpush1.msra.mxu0 0.0
    %1885 = vmatprep.subr.mxu0 0.0
    %1886 = vmatpush1.msra.mxu0 0.0
    %1887 = vmatprep.subr.mxu0 0.0
    %1888 = vmatpush1.msra.mxu0 0.0
    %1889 = vmatprep.subr.mxu0 0.0
    %1890 = vmatpush1.msra.mxu0 0.0
    %1891 = vmatprep.subr.mxu0 0.0
    %1892 = vmatpush1.msra.mxu0 0.0
    %1893 = vmatprep.subr.mxu0 0.0
    %1894 = vmatpush1.msra.mxu0 0.0
    %1895 = vmatprep.subr.mxu0 0.0
    %1896 = vmatpush1.msra.mxu0 0.0
    %1897 = vmatprep.subr.mxu0 0.0
    %1898 = vmatpush1.msra.mxu0 0.0
    %1899 = vmatprep.subr.mxu0 0.0
    %1900 = vmatpush1.msra.mxu0 0.0
    %1901 = vmatprep.subr.mxu0 0.0
    %1902 = vmatpush1.msra.mxu0 0.0
    %1903 = vmatprep.subr.mxu0 0.0
    %1904 = vmatpush1.msra.mxu0 0.0
    %1905 = vmatprep.subr.mxu0 0.0
    %1906 = vmatpush1.msra.mxu0 0.0
    %1907 = vmatprep.subr.mxu0 0.0
    %1908 = vmatpush1.msra.mxu0 0.0
    %1909 = vmatprep.subr.mxu0 0.0
    %1910 = vmatpush1.msra.mxu0 0.0
    %1911 = vmatprep.subr.mxu0 0.0
    %1912 = vmatpush1.msra.mxu0 0.0
    %1913 = vmatprep.subr.mxu0 0.0
    %1914 = vmatpush1.msra.mxu0 0.0
    %1915 = vmatprep.subr.mxu0 0.0
    %1916 = vmatpush1.msra.mxu0 0.0
    %1917 = vmatprep.subr.mxu0 0.0
    %1918 = vmatpush1.msra.mxu0 0.0
    %1919 = vmatprep.subr.mxu0 0.0
    %1920 = vmatpush1.msra.mxu0 0.0
    %1921 = vmatprep.subr.mxu0 0.0
    %1922 = vmatpush1.msra.mxu0 0.0
    %1923 = vmatprep.subr.mxu0 0.0
    %1924 = vmatpush1.msra.mxu0 0.0
    %1925 = vmatprep.subr.mxu0 0.0
    %1926 = vmatpush1.msra.mxu0 0.0
    %1927 = vmatprep.mubr.f32.mxu0 0.0
    %1928 = vmatmul.mubr.f32.gmra.mrb[0].mxu0 %v1630
    %v1929 = vpop.f32.mrb[0].mxu0
    %v1930 = vadd.f32 0.0, %v1929
    %v1931 = vpop.f32.mrb[0].mxu0
    %1932 = vdwg.mxu0
    %v1933 = vadd.f32 %v1858, %v1930
    %v1934 = vxor.u32 %v1702, 2147483648
    %v1935 = vmul.f32 %v1934, 1.442695
    %v1936 = vpow.pop %v1935
    %v1937 = vadd.f32 %v1936, 1.0
    %v1938 = vrcp.pop %v1937
    %v1939 = vmul.f32 1.0, %v1938
    %v1940 = vxor.u32 %v1779, 2147483648
    %v1941 = vmul.f32 %v1940, 1.442695
    %v1942 = vpow.pop %v1941
    %v1943 = vadd.f32 %v1942, 1.0
    %v1944 = vrcp.pop %v1943
    %v1945 = vmul.f32 1.0, %v1944
    %v1946 = vtanh.pop %v1856
    %v1947 = vxor.u32 %v1933, 2147483648
    %v1948 = vmul.f32 %v1947, 1.442695
    %v1949 = vpow.pop %v1948
    %v1950 = vadd.f32 %v1949, 1.0
    %v1951 = vrcp.pop %v1950
    %v1952 = vmul.f32 1.0, %v1951
    %v1953 = vmul.f32 %v1945, %v1618
    %v1954 = vmul.f32 %v1939, %v1946
    %v1955 = vadd.f32 %v1953, %v1954
    %v1956 = vtanh.pop %v1955
    %v1957 = vmul.f32 %v1952, %v1956
    %s1958 = scalar_lea.vmem [#allocation3], 24
    %1959 = vst.msk [vmem:[%s1958] sm:$0xff] %vm230, %v1957
    %s1960 = scalar_lea.vmem [#allocation2], 32
    %v1961 = vld [vmem:[%s1960] sm:$0xff]
    %v1962 = vld [vmem:[#allocation9] sm:$0xff]
    %v1963 = vld [vmem:[#allocation9 + $0x8] sm:$0xff]
    %v1964 = vld [vmem:[#allocation9 + $0x10] sm:$0xff]
    %v1965 = vld [vmem:[#allocation9 + $0x18] sm:$0xff]
    %v1967 = vsel %vm230, %v1957, 0
    %1969 = vmatprep.subr.mxu0 0.0
    %1970 = vmatpush1.msra.mxu0 %v1962
    %1971 = vmatprep.subr.mxu0 0.0
    %1972 = vmatpush1.msra.mxu0 %v1963
    %1973 = vmatprep.subr.mxu0 0.0
    %1974 = vmatpush1.msra.mxu0 %v1964
    %1975 = vmatprep.subr.mxu0 0.0
    %1976 = vmatpush1.msra.mxu0 %v1965
    %1977 = vmatprep.subr.mxu0 0.0
    %1978 = vmatpush1.msra.mxu0 0.0
    %1979 = vmatprep.subr.mxu0 0.0
    %1980 = vmatpush1.msra.mxu0 0.0
    %1981 = vmatprep.subr.mxu0 0.0
    %1982 = vmatpush1.msra.mxu0 0.0
    %1983 = vmatprep.subr.mxu0 0.0
    %1984 = vmatpush1.msra.mxu0 0.0
    %1985 = vmatprep.subr.mxu0 0.0
    %1986 = vmatpush1.msra.mxu0 0.0
    %1987 = vmatprep.subr.mxu0 0.0
    %1988 = vmatpush1.msra.mxu0 0.0
    %1989 = vmatprep.subr.mxu0 0.0
    %1990 = vmatpush1.msra.mxu0 0.0
    %1991 = vmatprep.subr.mxu0 0.0
    %1992 = vmatpush1.msra.mxu0 0.0
    %1993 = vmatprep.subr.mxu0 0.0
    %1994 = vmatpush1.msra.mxu0 0.0
    %1995 = vmatprep.subr.mxu0 0.0
    %1996 = vmatpush1.msra.mxu0 0.0
    %1997 = vmatprep.subr.mxu0 0.0
    %1998 = vmatpush1.msra.mxu0 0.0
    %1999 = vmatprep.subr.mxu0 0.0
    %2000 = vmatpush1.msra.mxu0 0.0
    %2001 = vmatprep.subr.mxu0 0.0
    %2002 = vmatpush1.msra.mxu0 0.0
    %2003 = vmatprep.subr.mxu0 0.0
    %2004 = vmatpush1.msra.mxu0 0.0
    %2005 = vmatprep.subr.mxu0 0.0
    %2006 = vmatpush1.msra.mxu0 0.0
    %2007 = vmatprep.subr.mxu0 0.0
    %2008 = vmatpush1.msra.mxu0 0.0
    %2009 = vmatprep.subr.mxu0 0.0
    %2010 = vmatpush1.msra.mxu0 0.0
    %2011 = vmatprep.subr.mxu0 0.0
    %2012 = vmatpush1.msra.mxu0 0.0
    %2013 = vmatprep.subr.mxu0 0.0
    %2014 = vmatpush1.msra.mxu0 0.0
    %2015 = vmatprep.subr.mxu0 0.0
    %2016 = vmatpush1.msra.mxu0 0.0
    %2017 = vmatprep.subr.mxu0 0.0
    %2018 = vmatpush1.msra.mxu0 0.0
    %2019 = vmatprep.subr.mxu0 0.0
    %2020 = vmatpush1.msra.mxu0 0.0
    %2021 = vmatprep.subr.mxu0 0.0
    %2022 = vmatpush1.msra.mxu0 0.0
    %2023 = vmatprep.subr.mxu0 0.0
    %2024 = vmatpush1.msra.mxu0 0.0
    %2025 = vmatprep.subr.mxu0 0.0
    %2026 = vmatpush1.msra.mxu0 0.0
    %2027 = vmatprep.subr.mxu0 0.0
    %2028 = vmatpush1.msra.mxu0 0.0
    %2029 = vmatprep.subr.mxu0 0.0
    %2030 = vmatpush1.msra.mxu0 0.0
    %2031 = vmatprep.subr.mxu0 0.0
    %2032 = vmatpush1.msra.mxu0 0.0
    %2033 = vmatprep.mubr.f32.mxu0 0.0
    %2034 = vmatmul.mubr.f32.gmra.mrb[0].mxu0 %v1967
    %v2035 = vpop.f32.mrb[0].mxu0
    %v2036 = vadd.f32 0.0, %v2035
    %v2037 = vpop.f32.mrb[0].mxu0
    %2038 = vdwg.mxu0
    %v2039 = vadd.f32 %v1961, %v2036
    %s2040 = scalar_lea.vmem [#allocation2], 96
    %v2041 = vld [vmem:[%s2040] sm:$0xff]
    %v2042 = vld [vmem:[%s694] sm:$0xff]
    %v2043 = vld [vmem:[%s694 + $0x8] sm:$0xff]
    %v2044 = vld [vmem:[%s694 + $0x10] sm:$0xff]
    %v2045 = vld [vmem:[%s694 + $0x18] sm:$0xff]
    %2046 = vmatprep.subr.mxu0 0.0
    %2047 = vmatpush1.msra.mxu0 %v2042
    %2048 = vmatprep.subr.mxu0 0.0
    %2049 = vmatpush1.msra.mxu0 %v2043
    %2050 = vmatprep.subr.mxu0 0.0
    %2051 = vmatpush1.msra.mxu0 %v2044
    %2052 = vmatprep.subr.mxu0 0.0
    %2053 = vmatpush1.msra.mxu0 %v2045
    %2054 = vmatprep.subr.mxu0 0.0
    %2055 = vmatpush1.msra.mxu0 0.0
    %2056 = vmatprep.subr.mxu0 0.0
    %2057 = vmatpush1.msra.mxu0 0.0
    %2058 = vmatprep.subr.mxu0 0.0
    %2059 = vmatpush1.msra.mxu0 0.0
    %2060 = vmatprep.subr.mxu0 0.0
    %2061 = vmatpush1.msra.mxu0 0.0
    %2062 = vmatprep.subr.mxu0 0.0
    %2063 = vmatpush1.msra.mxu0 0.0
    %2064 = vmatprep.subr.mxu0 0.0
    %2065 = vmatpush1.msra.mxu0 0.0
    %2066 = vmatprep.subr.mxu0 0.0
    %2067 = vmatpush1.msra.mxu0 0.0
    %2068 = vmatprep.subr.mxu0 0.0
    %2069 = vmatpush1.msra.mxu0 0.0
    %2070 = vmatprep.subr.mxu0 0.0
    %2071 = vmatpush1.msra.mxu0 0.0
    %2072 = vmatprep.subr.mxu0 0.0
    %2073 = vmatpush1.msra.mxu0 0.0
    %2074 = vmatprep.subr.mxu0 0.0
    %2075 = vmatpush1.msra.mxu0 0.0
    %2076 = vmatprep.subr.mxu0 0.0
    %2077 = vmatpush1.msra.mxu0 0.0
    %2078 = vmatprep.subr.mxu0 0.0
    %2079 = vmatpush1.msra.mxu0 0.0
    %2080 = vmatprep.subr.mxu0 0.0
    %2081 = vmatpush1.msra.mxu0 0.0
    %2082 = vmatprep.subr.mxu0 0.0
    %2083 = vmatpush1.msra.mxu0 0.0
    %2084 = vmatprep.subr.mxu0 0.0
    %2085 = vmatpush1.msra.mxu0 0.0
    %2086 = vmatprep.subr.mxu0 0.0
    %2087 = vmatpush1.msra.mxu0 0.0
    %2088 = vmatprep.subr.mxu0 0.0
    %2089 = vmatpush1.msra.mxu0 0.0
    %2090 = vmatprep.subr.mxu0 0.0
    %2091 = vmatpush1.msra.mxu0 0.0
    %2092 = vmatprep.subr.mxu0 0.0
    %2093 = vmatpush1.msra.mxu0 0.0
    %2094 = vmatprep.subr.mxu0 0.0
    %2095 = vmatpush1.msra.mxu0 0.0
    %2096 = vmatprep.subr.mxu0 0.0
    %2097 = vmatpush1.msra.mxu0 0.0
    %2098 = vmatprep.subr.mxu0 0.0
    %2099 = vmatpush1.msra.mxu0 0.0
    %2100 = vmatprep.subr.mxu0 0.0
    %2101 = vmatpush1.msra.mxu0 0.0
    %2102 = vmatprep.subr.mxu0 0.0
    %2103 = vmatpush1.msra.mxu0 0.0
    %2104 = vmatprep.subr.mxu0 0.0
    %2105 = vmatpush1.msra.mxu0 0.0
    %2106 = vmatprep.subr.mxu0 0.0
    %2107 = vmatpush1.msra.mxu0 0.0
    %2108 = vmatprep.subr.mxu0 0.0
    %2109 = vmatpush1.msra.mxu0 0.0
    %2110 = vmatprep.mubr.f32.mxu0 0.0
    %2111 = vmatmul.mubr.f32.gmra.mrb[0].mxu0 %v1967
    %v2112 = vpop.f32.mrb[0].mxu0
    %v2113 = vadd.f32 0.0, %v2112
    %v2114 = vpop.f32.mrb[0].mxu0
    %2115 = vdwg.mxu0
    %v2116 = vadd.f32 %v2041, %v2113
    %s2117 = scalar_lea.vmem [#allocation2], 160
    %v2118 = vld [vmem:[%s2117] sm:$0xff]
    %v2119 = vld [vmem:[%s771] sm:$0xff]
    %v2120 = vld [vmem:[%s771 + $0x8] sm:$0xff]
    %v2121 = vld [vmem:[%s771 + $0x10] sm:$0xff]
    %v2122 = vld [vmem:[%s771 + $0x18] sm:$0xff]
    %2123 = vmatprep.subr.mxu0 0.0
    %2124 = vmatpush1.msra.mxu0 %v2119
    %2125 = vmatprep.subr.mxu0 0.0
    %2126 = vmatpush1.msra.mxu0 %v2120
    %2127 = vmatprep.subr.mxu0 0.0
    %2128 = vmatpush1.msra.mxu0 %v2121
    %2129 = vmatprep.subr.mxu0 0.0
    %2130 = vmatpush1.msra.mxu0 %v2122
    %2131 = vmatprep.subr.mxu0 0.0
    %2132 = vmatpush1.msra.mxu0 0.0
    %2133 = vmatprep.subr.mxu0 0.0
    %2134 = vmatpush1.msra.mxu0 0.0
    %2135 = vmatprep.subr.mxu0 0.0
    %2136 = vmatpush1.msra.mxu0 0.0
    %2137 = vmatprep.subr.mxu0 0.0
    %2138 = vmatpush1.msra.mxu0 0.0
    %2139 = vmatprep.subr.mxu0 0.0
    %2140 = vmatpush1.msra.mxu0 0.0
    %2141 = vmatprep.subr.mxu0 0.0
    %2142 = vmatpush1.msra.mxu0 0.0
    %2143 = vmatprep.subr.mxu0 0.0
    %2144 = vmatpush1.msra.mxu0 0.0
    %2145 = vmatprep.subr.mxu0 0.0
    %2146 = vmatpush1.msra.mxu0 0.0
    %2147 = vmatprep.subr.mxu0 0.0
    %2148 = vmatpush1.msra.mxu0 0.0
    %2149 = vmatprep.subr.mxu0 0.0
    %2150 = vmatpush1.msra.mxu0 0.0
    %2151 = vmatprep.subr.mxu0 0.0
    %2152 = vmatpush1.msra.mxu0 0.0
    %2153 = vmatprep.subr.mxu0 0.0
    %2154 = vmatpush1.msra.mxu0 0.0
    %2155 = vmatprep.subr.mxu0 0.0
    %2156 = vmatpush1.msra.mxu0 0.0
    %2157 = vmatprep.subr.mxu0 0.0
    %2158 = vmatpush1.msra.mxu0 0.0
    %2159 = vmatprep.subr.mxu0 0.0
    %2160 = vmatpush1.msra.mxu0 0.0
    %2161 = vmatprep.subr.mxu0 0.0
    %2162 = vmatpush1.msra.mxu0 0.0
    %2163 = vmatprep.subr.mxu0 0.0
    %2164 = vmatpush1.msra.mxu0 0.0
    %2165 = vmatprep.subr.mxu0 0.0
    %2166 = vmatpush1.msra.mxu0 0.0
    %2167 = vmatprep.subr.mxu0 0.0
    %2168 = vmatpush1.msra.mxu0 0.0
    %2169 = vmatprep.subr.mxu0 0.0
    %2170 = vmatpush1.msra.mxu0 0.0
    %2171 = vmatprep.subr.mxu0 0.0
    %2172 = vmatpush1.msra.mxu0 0.0
    %2173 = vmatprep.subr.mxu0 0.0
    %2174 = vmatpush1.msra.mxu0 0.0
    %2175 = vmatprep.subr.mxu0 0.0
    %2176 = vmatpush1.msra.mxu0 0.0
    %2177 = vmatprep.subr.mxu0 0.0
    %2178 = vmatpush1.msra.mxu0 0.0
    %2179 = vmatprep.subr.mxu0 0.0
    %2180 = vmatpush1.msra.mxu0 0.0
    %2181 = vmatprep.subr.mxu0 0.0
    %2182 = vmatpush1.msra.mxu0 0.0
    %2183 = vmatprep.subr.mxu0 0.0
    %2184 = vmatpush1.msra.mxu0 0.0
    %2185 = vmatprep.subr.mxu0 0.0
    %2186 = vmatpush1.msra.mxu0 0.0
    %2187 = vmatprep.mubr.f32.mxu0 0.0
    %2188 = vmatmul.mubr.f32.gmra.mrb[0].mxu0 %v1967
    %v2189 = vpop.f32.mrb[0].mxu0
    %v2190 = vadd.f32 0.0, %v2189
    %v2191 = vpop.f32.mrb[0].mxu0
    %2192 = vdwg.mxu0
    %v2193 = vadd.f32 %v2118, %v2190
    %s2194 = scalar_lea.vmem [#allocation2], 224
    %v2195 = vld [vmem:[%s2194] sm:$0xff]
    %v2196 = vld [vmem:[%s848] sm:$0xff]
    %v2197 = vld [vmem:[%s848 + $0x8] sm:$0xff]
    %v2198 = vld [vmem:[%s848 + $0x10] sm:$0xff]
    %v2199 = vld [vmem:[%s848 + $0x18] sm:$0xff]
    %2200 = vmatprep.subr.mxu0 0.0
    %2201 = vmatpush1.msra.mxu0 %v2196
    %2202 = vmatprep.subr.mxu0 0.0
    %2203 = vmatpush1.msra.mxu0 %v2197
    %2204 = vmatprep.subr.mxu0 0.0
    %2205 = vmatpush1.msra.mxu0 %v2198
    %2206 = vmatprep.subr.mxu0 0.0
    %2207 = vmatpush1.msra.mxu0 %v2199
    %2208 = vmatprep.subr.mxu0 0.0
    %2209 = vmatpush1.msra.mxu0 0.0
    %2210 = vmatprep.subr.mxu0 0.0
    %2211 = vmatpush1.msra.mxu0 0.0
    %2212 = vmatprep.subr.mxu0 0.0
    %2213 = vmatpush1.msra.mxu0 0.0
    %2214 = vmatprep.subr.mxu0 0.0
    %2215 = vmatpush1.msra.mxu0 0.0
    %2216 = vmatprep.subr.mxu0 0.0
    %2217 = vmatpush1.msra.mxu0 0.0
    %2218 = vmatprep.subr.mxu0 0.0
    %2219 = vmatpush1.msra.mxu0 0.0
    %2220 = vmatprep.subr.mxu0 0.0
    %2221 = vmatpush1.msra.mxu0 0.0
    %2222 = vmatprep.subr.mxu0 0.0
    %2223 = vmatpush1.msra.mxu0 0.0
    %2224 = vmatprep.subr.mxu0 0.0
    %2225 = vmatpush1.msra.mxu0 0.0
    %2226 = vmatprep.subr.mxu0 0.0
    %2227 = vmatpush1.msra.mxu0 0.0
    %2228 = vmatprep.subr.mxu0 0.0
    %2229 = vmatpush1.msra.mxu0 0.0
    %2230 = vmatprep.subr.mxu0 0.0
    %2231 = vmatpush1.msra.mxu0 0.0
    %2232 = vmatprep.subr.mxu0 0.0
    %2233 = vmatpush1.msra.mxu0 0.0
    %2234 = vmatprep.subr.mxu0 0.0
    %2235 = vmatpush1.msra.mxu0 0.0
    %2236 = vmatprep.subr.mxu0 0.0
    %2237 = vmatpush1.msra.mxu0 0.0
    %2238 = vmatprep.subr.mxu0 0.0
    %2239 = vmatpush1.msra.mxu0 0.0
    %2240 = vmatprep.subr.mxu0 0.0
    %2241 = vmatpush1.msra.mxu0 0.0
    %2242 = vmatprep.subr.mxu0 0.0
    %2243 = vmatpush1.msra.mxu0 0.0
    %2244 = vmatprep.subr.mxu0 0.0
    %2245 = vmatpush1.msra.mxu0 0.0
    %2246 = vmatprep.subr.mxu0 0.0
    %2247 = vmatpush1.msra.mxu0 0.0
    %2248 = vmatprep.subr.mxu0 0.0
    %2249 = vmatpush1.msra.mxu0 0.0
    %2250 = vmatprep.subr.mxu0 0.0
    %2251 = vmatpush1.msra.mxu0 0.0
    %2252 = vmatprep.subr.mxu0 0.0
    %2253 = vmatpush1.msra.mxu0 0.0
    %2254 = vmatprep.subr.mxu0 0.0
    %2255 = vmatpush1.msra.mxu0 0.0
    %2256 = vmatprep.subr.mxu0 0.0
    %2257 = vmatpush1.msra.mxu0 0.0
    %2258 = vmatprep.subr.mxu0 0.0
    %2259 = vmatpush1.msra.mxu0 0.0
    %2260 = vmatprep.subr.mxu0 0.0
    %2261 = vmatpush1.msra.mxu0 0.0
    %2262 = vmatprep.subr.mxu0 0.0
    %2263 = vmatpush1.msra.mxu0 0.0
    %2264 = vmatprep.mubr.f32.mxu0 0.0
    %2265 = vmatmul.mubr.f32.gmra.mrb[0].mxu0 %v1967
    %v2266 = vpop.f32.mrb[0].mxu0
    %v2267 = vadd.f32 0.0, %v2266
    %v2268 = vpop.f32.mrb[0].mxu0
    %2269 = vdwg.mxu0
    %v2270 = vadd.f32 %v2195, %v2267
    %v2271 = vxor.u32 %v2039, 2147483648
    %v2272 = vmul.f32 %v2271, 1.442695
    %v2273 = vpow.pop %v2272
    %v2274 = vadd.f32 %v2273, 1.0
    %v2275 = vrcp.pop %v2274
    %v2276 = vmul.f32 1.0, %v2275
    %v2277 = vxor.u32 %v2116, 2147483648
    %v2278 = vmul.f32 %v2277, 1.442695
    %v2279 = vpow.pop %v2278
    %v2280 = vadd.f32 %v2279, 1.0
    %v2281 = vrcp.pop %v2280
    %v2282 = vmul.f32 1.0, %v2281
    %v2283 = vtanh.pop %v2193
    %v2284 = vxor.u32 %v2270, 2147483648
    %v2285 = vmul.f32 %v2284, 1.442695
    %v2286 = vpow.pop %v2285
    %v2287 = vadd.f32 %v2286, 1.0
    %v2288 = vrcp.pop %v2287
    %v2289 = vmul.f32 1.0, %v2288
    %v2290 = vmul.f32 %v2282, %v1955
    %v2291 = vmul.f32 %v2276, %v2283
    %v2292 = vadd.f32 %v2290, %v2291
    %v2293 = vtanh.pop %v2292
    %v2294 = vmul.f32 %v2289, %v2293
    %s2295 = scalar_lea.vmem [#allocation3], 32
    %2296 = vst.msk [vmem:[%s2295] sm:$0xff] %vm230, %v2294
    %s2297 = scalar_lea.vmem [#allocation2], 40
    %v2298 = vld [vmem:[%s2297] sm:$0xff]
    %v2299 = vld [vmem:[#allocation9] sm:$0xff]
    %v2300 = vld [vmem:[#allocation9 + $0x8] sm:$0xff]
    %v2301 = vld [vmem:[#allocation9 + $0x10] sm:$0xff]
    %v2302 = vld [vmem:[#allocation9 + $0x18] sm:$0xff]
    %v2304 = vsel %vm230, %v2294, 0
    %2306 = vmatprep.subr.mxu0 0.0
    %2307 = vmatpush1.msra.mxu0 %v2299
    %2308 = vmatprep.subr.mxu0 0.0
    %2309 = vmatpush1.msra.mxu0 %v2300
    %2310 = vmatprep.subr.mxu0 0.0
    %2311 = vmatpush1.msra.mxu0 %v2301
    %2312 = vmatprep.subr.mxu0 0.0
    %2313 = vmatpush1.msra.mxu0 %v2302
    %2314 = vmatprep.subr.mxu0 0.0
    %2315 = vmatpush1.msra.mxu0 0.0
    %2316 = vmatprep.subr.mxu0 0.0
    %2317 = vmatpush1.msra.mxu0 0.0
    %2318 = vmatprep.subr.mxu0 0.0
    %2319 = vmatpush1.msra.mxu0 0.0
    %2320 = vmatprep.subr.mxu0 0.0
    %2321 = vmatpush1.msra.mxu0 0.0
    %2322 = vmatprep.subr.mxu0 0.0
    %2323 = vmatpush1.msra.mxu0 0.0
    %2324 = vmatprep.subr.mxu0 0.0
    %2325 = vmatpush1.msra.mxu0 0.0
    %2326 = vmatprep.subr.mxu0 0.0
    %2327 = vmatpush1.msra.mxu0 0.0
    %2328 = vmatprep.subr.mxu0 0.0
    %2329 = vmatpush1.msra.mxu0 0.0
    %2330 = vmatprep.subr.mxu0 0.0
    %2331 = vmatpush1.msra.mxu0 0.0
    %2332 = vmatprep.subr.mxu0 0.0
    %2333 = vmatpush1.msra.mxu0 0.0
    %2334 = vmatprep.subr.mxu0 0.0
    %2335 = vmatpush1.msra.mxu0 0.0
    %2336 = vmatprep.subr.mxu0 0.0
    %2337 = vmatpush1.msra.mxu0 0.0
    %2338 = vmatprep.subr.mxu0 0.0
    %2339 = vmatpush1.msra.mxu0 0.0
    %2340 = vmatprep.subr.mxu0 0.0
    %2341 = vmatpush1.msra.mxu0 0.0
    %2342 = vmatprep.subr.mxu0 0.0
    %2343 = vmatpush1.msra.mxu0 0.0
    %2344 = vmatprep.subr.mxu0 0.0
    %2345 = vmatpush1.msra.mxu0 0.0
    %2346 = vmatprep.subr.mxu0 0.0
    %2347 = vmatpush1.msra.mxu0 0.0
    %2348 = vmatprep.subr.mxu0 0.0
    %2349 = vmatpush1.msra.mxu0 0.0
    %2350 = vmatprep.subr.mxu0 0.0
    %2351 = vmatpush1.msra.mxu0 0.0
    %2352 = vmatprep.subr.mxu0 0.0
    %2353 = vmatpush1.msra.mxu0 0.0
    %2354 = vmatprep.subr.mxu0 0.0
    %2355 = vmatpush1.msra.mxu0 0.0
    %2356 = vmatprep.subr.mxu0 0.0
    %2357 = vmatpush1.msra.mxu0 0.0
    %2358 = vmatprep.subr.mxu0 0.0
    %2359 = vmatpush1.msra.mxu0 0.0
    %2360 = vmatprep.subr.mxu0 0.0
    %2361 = vmatpush1.msra.mxu0 0.0
    %2362 = vmatprep.subr.mxu0 0.0
    %2363 = vmatpush1.msra.mxu0 0.0
    %2364 = vmatprep.subr.mxu0 0.0
    %2365 = vmatpush1.msra.mxu0 0.0
    %2366 = vmatprep.subr.mxu0 0.0
    %2367 = vmatpush1.msra.mxu0 0.0
    %2368 = vmatprep.subr.mxu0 0.0
    %2369 = vmatpush1.msra.mxu0 0.0
    %2370 = vmatprep.mubr.f32.mxu0 0.0
    %2371 = vmatmul.mubr.f32.gmra.mrb[0].mxu0 %v2304
    %v2372 = vpop.f32.mrb[0].mxu0
    %v2373 = vadd.f32 0.0, %v2372
    %v2374 = vpop.f32.mrb[0].mxu0
    %2375 = vdwg.mxu0
    %v2376 = vadd.f32 %v2298, %v2373
    %s2377 = scalar_lea.vmem [#allocation2], 104
    %v2378 = vld [vmem:[%s2377] sm:$0xff]
    %v2379 = vld [vmem:[%s694] sm:$0xff]
    %v2380 = vld [vmem:[%s694 + $0x8] sm:$0xff]
    %v2381 = vld [vmem:[%s694 + $0x10] sm:$0xff]
    %v2382 = vld [vmem:[%s694 + $0x18] sm:$0xff]
    %2383 = vmatprep.subr.mxu0 0.0
    %2384 = vmatpush1.msra.mxu0 %v2379
    %2385 = vmatprep.subr.mxu0 0.0
    %2386 = vmatpush1.msra.mxu0 %v2380
    %2387 = vmatprep.subr.mxu0 0.0
    %2388 = vmatpush1.msra.mxu0 %v2381
    %2389 = vmatprep.subr.mxu0 0.0
    %2390 = vmatpush1.msra.mxu0 %v2382
    %2391 = vmatprep.subr.mxu0 0.0
    %2392 = vmatpush1.msra.mxu0 0.0
    %2393 = vmatprep.subr.mxu0 0.0
    %2394 = vmatpush1.msra.mxu0 0.0
    %2395 = vmatprep.subr.mxu0 0.0
    %2396 = vmatpush1.msra.mxu0 0.0
    %2397 = vmatprep.subr.mxu0 0.0
    %2398 = vmatpush1.msra.mxu0 0.0
    %2399 = vmatprep.subr.mxu0 0.0
    %2400 = vmatpush1.msra.mxu0 0.0
    %2401 = vmatprep.subr.mxu0 0.0
    %2402 = vmatpush1.msra.mxu0 0.0
    %2403 = vmatprep.subr.mxu0 0.0
    %2404 = vmatpush1.msra.mxu0 0.0
    %2405 = vmatprep.subr.mxu0 0.0
    %2406 = vmatpush1.msra.mxu0 0.0
    %2407 = vmatprep.subr.mxu0 0.0
    %2408 = vmatpush1.msra.mxu0 0.0
    %2409 = vmatprep.subr.mxu0 0.0
    %2410 = vmatpush1.msra.mxu0 0.0
    %2411 = vmatprep.subr.mxu0 0.0
    %2412 = vmatpush1.msra.mxu0 0.0
    %2413 = vmatprep.subr.mxu0 0.0
    %2414 = vmatpush1.msra.mxu0 0.0
    %2415 = vmatprep.subr.mxu0 0.0
    %2416 = vmatpush1.msra.mxu0 0.0
    %2417 = vmatprep.subr.mxu0 0.0
    %2418 = vmatpush1.msra.mxu0 0.0
    %2419 = vmatprep.subr.mxu0 0.0
    %2420 = vmatpush1.msra.mxu0 0.0
    %2421 = vmatprep.subr.mxu0 0.0
    %2422 = vmatpush1.msra.mxu0 0.0
    %2423 = vmatprep.subr.mxu0 0.0
    %2424 = vmatpush1.msra.mxu0 0.0
    %2425 = vmatprep.subr.mxu0 0.0
    %2426 = vmatpush1.msra.mxu0 0.0
    %2427 = vmatprep.subr.mxu0 0.0
    %2428 = vmatpush1.msra.mxu0 0.0
    %2429 = vmatprep.subr.mxu0 0.0
    %2430 = vmatpush1.msra.mxu0 0.0
    %2431 = vmatprep.subr.mxu0 0.0
    %2432 = vmatpush1.msra.mxu0 0.0
    %2433 = vmatprep.subr.mxu0 0.0
    %2434 = vmatpush1.msra.mxu0 0.0
    %2435 = vmatprep.subr.mxu0 0.0
    %2436 = vmatpush1.msra.mxu0 0.0
    %2437 = vmatprep.subr.mxu0 0.0
    %2438 = vmatpush1.msra.mxu0 0.0
    %2439 = vmatprep.subr.mxu0 0.0
    %2440 = vmatpush1.msra.mxu0 0.0
    %2441 = vmatprep.subr.mxu0 0.0
    %2442 = vmatpush1.msra.mxu0 0.0
    %2443 = vmatprep.subr.mxu0 0.0
    %2444 = vmatpush1.msra.mxu0 0.0
    %2445 = vmatprep.subr.mxu0 0.0
    %2446 = vmatpush1.msra.mxu0 0.0
    %2447 = vmatprep.mubr.f32.mxu0 0.0
    %2448 = vmatmul.mubr.f32.gmra.mrb[0].mxu0 %v2304
    %v2449 = vpop.f32.mrb[0].mxu0
    %v2450 = vadd.f32 0.0, %v2449
    %v2451 = vpop.f32.mrb[0].mxu0
    %2452 = vdwg.mxu0
    %v2453 = vadd.f32 %v2378, %v2450
    %s2454 = scalar_lea.vmem [#allocation2], 168
    %v2455 = vld [vmem:[%s2454] sm:$0xff]
    %v2456 = vld [vmem:[%s771] sm:$0xff]
    %v2457 = vld [vmem:[%s771 + $0x8] sm:$0xff]
    %v2458 = vld [vmem:[%s771 + $0x10] sm:$0xff]
    %v2459 = vld [vmem:[%s771 + $0x18] sm:$0xff]
    %2460 = vmatprep.subr.mxu0 0.0
    %2461 = vmatpush1.msra.mxu0 %v2456
    %2462 = vmatprep.subr.mxu0 0.0
    %2463 = vmatpush1.msra.mxu0 %v2457
    %2464 = vmatprep.subr.mxu0 0.0
    %2465 = vmatpush1.msra.mxu0 %v2458
    %2466 = vmatprep.subr.mxu0 0.0
    %2467 = vmatpush1.msra.mxu0 %v2459
    %2468 = vmatprep.subr.mxu0 0.0
    %2469 = vmatpush1.msra.mxu0 0.0
    %2470 = vmatprep.subr.mxu0 0.0
    %2471 = vmatpush1.msra.mxu0 0.0
    %2472 = vmatprep.subr.mxu0 0.0
    %2473 = vmatpush1.msra.mxu0 0.0
    %2474 = vmatprep.subr.mxu0 0.0
    %2475 = vmatpush1.msra.mxu0 0.0
    %2476 = vmatprep.subr.mxu0 0.0
    %2477 = vmatpush1.msra.mxu0 0.0
    %2478 = vmatprep.subr.mxu0 0.0
    %2479 = vmatpush1.msra.mxu0 0.0
    %2480 = vmatprep.subr.mxu0 0.0
    %2481 = vmatpush1.msra.mxu0 0.0
    %2482 = vmatprep.subr.mxu0 0.0
    %2483 = vmatpush1.msra.mxu0 0.0
    %2484 = vmatprep.subr.mxu0 0.0
    %2485 = vmatpush1.msra.mxu0 0.0
    %2486 = vmatprep.subr.mxu0 0.0
    %2487 = vmatpush1.msra.mxu0 0.0
    %2488 = vmatprep.subr.mxu0 0.0
    %2489 = vmatpush1.msra.mxu0 0.0
    %2490 = vmatprep.subr.mxu0 0.0
    %2491 = vmatpush1.msra.mxu0 0.0
    %2492 = vmatprep.subr.mxu0 0.0
    %2493 = vmatpush1.msra.mxu0 0.0
    %2494 = vmatprep.subr.mxu0 0.0
    %2495 = vmatpush1.msra.mxu0 0.0
    %2496 = vmatprep.subr.mxu0 0.0
    %2497 = vmatpush1.msra.mxu0 0.0
    %2498 = vmatprep.subr.mxu0 0.0
    %2499 = vmatpush1.msra.mxu0 0.0
    %2500 = vmatprep.subr.mxu0 0.0
    %2501 = vmatpush1.msra.mxu0 0.0
    %2502 = vmatprep.subr.mxu0 0.0
    %2503 = vmatpush1.msra.mxu0 0.0
    %2504 = vmatprep.subr.mxu0 0.0
    %2505 = vmatpush1.msra.mxu0 0.0
    %2506 = vmatprep.subr.mxu0 0.0
    %2507 = vmatpush1.msra.mxu0 0.0
    %2508 = vmatprep.subr.mxu0 0.0
    %2509 = vmatpush1.msra.mxu0 0.0
    %2510 = vmatprep.subr.mxu0 0.0
    %2511 = vmatpush1.msra.mxu0 0.0
    %2512 = vmatprep.subr.mxu0 0.0
    %2513 = vmatpush1.msra.mxu0 0.0
    %2514 = vmatprep.subr.mxu0 0.0
    %2515 = vmatpush1.msra.mxu0 0.0
    %2516 = vmatprep.subr.mxu0 0.0
    %2517 = vmatpush1.msra.mxu0 0.0
    %2518 = vmatprep.subr.mxu0 0.0
    %2519 = vmatpush1.msra.mxu0 0.0
    %2520 = vmatprep.subr.mxu0 0.0
    %2521 = vmatpush1.msra.mxu0 0.0
    %2522 = vmatprep.subr.mxu0 0.0
    %2523 = vmatpush1.msra.mxu0 0.0
    %2524 = vmatprep.mubr.f32.mxu0 0.0
    %2525 = vmatmul.mubr.f32.gmra.mrb[0].mxu0 %v2304
    %v2526 = vpop.f32.mrb[0].mxu0
    %v2527 = vadd.f32 0.0, %v2526
    %v2528 = vpop.f32.mrb[0].mxu0
    %2529 = vdwg.mxu0
    %v2530 = vadd.f32 %v2455, %v2527
    %s2531 = scalar_lea.vmem [#allocation2], 232
    %v2532 = vld [vmem:[%s2531] sm:$0xff]
    %v2533 = vld [vmem:[%s848] sm:$0xff]
    %v2534 = vld [vmem:[%s848 + $0x8] sm:$0xff]
    %v2535 = vld [vmem:[%s848 + $0x10] sm:$0xff]
    %v2536 = vld [vmem:[%s848 + $0x18] sm:$0xff]
    %2537 = vmatprep.subr.mxu0 0.0
    %2538 = vmatpush1.msra.mxu0 %v2533
    %2539 = vmatprep.subr.mxu0 0.0
    %2540 = vmatpush1.msra.mxu0 %v2534
    %2541 = vmatprep.subr.mxu0 0.0
    %2542 = vmatpush1.msra.mxu0 %v2535
    %2543 = vmatprep.subr.mxu0 0.0
    %2544 = vmatpush1.msra.mxu0 %v2536
    %2545 = vmatprep.subr.mxu0 0.0
    %2546 = vmatpush1.msra.mxu0 0.0
    %2547 = vmatprep.subr.mxu0 0.0
    %2548 = vmatpush1.msra.mxu0 0.0
    %2549 = vmatprep.subr.mxu0 0.0
    %2550 = vmatpush1.msra.mxu0 0.0
    %2551 = vmatprep.subr.mxu0 0.0
    %2552 = vmatpush1.msra.mxu0 0.0
    %2553 = vmatprep.subr.mxu0 0.0
    %2554 = vmatpush1.msra.mxu0 0.0
    %2555 = vmatprep.subr.mxu0 0.0
    %2556 = vmatpush1.msra.mxu0 0.0
    %2557 = vmatprep.subr.mxu0 0.0
    %2558 = vmatpush1.msra.mxu0 0.0
    %2559 = vmatprep.subr.mxu0 0.0
    %2560 = vmatpush1.msra.mxu0 0.0
    %2561 = vmatprep.subr.mxu0 0.0
    %2562 = vmatpush1.msra.mxu0 0.0
    %2563 = vmatprep.subr.mxu0 0.0
    %2564 = vmatpush1.msra.mxu0 0.0
    %2565 = vmatprep.subr.mxu0 0.0
    %2566 = vmatpush1.msra.mxu0 0.0
    %2567 = vmatprep.subr.mxu0 0.0
    %2568 = vmatpush1.msra.mxu0 0.0
    %2569 = vmatprep.subr.mxu0 0.0
    %2570 = vmatpush1.msra.mxu0 0.0
    %2571 = vmatprep.subr.mxu0 0.0
    %2572 = vmatpush1.msra.mxu0 0.0
    %2573 = vmatprep.subr.mxu0 0.0
    %2574 = vmatpush1.msra.mxu0 0.0
    %2575 = vmatprep.subr.mxu0 0.0
    %2576 = vmatpush1.msra.mxu0 0.0
    %2577 = vmatprep.subr.mxu0 0.0
    %2578 = vmatpush1.msra.mxu0 0.0
    %2579 = vmatprep.subr.mxu0 0.0
    %2580 = vmatpush1.msra.mxu0 0.0
    %2581 = vmatprep.subr.mxu0 0.0
    %2582 = vmatpush1.msra.mxu0 0.0
    %2583 = vmatprep.subr.mxu0 0.0
    %2584 = vmatpush1.msra.mxu0 0.0
    %2585 = vmatprep.subr.mxu0 0.0
    %2586 = vmatpush1.msra.mxu0 0.0
    %2587 = vmatprep.subr.mxu0 0.0
    %2588 = vmatpush1.msra.mxu0 0.0
    %2589 = vmatprep.subr.mxu0 0.0
    %2590 = vmatpush1.msra.mxu0 0.0
    %2591 = vmatprep.subr.mxu0 0.0
    %2592 = vmatpush1.msra.mxu0 0.0
    %2593 = vmatprep.subr.mxu0 0.0
    %2594 = vmatpush1.msra.mxu0 0.0
    %2595 = vmatprep.subr.mxu0 0.0
    %2596 = vmatpush1.msra.mxu0 0.0
    %2597 = vmatprep.subr.mxu0 0.0
    %2598 = vmatpush1.msra.mxu0 0.0
    %2599 = vmatprep.subr.mxu0 0.0
    %2600 = vmatpush1.msra.mxu0 0.0
    %2601 = vmatprep.mubr.f32.mxu0 0.0
    %2602 = vmatmul.mubr.f32.gmra.mrb[0].mxu0 %v2304
    %v2603 = vpop.f32.mrb[0].mxu0
    %v2604 = vadd.f32 0.0, %v2603
    %v2605 = vpop.f32.mrb[0].mxu0
    %2606 = vdwg.mxu0
    %v2607 = vadd.f32 %v2532, %v2604
    %v2608 = vxor.u32 %v2376, 2147483648
    %v2609 = vmul.f32 %v2608, 1.442695
    %v2610 = vpow.pop %v2609
    %v2611 = vadd.f32 %v2610, 1.0
    %v2612 = vrcp.pop %v2611
    %v2613 = vmul.f32 1.0, %v2612
    %v2614 = vxor.u32 %v2453, 2147483648
    %v2615 = vmul.f32 %v2614, 1.442695
    %v2616 = vpow.pop %v2615
    %v2617 = vadd.f32 %v2616, 1.0
    %v2618 = vrcp.pop %v2617
    %v2619 = vmul.f32 1.0, %v2618
    %v2620 = vtanh.pop %v2530
    %v2621 = vxor.u32 %v2607, 2147483648
    %v2622 = vmul.f32 %v2621, 1.442695
    %v2623 = vpow.pop %v2622
    %v2624 = vadd.f32 %v2623, 1.0
    %v2625 = vrcp.pop %v2624
    %v2626 = vmul.f32 1.0, %v2625
    %v2627 = vmul.f32 %v2619, %v2292
    %v2628 = vmul.f32 %v2613, %v2620
    %v2629 = vadd.f32 %v2627, %v2628
    %v2630 = vtanh.pop %v2629
    %v2631 = vmul.f32 %v2626, %v2630
    %s2632 = scalar_lea.vmem [#allocation3], 40
    %2633 = vst.msk [vmem:[%s2632] sm:$0xff] %vm230, %v2631
    %s2634 = scalar_lea.vmem [#allocation2], 48
    %v2635 = vld [vmem:[%s2634] sm:$0xff]
    %v2636 = vld [vmem:[#allocation9] sm:$0xff]
    %v2637 = vld [vmem:[#allocation9 + $0x8] sm:$0xff]
    %v2638 = vld [vmem:[#allocation9 + $0x10] sm:$0xff]
    %v2639 = vld [vmem:[#allocation9 + $0x18] sm:$0xff]
    %v2641 = vsel %vm230, %v2631, 0
    %2643 = vmatprep.subr.mxu0 0.0
    %2644 = vmatpush1.msra.mxu0 %v2636
    %2645 = vmatprep.subr.mxu0 0.0
    %2646 = vmatpush1.msra.mxu0 %v2637
    %2647 = vmatprep.subr.mxu0 0.0
    %2648 = vmatpush1.msra.mxu0 %v2638
    %2649 = vmatprep.subr.mxu0 0.0
    %2650 = vmatpush1.msra.mxu0 %v2639
    %2651 = vmatprep.subr.mxu0 0.0
    %2652 = vmatpush1.msra.mxu0 0.0
    %2653 = vmatprep.subr.mxu0 0.0
    %2654 = vmatpush1.msra.mxu0 0.0
    %2655 = vmatprep.subr.mxu0 0.0
    %2656 = vmatpush1.msra.mxu0 0.0
    %2657 = vmatprep.subr.mxu0 0.0
    %2658 = vmatpush1.msra.mxu0 0.0
    %2659 = vmatprep.subr.mxu0 0.0
    %2660 = vmatpush1.msra.mxu0 0.0
    %2661 = vmatprep.subr.mxu0 0.0
    %2662 = vmatpush1.msra.mxu0 0.0
    %2663 = vmatprep.subr.mxu0 0.0
    %2664 = vmatpush1.msra.mxu0 0.0
    %2665 = vmatprep.subr.mxu0 0.0
    %2666 = vmatpush1.msra.mxu0 0.0
    %2667 = vmatprep.subr.mxu0 0.0
    %2668 = vmatpush1.msra.mxu0 0.0
    %2669 = vmatprep.subr.mxu0 0.0
    %2670 = vmatpush1.msra.mxu0 0.0
    %2671 = vmatprep.subr.mxu0 0.0
    %2672 = vmatpush1.msra.mxu0 0.0
    %2673 = vmatprep.subr.mxu0 0.0
    %2674 = vmatpush1.msra.mxu0 0.0
    %2675 = vmatprep.subr.mxu0 0.0
    %2676 = vmatpush1.msra.mxu0 0.0
    %2677 = vmatprep.subr.mxu0 0.0
    %2678 = vmatpush1.msra.mxu0 0.0
    %2679 = vmatprep.subr.mxu0 0.0
    %2680 = vmatpush1.msra.mxu0 0.0
    %2681 = vmatprep.subr.mxu0 0.0
    %2682 = vmatpush1.msra.mxu0 0.0
    %2683 = vmatprep.subr.mxu0 0.0
    %2684 = vmatpush1.msra.mxu0 0.0
    %2685 = vmatprep.subr.mxu0 0.0
    %2686 = vmatpush1.msra.mxu0 0.0
    %2687 = vmatprep.subr.mxu0 0.0
    %2688 = vmatpush1.msra.mxu0 0.0
    %2689 = vmatprep.subr.mxu0 0.0
    %2690 = vmatpush1.msra.mxu0 0.0
    %2691 = vmatprep.subr.mxu0 0.0
    %2692 = vmatpush1.msra.mxu0 0.0
    %2693 = vmatprep.subr.mxu0 0.0
    %2694 = vmatpush1.msra.mxu0 0.0
    %2695 = vmatprep.subr.mxu0 0.0
    %2696 = vmatpush1.msra.mxu0 0.0
    %2697 = vmatprep.subr.mxu0 0.0
    %2698 = vmatpush1.msra.mxu0 0.0
    %2699 = vmatprep.subr.mxu0 0.0
    %2700 = vmatpush1.msra.mxu0 0.0
    %2701 = vmatprep.subr.mxu0 0.0
    %2702 = vmatpush1.msra.mxu0 0.0
    %2703 = vmatprep.subr.mxu0 0.0
    %2704 = vmatpush1.msra.mxu0 0.0
    %2705 = vmatprep.subr.mxu0 0.0
    %2706 = vmatpush1.msra.mxu0 0.0
    %2707 = vmatprep.mubr.f32.mxu0 0.0
    %2708 = vmatmul.mubr.f32.gmra.mrb[0].mxu0 %v2641
    %v2709 = vpop.f32.mrb[0].mxu0
    %v2710 = vadd.f32 0.0, %v2709
    %v2711 = vpop.f32.mrb[0].mxu0
    %2712 = vdwg.mxu0
    %v2713 = vadd.f32 %v2635, %v2710
    %s2714 = scalar_lea.vmem [#allocation2], 112
    %v2715 = vld [vmem:[%s2714] sm:$0xff]
    %v2716 = vld [vmem:[%s694] sm:$0xff]
    %v2717 = vld [vmem:[%s694 + $0x8] sm:$0xff]
    %v2718 = vld [vmem:[%s694 + $0x10] sm:$0xff]
    %v2719 = vld [vmem:[%s694 + $0x18] sm:$0xff]
    %2720 = vmatprep.subr.mxu0 0.0
    %2721 = vmatpush1.msra.mxu0 %v2716
    %2722 = vmatprep.subr.mxu0 0.0
    %2723 = vmatpush1.msra.mxu0 %v2717
    %2724 = vmatprep.subr.mxu0 0.0
    %2725 = vmatpush1.msra.mxu0 %v2718
    %2726 = vmatprep.subr.mxu0 0.0
    %2727 = vmatpush1.msra.mxu0 %v2719
    %2728 = vmatprep.subr.mxu0 0.0
    %2729 = vmatpush1.msra.mxu0 0.0
    %2730 = vmatprep.subr.mxu0 0.0
    %2731 = vmatpush1.msra.mxu0 0.0
    %2732 = vmatprep.subr.mxu0 0.0
    %2733 = vmatpush1.msra.mxu0 0.0
    %2734 = vmatprep.subr.mxu0 0.0
    %2735 = vmatpush1.msra.mxu0 0.0
    %2736 = vmatprep.subr.mxu0 0.0
    %2737 = vmatpush1.msra.mxu0 0.0
    %2738 = vmatprep.subr.mxu0 0.0
    %2739 = vmatpush1.msra.mxu0 0.0
    %2740 = vmatprep.subr.mxu0 0.0
    %2741 = vmatpush1.msra.mxu0 0.0
    %2742 = vmatprep.subr.mxu0 0.0
    %2743 = vmatpush1.msra.mxu0 0.0
    %2744 = vmatprep.subr.mxu0 0.0
    %2745 = vmatpush1.msra.mxu0 0.0
    %2746 = vmatprep.subr.mxu0 0.0
    %2747 = vmatpush1.msra.mxu0 0.0
    %2748 = vmatprep.subr.mxu0 0.0
    %2749 = vmatpush1.msra.mxu0 0.0
    %2750 = vmatprep.subr.mxu0 0.0
    %2751 = vmatpush1.msra.mxu0 0.0
    %2752 = vmatprep.subr.mxu0 0.0
    %2753 = vmatpush1.msra.mxu0 0.0
    %2754 = vmatprep.subr.mxu0 0.0
    %2755 = vmatpush1.msra.mxu0 0.0
    %2756 = vmatprep.subr.mxu0 0.0
    %2757 = vmatpush1.msra.mxu0 0.0
    %2758 = vmatprep.subr.mxu0 0.0
    %2759 = vmatpush1.msra.mxu0 0.0
    %2760 = vmatprep.subr.mxu0 0.0
    %2761 = vmatpush1.msra.mxu0 0.0
    %2762 = vmatprep.subr.mxu0 0.0
    %2763 = vmatpush1.msra.mxu0 0.0
    %2764 = vmatprep.subr.mxu0 0.0
    %2765 = vmatpush1.msra.mxu0 0.0
    %2766 = vmatprep.subr.mxu0 0.0
    %2767 = vmatpush1.msra.mxu0 0.0
    %2768 = vmatprep.subr.mxu0 0.0
    %2769 = vmatpush1.msra.mxu0 0.0
    %2770 = vmatprep.subr.mxu0 0.0
    %2771 = vmatpush1.msra.mxu0 0.0
    %2772 = vmatprep.subr.mxu0 0.0
    %2773 = vmatpush1.msra.mxu0 0.0
    %2774 = vmatprep.subr.mxu0 0.0
    %2775 = vmatpush1.msra.mxu0 0.0
    %2776 = vmatprep.subr.mxu0 0.0
    %2777 = vmatpush1.msra.mxu0 0.0
    %2778 = vmatprep.subr.mxu0 0.0
    %2779 = vmatpush1.msra.mxu0 0.0
    %2780 = vmatprep.subr.mxu0 0.0
    %2781 = vmatpush1.msra.mxu0 0.0
    %2782 = vmatprep.subr.mxu0 0.0
    %2783 = vmatpush1.msra.mxu0 0.0
    %2784 = vmatprep.mubr.f32.mxu0 0.0
    %2785 = vmatmul.mubr.f32.gmra.mrb[0].mxu0 %v2641
    %v2786 = vpop.f32.mrb[0].mxu0
    %v2787 = vadd.f32 0.0, %v2786
    %v2788 = vpop.f32.mrb[0].mxu0
    %2789 = vdwg.mxu0
    %v2790 = vadd.f32 %v2715, %v2787
    %s2791 = scalar_lea.vmem [#allocation2], 176
    %v2792 = vld [vmem:[%s2791] sm:$0xff]
    %v2793 = vld [vmem:[%s771] sm:$0xff]
    %v2794 = vld [vmem:[%s771 + $0x8] sm:$0xff]
    %v2795 = vld [vmem:[%s771 + $0x10] sm:$0xff]
    %v2796 = vld [vmem:[%s771 + $0x18] sm:$0xff]
    %2797 = vmatprep.subr.mxu0 0.0
    %2798 = vmatpush1.msra.mxu0 %v2793
    %2799 = vmatprep.subr.mxu0 0.0
    %2800 = vmatpush1.msra.mxu0 %v2794
    %2801 = vmatprep.subr.mxu0 0.0
    %2802 = vmatpush1.msra.mxu0 %v2795
    %2803 = vmatprep.subr.mxu0 0.0
    %2804 = vmatpush1.msra.mxu0 %v2796
    %2805 = vmatprep.subr.mxu0 0.0
    %2806 = vmatpush1.msra.mxu0 0.0
    %2807 = vmatprep.subr.mxu0 0.0
    %2808 = vmatpush1.msra.mxu0 0.0
    %2809 = vmatprep.subr.mxu0 0.0
    %2810 = vmatpush1.msra.mxu0 0.0
    %2811 = vmatprep.subr.mxu0 0.0
    %2812 = vmatpush1.msra.mxu0 0.0
    %2813 = vmatprep.subr.mxu0 0.0
    %2814 = vmatpush1.msra.mxu0 0.0
    %2815 = vmatprep.subr.mxu0 0.0
    %2816 = vmatpush1.msra.mxu0 0.0
    %2817 = vmatprep.subr.mxu0 0.0
    %2818 = vmatpush1.msra.mxu0 0.0
    %2819 = vmatprep.subr.mxu0 0.0
    %2820 = vmatpush1.msra.mxu0 0.0
    %2821 = vmatprep.subr.mxu0 0.0
    %2822 = vmatpush1.msra.mxu0 0.0
    %2823 = vmatprep.subr.mxu0 0.0
    %2824 = vmatpush1.msra.mxu0 0.0
    %2825 = vmatprep.subr.mxu0 0.0
    %2826 = vmatpush1.msra.mxu0 0.0
    %2827 = vmatprep.subr.mxu0 0.0
    %2828 = vmatpush1.msra.mxu0 0.0
    %2829 = vmatprep.subr.mxu0 0.0
    %2830 = vmatpush1.msra.mxu0 0.0
    %2831 = vmatprep.subr.mxu0 0.0
    %2832 = vmatpush1.msra.mxu0 0.0
    %2833 = vmatprep.subr.mxu0 0.0
    %2834 = vmatpush1.msra.mxu0 0.0
    %2835 = vmatprep.subr.mxu0 0.0
    %2836 = vmatpush1.msra.mxu0 0.0
    %2837 = vmatprep.subr.mxu0 0.0
    %2838 = vmatpush1.msra.mxu0 0.0
    %2839 = vmatprep.subr.mxu0 0.0
    %2840 = vmatpush1.msra.mxu0 0.0
    %2841 = vmatprep.subr.mxu0 0.0
    %2842 = vmatpush1.msra.mxu0 0.0
    %2843 = vmatprep.subr.mxu0 0.0
    %2844 = vmatpush1.msra.mxu0 0.0
    %2845 = vmatprep.subr.mxu0 0.0
    %2846 = vmatpush1.msra.mxu0 0.0
    %2847 = vmatprep.subr.mxu0 0.0
    %2848 = vmatpush1.msra.mxu0 0.0
    %2849 = vmatprep.subr.mxu0 0.0
    %2850 = vmatpush1.msra.mxu0 0.0
    %2851 = vmatprep.subr.mxu0 0.0
    %2852 = vmatpush1.msra.mxu0 0.0
    %2853 = vmatprep.subr.mxu0 0.0
    %2854 = vmatpush1.msra.mxu0 0.0
    %2855 = vmatprep.subr.mxu0 0.0
    %2856 = vmatpush1.msra.mxu0 0.0
    %2857 = vmatprep.subr.mxu0 0.0
    %2858 = vmatpush1.msra.mxu0 0.0
    %2859 = vmatprep.subr.mxu0 0.0
    %2860 = vmatpush1.msra.mxu0 0.0
    %2861 = vmatprep.mubr.f32.mxu0 0.0
    %2862 = vmatmul.mubr.f32.gmra.mrb[0].mxu0 %v2641
    %v2863 = vpop.f32.mrb[0].mxu0
    %v2864 = vadd.f32 0.0, %v2863
    %v2865 = vpop.f32.mrb[0].mxu0
    %2866 = vdwg.mxu0
    %v2867 = vadd.f32 %v2792, %v2864
    %s2868 = scalar_lea.vmem [#allocation2], 240
    %v2869 = vld [vmem:[%s2868] sm:$0xff]
    %v2870 = vld [vmem:[%s848] sm:$0xff]
    %v2871 = vld [vmem:[%s848 + $0x8] sm:$0xff]
    %v2872 = vld [vmem:[%s848 + $0x10] sm:$0xff]
    %v2873 = vld [vmem:[%s848 + $0x18] sm:$0xff]
    %2874 = vmatprep.subr.mxu0 0.0
    %2875 = vmatpush1.msra.mxu0 %v2870
    %2876 = vmatprep.subr.mxu0 0.0
    %2877 = vmatpush1.msra.mxu0 %v2871
    %2878 = vmatprep.subr.mxu0 0.0
    %2879 = vmatpush1.msra.mxu0 %v2872
    %2880 = vmatprep.subr.mxu0 0.0
    %2881 = vmatpush1.msra.mxu0 %v2873
    %2882 = vmatprep.subr.mxu0 0.0
    %2883 = vmatpush1.msra.mxu0 0.0
    %2884 = vmatprep.subr.mxu0 0.0
    %2885 = vmatpush1.msra.mxu0 0.0
    %2886 = vmatprep.subr.mxu0 0.0
    %2887 = vmatpush1.msra.mxu0 0.0
    %2888 = vmatprep.subr.mxu0 0.0
    %2889 = vmatpush1.msra.mxu0 0.0
    %2890 = vmatprep.subr.mxu0 0.0
    %2891 = vmatpush1.msra.mxu0 0.0
    %2892 = vmatprep.subr.mxu0 0.0
    %2893 = vmatpush1.msra.mxu0 0.0
    %2894 = vmatprep.subr.mxu0 0.0
    %2895 = vmatpush1.msra.mxu0 0.0
    %2896 = vmatprep.subr.mxu0 0.0
    %2897 = vmatpush1.msra.mxu0 0.0
    %2898 = vmatprep.subr.mxu0 0.0
    %2899 = vmatpush1.msra.mxu0 0.0
    %2900 = vmatprep.subr.mxu0 0.0
    %2901 = vmatpush1.msra.mxu0 0.0
    %2902 = vmatprep.subr.mxu0 0.0
    %2903 = vmatpush1.msra.mxu0 0.0
    %2904 = vmatprep.subr.mxu0 0.0
    %2905 = vmatpush1.msra.mxu0 0.0
    %2906 = vmatprep.subr.mxu0 0.0
    %2907 = vmatpush1.msra.mxu0 0.0
    %2908 = vmatprep.subr.mxu0 0.0
    %2909 = vmatpush1.msra.mxu0 0.0
    %2910 = vmatprep.subr.mxu0 0.0
    %2911 = vmatpush1.msra.mxu0 0.0
    %2912 = vmatprep.subr.mxu0 0.0
    %2913 = vmatpush1.msra.mxu0 0.0
    %2914 = vmatprep.subr.mxu0 0.0
    %2915 = vmatpush1.msra.mxu0 0.0
    %2916 = vmatprep.subr.mxu0 0.0
    %2917 = vmatpush1.msra.mxu0 0.0
    %2918 = vmatprep.subr.mxu0 0.0
    %2919 = vmatpush1.msra.mxu0 0.0
    %2920 = vmatprep.subr.mxu0 0.0
    %2921 = vmatpush1.msra.mxu0 0.0
    %2922 = vmatprep.subr.mxu0 0.0
    %2923 = vmatpush1.msra.mxu0 0.0
    %2924 = vmatprep.subr.mxu0 0.0
    %2925 = vmatpush1.msra.mxu0 0.0
    %2926 = vmatprep.subr.mxu0 0.0
    %2927 = vmatpush1.msra.mxu0 0.0
    %2928 = vmatprep.subr.mxu0 0.0
    %2929 = vmatpush1.msra.mxu0 0.0
    %2930 = vmatprep.subr.mxu0 0.0
    %2931 = vmatpush1.msra.mxu0 0.0
    %2932 = vmatprep.subr.mxu0 0.0
    %2933 = vmatpush1.msra.mxu0 0.0
    %2934 = vmatprep.subr.mxu0 0.0
    %2935 = vmatpush1.msra.mxu0 0.0
    %2936 = vmatprep.subr.mxu0 0.0
    %2937 = vmatpush1.msra.mxu0 0.0
    %2938 = vmatprep.mubr.f32.mxu0 0.0
    %2939 = vmatmul.mubr.f32.gmra.mrb[0].mxu0 %v2641
    %v2940 = vpop.f32.mrb[0].mxu0
    %v2941 = vadd.f32 0.0, %v2940
    %v2942 = vpop.f32.mrb[0].mxu0
    %2943 = vdwg.mxu0
    %v2944 = vadd.f32 %v2869, %v2941
    %v2945 = vxor.u32 %v2713, 2147483648
    %v2946 = vmul.f32 %v2945, 1.442695
    %v2947 = vpow.pop %v2946
    %v2948 = vadd.f32 %v2947, 1.0
    %v2949 = vrcp.pop %v2948
    %v2950 = vmul.f32 1.0, %v2949
    %v2951 = vxor.u32 %v2790, 2147483648
    %v2952 = vmul.f32 %v2951, 1.442695
    %v2953 = vpow.pop %v2952
    %v2954 = vadd.f32 %v2953, 1.0
    %v2955 = vrcp.pop %v2954
    %v2956 = vmul.f32 1.0, %v2955
    %v2957 = vtanh.pop %v2867
    %v2958 = vxor.u32 %v2944, 2147483648
    %v2959 = vmul.f32 %v2958, 1.442695
    %v2960 = vpow.pop %v2959
    %v2961 = vadd.f32 %v2960, 1.0
    %v2962 = vrcp.pop %v2961
    %v2963 = vmul.f32 1.0, %v2962
    %v2964 = vmul.f32 %v2956, %v2629
    %v2965 = vmul.f32 %v2950, %v2957
    %v2966 = vadd.f32 %v2964, %v2965
    %v2967 = vtanh.pop %v2966
    %v2968 = vmul.f32 %v2963, %v2967
    %s2969 = scalar_lea.vmem [#allocation3], 48
    %2970 = vst.msk [vmem:[%s2969] sm:$0xff] %vm230, %v2968
    %s2971 = scalar_lea.vmem [#allocation2], 56
    %v2972 = vld [vmem:[%s2971] sm:$0xff]
    %v2973 = vld [vmem:[#allocation9] sm:$0xff]
    %v2974 = vld [vmem:[#allocation9 + $0x8] sm:$0xff]
    %v2975 = vld [vmem:[#allocation9 + $0x10] sm:$0xff]
    %v2976 = vld [vmem:[#allocation9 + $0x18] sm:$0xff]
    %v2978 = vsel %vm230, %v2968, 0
    %2980 = vmatprep.subr.mxu0 0.0
    %2981 = vmatpush1.msra.mxu0 %v2973
    %2982 = vmatprep.subr.mxu0 0.0
    %2983 = vmatpush1.msra.mxu0 %v2974
    %2984 = vmatprep.subr.mxu0 0.0
    %2985 = vmatpush1.msra.mxu0 %v2975
    %2986 = vmatprep.subr.mxu0 0.0
    %2987 = vmatpush1.msra.mxu0 %v2976
    %2988 = vmatprep.subr.mxu0 0.0
    %2989 = vmatpush1.msra.mxu0 0.0
    %2990 = vmatprep.subr.mxu0 0.0
    %2991 = vmatpush1.msra.mxu0 0.0
    %2992 = vmatprep.subr.mxu0 0.0
    %2993 = vmatpush1.msra.mxu0 0.0
    %2994 = vmatprep.subr.mxu0 0.0
    %2995 = vmatpush1.msra.mxu0 0.0
    %2996 = vmatprep.subr.mxu0 0.0
    %2997 = vmatpush1.msra.mxu0 0.0
    %2998 = vmatprep.subr.mxu0 0.0
    %2999 = vmatpush1.msra.mxu0 0.0
    %3000 = vmatprep.subr.mxu0 0.0
    %3001 = vmatpush1.msra.mxu0 0.0
    %3002 = vmatprep.subr.mxu0 0.0
    %3003 = vmatpush1.msra.mxu0 0.0
    %3004 = vmatprep.subr.mxu0 0.0
    %3005 = vmatpush1.msra.mxu0 0.0
    %3006 = vmatprep.subr.mxu0 0.0
    %3007 = vmatpush1.msra.mxu0 0.0
    %3008 = vmatprep.subr.mxu0 0.0
    %3009 = vmatpush1.msra.mxu0 0.0
    %3010 = vmatprep.subr.mxu0 0.0
    %3011 = vmatpush1.msra.mxu0 0.0
    %3012 = vmatprep.subr.mxu0 0.0
    %3013 = vmatpush1.msra.mxu0 0.0
    %3014 = vmatprep.subr.mxu0 0.0
    %3015 = vmatpush1.msra.mxu0 0.0
    %3016 = vmatprep.subr.mxu0 0.0
    %3017 = vmatpush1.msra.mxu0 0.0
    %3018 = vmatprep.subr.mxu0 0.0
    %3019 = vmatpush1.msra.mxu0 0.0
    %3020 = vmatprep.subr.mxu0 0.0
    %3021 = vmatpush1.msra.mxu0 0.0
    %3022 = vmatprep.subr.mxu0 0.0
    %3023 = vmatpush1.msra.mxu0 0.0
    %3024 = vmatprep.subr.mxu0 0.0
    %3025 = vmatpush1.msra.mxu0 0.0
    %3026 = vmatprep.subr.mxu0 0.0
    %3027 = vmatpush1.msra.mxu0 0.0
    %3028 = vmatprep.subr.mxu0 0.0
    %3029 = vmatpush1.msra.mxu0 0.0
    %3030 = vmatprep.subr.mxu0 0.0
    %3031 = vmatpush1.msra.mxu0 0.0
    %3032 = vmatprep.subr.mxu0 0.0
    %3033 = vmatpush1.msra.mxu0 0.0
    %3034 = vmatprep.subr.mxu0 0.0
    %3035 = vmatpush1.msra.mxu0 0.0
    %3036 = vmatprep.subr.mxu0 0.0
    %3037 = vmatpush1.msra.mxu0 0.0
    %3038 = vmatprep.subr.mxu0 0.0
    %3039 = vmatpush1.msra.mxu0 0.0
    %3040 = vmatprep.subr.mxu0 0.0
    %3041 = vmatpush1.msra.mxu0 0.0
    %3042 = vmatprep.subr.mxu0 0.0
    %3043 = vmatpush1.msra.mxu0 0.0
    %3044 = vmatprep.mubr.f32.mxu0 0.0
    %3045 = vmatmul.mubr.f32.gmra.mrb[0].mxu0 %v2978
    %v3046 = vpop.f32.mrb[0].mxu0
    %v3047 = vadd.f32 0.0, %v3046
    %v3048 = vpop.f32.mrb[0].mxu0
    %3049 = vdwg.mxu0
    %v3050 = vadd.f32 %v2972, %v3047
    %s3051 = scalar_lea.vmem [#allocation2], 120
    %v3052 = vld [vmem:[%s3051] sm:$0xff]
    %v3053 = vld [vmem:[%s694] sm:$0xff]
    %v3054 = vld [vmem:[%s694 + $0x8] sm:$0xff]
    %v3055 = vld [vmem:[%s694 + $0x10] sm:$0xff]
    %v3056 = vld [vmem:[%s694 + $0x18] sm:$0xff]
    %3057 = vmatprep.subr.mxu0 0.0
    %3058 = vmatpush1.msra.mxu0 %v3053
    %3059 = vmatprep.subr.mxu0 0.0
    %3060 = vmatpush1.msra.mxu0 %v3054
    %3061 = vmatprep.subr.mxu0 0.0
    %3062 = vmatpush1.msra.mxu0 %v3055
    %3063 = vmatprep.subr.mxu0 0.0
    %3064 = vmatpush1.msra.mxu0 %v3056
    %3065 = vmatprep.subr.mxu0 0.0
    %3066 = vmatpush1.msra.mxu0 0.0
    %3067 = vmatprep.subr.mxu0 0.0
    %3068 = vmatpush1.msra.mxu0 0.0
    %3069 = vmatprep.subr.mxu0 0.0
    %3070 = vmatpush1.msra.mxu0 0.0
    %3071 = vmatprep.subr.mxu0 0.0
    %3072 = vmatpush1.msra.mxu0 0.0
    %3073 = vmatprep.subr.mxu0 0.0
    %3074 = vmatpush1.msra.mxu0 0.0
    %3075 = vmatprep.subr.mxu0 0.0
    %3076 = vmatpush1.msra.mxu0 0.0
    %3077 = vmatprep.subr.mxu0 0.0
    %3078 = vmatpush1.msra.mxu0 0.0
    %3079 = vmatprep.subr.mxu0 0.0
    %3080 = vmatpush1.msra.mxu0 0.0
    %3081 = vmatprep.subr.mxu0 0.0
    %3082 = vmatpush1.msra.mxu0 0.0
    %3083 = vmatprep.subr.mxu0 0.0
    %3084 = vmatpush1.msra.mxu0 0.0
    %3085 = vmatprep.subr.mxu0 0.0
    %3086 = vmatpush1.msra.mxu0 0.0
    %3087 = vmatprep.subr.mxu0 0.0
    %3088 = vmatpush1.msra.mxu0 0.0
    %3089 = vmatprep.subr.mxu0 0.0
    %3090 = vmatpush1.msra.mxu0 0.0
    %3091 = vmatprep.subr.mxu0 0.0
    %3092 = vmatpush1.msra.mxu0 0.0
    %3093 = vmatprep.subr.mxu0 0.0
    %3094 = vmatpush1.msra.mxu0 0.0
    %3095 = vmatprep.subr.mxu0 0.0
    %3096 = vmatpush1.msra.mxu0 0.0
    %3097 = vmatprep.subr.mxu0 0.0
    %3098 = vmatpush1.msra.mxu0 0.0
    %3099 = vmatprep.subr.mxu0 0.0
    %3100 = vmatpush1.msra.mxu0 0.0
    %3101 = vmatprep.subr.mxu0 0.0
    %3102 = vmatpush1.msra.mxu0 0.0
    %3103 = vmatprep.subr.mxu0 0.0
    %3104 = vmatpush1.msra.mxu0 0.0
    %3105 = vmatprep.subr.mxu0 0.0
    %3106 = vmatpush1.msra.mxu0 0.0
    %3107 = vmatprep.subr.mxu0 0.0
    %3108 = vmatpush1.msra.mxu0 0.0
    %3109 = vmatprep.subr.mxu0 0.0
    %3110 = vmatpush1.msra.mxu0 0.0
    %3111 = vmatprep.subr.mxu0 0.0
    %3112 = vmatpush1.msra.mxu0 0.0
    %3113 = vmatprep.subr.mxu0 0.0
    %3114 = vmatpush1.msra.mxu0 0.0
    %3115 = vmatprep.subr.mxu0 0.0
    %3116 = vmatpush1.msra.mxu0 0.0
    %3117 = vmatprep.subr.mxu0 0.0
    %3118 = vmatpush1.msra.mxu0 0.0
    %3119 = vmatprep.subr.mxu0 0.0
    %3120 = vmatpush1.msra.mxu0 0.0
    %3121 = vmatprep.mubr.f32.mxu0 0.0
    %3122 = vmatmul.mubr.f32.gmra.mrb[0].mxu0 %v2978
    %v3123 = vpop.f32.mrb[0].mxu0
    %v3124 = vadd.f32 0.0, %v3123
    %v3125 = vpop.f32.mrb[0].mxu0
    %3126 = vdwg.mxu0
    %v3127 = vadd.f32 %v3052, %v3124
    %s3128 = scalar_lea.vmem [#allocation2], 184
    %v3129 = vld [vmem:[%s3128] sm:$0xff]
    %v3130 = vld [vmem:[%s771] sm:$0xff]
    %v3131 = vld [vmem:[%s771 + $0x8] sm:$0xff]
    %v3132 = vld [vmem:[%s771 + $0x10] sm:$0xff]
    %v3133 = vld [vmem:[%s771 + $0x18] sm:$0xff]
    %3134 = vmatprep.subr.mxu0 0.0
    %3135 = vmatpush1.msra.mxu0 %v3130
    %3136 = vmatprep.subr.mxu0 0.0
    %3137 = vmatpush1.msra.mxu0 %v3131
    %3138 = vmatprep.subr.mxu0 0.0
    %3139 = vmatpush1.msra.mxu0 %v3132
    %3140 = vmatprep.subr.mxu0 0.0
    %3141 = vmatpush1.msra.mxu0 %v3133
    %3142 = vmatprep.subr.mxu0 0.0
    %3143 = vmatpush1.msra.mxu0 0.0
    %3144 = vmatprep.subr.mxu0 0.0
    %3145 = vmatpush1.msra.mxu0 0.0
    %3146 = vmatprep.subr.mxu0 0.0
    %3147 = vmatpush1.msra.mxu0 0.0
    %3148 = vmatprep.subr.mxu0 0.0
    %3149 = vmatpush1.msra.mxu0 0.0
    %3150 = vmatprep.subr.mxu0 0.0
    %3151 = vmatpush1.msra.mxu0 0.0
    %3152 = vmatprep.subr.mxu0 0.0
    %3153 = vmatpush1.msra.mxu0 0.0
    %3154 = vmatprep.subr.mxu0 0.0
    %3155 = vmatpush1.msra.mxu0 0.0
    %3156 = vmatprep.subr.mxu0 0.0
    %3157 = vmatpush1.msra.mxu0 0.0
    %3158 = vmatprep.subr.mxu0 0.0
    %3159 = vmatpush1.msra.mxu0 0.0
    %3160 = vmatprep.subr.mxu0 0.0
    %3161 = vmatpush1.msra.mxu0 0.0
    %3162 = vmatprep.subr.mxu0 0.0
    %3163 = vmatpush1.msra.mxu0 0.0
    %3164 = vmatprep.subr.mxu0 0.0
    %3165 = vmatpush1.msra.mxu0 0.0
    %3166 = vmatprep.subr.mxu0 0.0
    %3167 = vmatpush1.msra.mxu0 0.0
    %3168 = vmatprep.subr.mxu0 0.0
    %3169 = vmatpush1.msra.mxu0 0.0
    %3170 = vmatprep.subr.mxu0 0.0
    %3171 = vmatpush1.msra.mxu0 0.0
    %3172 = vmatprep.subr.mxu0 0.0
    %3173 = vmatpush1.msra.mxu0 0.0
    %3174 = vmatprep.subr.mxu0 0.0
    %3175 = vmatpush1.msra.mxu0 0.0
    %3176 = vmatprep.subr.mxu0 0.0
    %3177 = vmatpush1.msra.mxu0 0.0
    %3178 = vmatprep.subr.mxu0 0.0
    %3179 = vmatpush1.msra.mxu0 0.0
    %3180 = vmatprep.subr.mxu0 0.0
    %3181 = vmatpush1.msra.mxu0 0.0
    %3182 = vmatprep.subr.mxu0 0.0
    %3183 = vmatpush1.msra.mxu0 0.0
    %3184 = vmatprep.subr.mxu0 0.0
    %3185 = vmatpush1.msra.mxu0 0.0
    %3186 = vmatprep.subr.mxu0 0.0
    %3187 = vmatpush1.msra.mxu0 0.0
    %3188 = vmatprep.subr.mxu0 0.0
    %3189 = vmatpush1.msra.mxu0 0.0
    %3190 = vmatprep.subr.mxu0 0.0
    %3191 = vmatpush1.msra.mxu0 0.0
    %3192 = vmatprep.subr.mxu0 0.0
    %3193 = vmatpush1.msra.mxu0 0.0
    %3194 = vmatprep.subr.mxu0 0.0
    %3195 = vmatpush1.msra.mxu0 0.0
    %3196 = vmatprep.subr.mxu0 0.0
    %3197 = vmatpush1.msra.mxu0 0.0
    %3198 = vmatprep.mubr.f32.mxu0 0.0
    %3199 = vmatmul.mubr.f32.gmra.mrb[0].mxu0 %v2978
    %v3200 = vpop.f32.mrb[0].mxu0
    %v3201 = vadd.f32 0.0, %v3200
    %v3202 = vpop.f32.mrb[0].mxu0
    %3203 = vdwg.mxu0
    %v3204 = vadd.f32 %v3129, %v3201
    %s3205 = scalar_lea.vmem [#allocation2], 248
    %v3206 = vld [vmem:[%s3205] sm:$0xff]
    %v3207 = vld [vmem:[%s848] sm:$0xff]
    %v3208 = vld [vmem:[%s848 + $0x8] sm:$0xff]
    %v3209 = vld [vmem:[%s848 + $0x10] sm:$0xff]
    %v3210 = vld [vmem:[%s848 + $0x18] sm:$0xff]
    %3211 = vmatprep.subr.mxu0 0.0
    %3212 = vmatpush1.msra.mxu0 %v3207
    %3213 = vmatprep.subr.mxu0 0.0
    %3214 = vmatpush1.msra.mxu0 %v3208
    %3215 = vmatprep.subr.mxu0 0.0
    %3216 = vmatpush1.msra.mxu0 %v3209
    %3217 = vmatprep.subr.mxu0 0.0
    %3218 = vmatpush1.msra.mxu0 %v3210
    %3219 = vmatprep.subr.mxu0 0.0
    %3220 = vmatpush1.msra.mxu0 0.0
    %3221 = vmatprep.subr.mxu0 0.0
    %3222 = vmatpush1.msra.mxu0 0.0
    %3223 = vmatprep.subr.mxu0 0.0
    %3224 = vmatpush1.msra.mxu0 0.0
    %3225 = vmatprep.subr.mxu0 0.0
    %3226 = vmatpush1.msra.mxu0 0.0
    %3227 = vmatprep.subr.mxu0 0.0
    %3228 = vmatpush1.msra.mxu0 0.0
    %3229 = vmatprep.subr.mxu0 0.0
    %3230 = vmatpush1.msra.mxu0 0.0
    %3231 = vmatprep.subr.mxu0 0.0
    %3232 = vmatpush1.msra.mxu0 0.0
    %3233 = vmatprep.subr.mxu0 0.0
    %3234 = vmatpush1.msra.mxu0 0.0
    %3235 = vmatprep.subr.mxu0 0.0
    %3236 = vmatpush1.msra.mxu0 0.0
    %3237 = vmatprep.subr.mxu0 0.0
    %3238 = vmatpush1.msra.mxu0 0.0
    %3239 = vmatprep.subr.mxu0 0.0
    %3240 = vmatpush1.msra.mxu0 0.0
    %3241 = vmatprep.subr.mxu0 0.0
    %3242 = vmatpush1.msra.mxu0 0.0
    %3243 = vmatprep.subr.mxu0 0.0
    %3244 = vmatpush1.msra.mxu0 0.0
    %3245 = vmatprep.subr.mxu0 0.0
    %3246 = vmatpush1.msra.mxu0 0.0
    %3247 = vmatprep.subr.mxu0 0.0
    %3248 = vmatpush1.msra.mxu0 0.0
    %3249 = vmatprep.subr.mxu0 0.0
    %3250 = vmatpush1.msra.mxu0 0.0
    %3251 = vmatprep.subr.mxu0 0.0
    %3252 = vmatpush1.msra.mxu0 0.0
    %3253 = vmatprep.subr.mxu0 0.0
    %3254 = vmatpush1.msra.mxu0 0.0
    %3255 = vmatprep.subr.mxu0 0.0
    %3256 = vmatpush1.msra.mxu0 0.0
    %3257 = vmatprep.subr.mxu0 0.0
    %3258 = vmatpush1.msra.mxu0 0.0
    %3259 = vmatprep.subr.mxu0 0.0
    %3260 = vmatpush1.msra.mxu0 0.0
    %3261 = vmatprep.subr.mxu0 0.0
    %3262 = vmatpush1.msra.mxu0 0.0
    %3263 = vmatprep.subr.mxu0 0.0
    %3264 = vmatpush1.msra.mxu0 0.0
    %3265 = vmatprep.subr.mxu0 0.0
    %3266 = vmatpush1.msra.mxu0 0.0
    %3267 = vmatprep.subr.mxu0 0.0
    %3268 = vmatpush1.msra.mxu0 0.0
    %3269 = vmatprep.subr.mxu0 0.0
    %3270 = vmatpush1.msra.mxu0 0.0
    %3271 = vmatprep.subr.mxu0 0.0
    %3272 = vmatpush1.msra.mxu0 0.0
    %3273 = vmatprep.subr.mxu0 0.0
    %3274 = vmatpush1.msra.mxu0 0.0
    %3275 = vmatprep.mubr.f32.mxu0 0.0
    %3276 = vmatmul.mubr.f32.gmra.mrb[0].mxu0 %v2978
    %v3277 = vpop.f32.mrb[0].mxu0
    %v3278 = vadd.f32 0.0, %v3277
    %v3279 = vpop.f32.mrb[0].mxu0
    %3280 = vdwg.mxu0
    %v3281 = vadd.f32 %v3206, %v3278
    %v3282 = vxor.u32 %v3050, 2147483648
    %v3283 = vmul.f32 %v3282, 1.442695
    %v3284 = vpow.pop %v3283
    %v3285 = vadd.f32 %v3284, 1.0
    %v3286 = vrcp.pop %v3285
    %v3287 = vmul.f32 1.0, %v3286
    %v3288 = vxor.u32 %v3127, 2147483648
    %v3289 = vmul.f32 %v3288, 1.442695
    %v3290 = vpow.pop %v3289
    %v3291 = vadd.f32 %v3290, 1.0
    %v3292 = vrcp.pop %v3291
    %v3293 = vmul.f32 1.0, %v3292
    %v3294 = vtanh.pop %v3204
    %v3295 = vxor.u32 %v3281, 2147483648
    %v3296 = vmul.f32 %v3295, 1.442695
    %v3297 = vpow.pop %v3296
    %v3298 = vadd.f32 %v3297, 1.0
    %v3299 = vrcp.pop %v3298
    %v3300 = vmul.f32 1.0, %v3299
    %v3301 = vmul.f32 %v3293, %v2966
    %v3302 = vmul.f32 %v3287, %v3294
    %v3303 = vadd.f32 %v3301, %v3302
    %v3304 = vtanh.pop %v3303
    %v3305 = vmul.f32 %v3300, %v3304
    %s3306 = scalar_lea.vmem [#allocation3], 56
    %3307 = vst.msk [vmem:[%s3306] sm:$0xff] %vm230, %v3305
    %v3308 = vld [vmem:[#allocation3] sm:$0xff]
    %v3309 = vld [vmem:[#allocation3 + $0x8] sm:$0xff]
    %v3310 = vld [vmem:[#allocation3 + $0x10] sm:$0xff]
    %v3311 = vld [vmem:[#allocation3 + $0x18] sm:$0xff]
    %v3312 = vld [vmem:[#allocation3 + $0x20] sm:$0xff]
    %v3313 = vld [vmem:[#allocation3 + $0x28] sm:$0xff]
    %v3314 = vld [vmem:[#allocation3 + $0x30] sm:$0xff]
    %v3315 = vld [vmem:[#allocation3 + $0x38] sm:$0xff]
    %v3316 = vld [vmem:[%s6] sm:$0xff]
    %v3317 = vld [vmem:[%s6 + $0x8] sm:$0xff]
    %v3318 = vld [vmem:[%s6 + $0x10] sm:$0xff]
    %v3319 = vld [vmem:[%s6 + $0x18] sm:$0xff]
    %v3320 = vld [vmem:[%s7] sm:$0x1]
    %v3322 = vlaneseq
    %v3323 = vshrl.u32 %v3322, 7
    %v3324 = vsub.s32 0, %v3323
    %v3325 = vrot.slane %v3320, %v3324
    %v3328 = vsel %vm230, %v3308, 0
    %v3331 = vsel %vm230, %v3309, 0
    %v3334 = vsel %vm230, %v3310, 0
    %v3337 = vsel %vm230, %v3311, 0
    %v3340 = vsel %vm230, %v3312, 0
    %v3343 = vsel %vm230, %v3313, 0
    %v3346 = vsel %vm230, %v3314, 0
    %v3349 = vsel %vm230, %v3315, 0
    %3351 = vmatprep.subr.mxu0 0.0
    %3352 = vmatpush1.msra.mxu0 %v3316
    %3353 = vmatprep.subr.mxu0 0.0
    %3354 = vmatpush1.msra.mxu0 %v3317
    %3355 = vmatprep.subr.mxu0 0.0
    %3356 = vmatpush1.msra.mxu0 %v3318
    %3357 = vmatprep.subr.mxu0 0.0
    %3358 = vmatpush1.msra.mxu0 %v3319
    %3359 = vmatprep.subr.mxu0 0.0
    %3360 = vmatpush1.msra.mxu0 0.0
    %3361 = vmatprep.subr.mxu0 0.0
    %3362 = vmatpush1.msra.mxu0 0.0
    %3363 = vmatprep.subr.mxu0 0.0
    %3364 = vmatpush1.msra.mxu0 0.0
    %3365 = vmatprep.subr.mxu0 0.0
    %3366 = vmatpush1.msra.mxu0 0.0
    %3367 = vmatprep.subr.mxu0 0.0
    %3368 = vmatpush1.msra.mxu0 0.0
    %3369 = vmatprep.subr.mxu0 0.0
    %3370 = vmatpush1.msra.mxu0 0.0
    %3371 = vmatprep.subr.mxu0 0.0
    %3372 = vmatpush1.msra.mxu0 0.0
    %3373 = vmatprep.subr.mxu0 0.0
    %3374 = vmatpush1.msra.mxu0 0.0
    %3375 = vmatprep.subr.mxu0 0.0
    %3376 = vmatpush1.msra.mxu0 0.0
    %3377 = vmatprep.subr.mxu0 0.0
    %3378 = vmatpush1.msra.mxu0 0.0
    %3379 = vmatprep.subr.mxu0 0.0
    %3380 = vmatpush1.msra.mxu0 0.0
    %3381 = vmatprep.subr.mxu0 0.0
    %3382 = vmatpush1.msra.mxu0 0.0
    %3383 = vmatprep.subr.mxu0 0.0
    %3384 = vmatpush1.msra.mxu0 0.0
    %3385 = vmatprep.subr.mxu0 0.0
    %3386 = vmatpush1.msra.mxu0 0.0
    %3387 = vmatprep.subr.mxu0 0.0
    %3388 = vmatpush1.msra.mxu0 0.0
    %3389 = vmatprep.subr.mxu0 0.0
    %3390 = vmatpush1.msra.mxu0 0.0
    %3391 = vmatprep.subr.mxu0 0.0
    %3392 = vmatpush1.msra.mxu0 0.0
    %3393 = vmatprep.subr.mxu0 0.0
    %3394 = vmatpush1.msra.mxu0 0.0
    %3395 = vmatprep.subr.mxu0 0.0
    %3396 = vmatpush1.msra.mxu0 0.0
    %3397 = vmatprep.subr.mxu0 0.0
    %3398 = vmatpush1.msra.mxu0 0.0
    %3399 = vmatprep.subr.mxu0 0.0
    %3400 = vmatpush1.msra.mxu0 0.0
    %3401 = vmatprep.subr.mxu0 0.0
    %3402 = vmatpush1.msra.mxu0 0.0
    %3403 = vmatprep.subr.mxu0 0.0
    %3404 = vmatpush1.msra.mxu0 0.0
    %3405 = vmatprep.subr.mxu0 0.0
    %3406 = vmatpush1.msra.mxu0 0.0
    %3407 = vmatprep.subr.mxu0 0.0
    %3408 = vmatpush1.msra.mxu0 0.0
    %3409 = vmatprep.subr.mxu0 0.0
    %3410 = vmatpush1.msra.mxu0 0.0
    %3411 = vmatprep.subr.mxu0 0.0
    %3412 = vmatpush1.msra.mxu0 0.0
    %3413 = vmatprep.subr.mxu0 0.0
    %3414 = vmatpush1.msra.mxu0 0.0
    %3415 = vmatprep.mubr.f32.mxu0 0.0
    %3416 = vmatmul.mubr.f32.gmra.mrb[0].mxu0 %v3328
    %v3417 = vpop.f32.mrb[0].mxu0
    %v3418 = vadd.f32 %v3325, %v3417
    %v3419 = vpop.f32.mrb[0].mxu0
    %3420 = vmatprep.mubr.f32.mxu0 0.0
    %3421 = vmatmul.mubr.f32.gmra.mrb[0].mxu0 %v3331
    %v3422 = vpop.f32.mrb[0].mxu0
    %v3423 = vadd.f32 %v3325, %v3422
    %v3424 = vpop.f32.mrb[0].mxu0
    %3425 = vmatprep.mubr.f32.mxu0 0.0
    %3426 = vmatmul.mubr.f32.gmra.mrb[0].mxu0 %v3334
    %v3427 = vpop.f32.mrb[0].mxu0
    %v3428 = vadd.f32 %v3325, %v3427
    %v3429 = vpop.f32.mrb[0].mxu0
    %3430 = vmatprep.mubr.f32.mxu0 0.0
    %3431 = vmatmul.mubr.f32.gmra.mrb[0].mxu0 %v3337
    %v3432 = vpop.f32.mrb[0].mxu0
    %v3433 = vadd.f32 %v3325, %v3432
    %v3434 = vpop.f32.mrb[0].mxu0
    %3435 = vmatprep.mubr.f32.mxu0 0.0
    %3436 = vmatmul.mubr.f32.gmra.mrb[0].mxu0 %v3340
    %v3437 = vpop.f32.mrb[0].mxu0
    %v3438 = vadd.f32 %v3325, %v3437
    %v3439 = vpop.f32.mrb[0].mxu0
    %3440 = vmatprep.mubr.f32.mxu0 0.0
    %3441 = vmatmul.mubr.f32.gmra.mrb[0].mxu0 %v3343
    %v3442 = vpop.f32.mrb[0].mxu0
    %v3443 = vadd.f32 %v3325, %v3442
    %v3444 = vpop.f32.mrb[0].mxu0
    %3445 = vmatprep.mubr.f32.mxu0 0.0
    %3446 = vmatmul.mubr.f32.gmra.mrb[0].mxu0 %v3346
    %v3447 = vpop.f32.mrb[0].mxu0
    %v3448 = vadd.f32 %v3325, %v3447
    %v3449 = vpop.f32.mrb[0].mxu0
    %3450 = vmatprep.mubr.f32.mxu0 0.0
    %3451 = vmatmul.mubr.f32.gmra.mrb[0].mxu0 %v3349
    %v3452 = vpop.f32.mrb[0].mxu0
    %v3453 = vadd.f32 %v3325, %v3452
    %v3454 = vpop.f32.mrb[0].mxu0
    %3455 = vdwg.mxu0
    %v3456 = vmax.f32 %v3418, 0.0
    %v3457 = vmax.f32 %v3423, 0.0
    %v3458 = vmax.f32 %v3428, 0.0
    %v3459 = vmax.f32 %v3433, 0.0
    %v3460 = vmax.f32 %v3438, 0.0
    %v3461 = vmax.f32 %v3443, 0.0
    %v3462 = vmax.f32 %v3448, 0.0
    %v3463 = vmax.f32 %v3453, 0.0
    %v3464 = vld [vmem:[%s8] sm:$0xff]
    %v3465 = vld [vmem:[%s8 + $0x8] sm:$0xff]
    %v3466 = vld [vmem:[%s9] sm:$0x1]
    %v3468 = vlaneseq
    %v3469 = vshrl.u32 %v3468, 7
    %v3470 = vsub.s32 0, %v3469
    %v3471 = vrot.slane %v3466, %v3470
    %v3474 = vsel %vm100, %v3456, 0
    %v3477 = vsel %vm100, %v3457, 0
    %v3480 = vsel %vm100, %v3458, 0
    %v3483 = vsel %vm100, %v3459, 0
    %v3486 = vsel %vm100, %v3460, 0
    %v3489 = vsel %vm100, %v3461, 0
    %v3492 = vsel %vm100, %v3462, 0
    %v3495 = vsel %vm100, %v3463, 0
    %3497 = vmatprep.subr.mxu0 0.0
    %3498 = vmatpush1.msra.mxu0 %v3464
    %3499 = vmatprep.subr.mxu0 0.0
    %3500 = vmatpush1.msra.mxu0 %v3465
    %3501 = vmatprep.subr.mxu0 0.0
    %3502 = vmatpush1.msra.mxu0 0.0
    %3503 = vmatprep.subr.mxu0 0.0
    %3504 = vmatpush1.msra.mxu0 0.0
    %3505 = vmatprep.subr.mxu0 0.0
    %3506 = vmatpush1.msra.mxu0 0.0
    %3507 = vmatprep.subr.mxu0 0.0
    %3508 = vmatpush1.msra.mxu0 0.0
    %3509 = vmatprep.subr.mxu0 0.0
    %3510 = vmatpush1.msra.mxu0 0.0
    %3511 = vmatprep.subr.mxu0 0.0
    %3512 = vmatpush1.msra.mxu0 0.0
    %3513 = vmatprep.subr.mxu0 0.0
    %3514 = vmatpush1.msra.mxu0 0.0
    %3515 = vmatprep.subr.mxu0 0.0
    %3516 = vmatpush1.msra.mxu0 0.0
    %3517 = vmatprep.subr.mxu0 0.0
    %3518 = vmatpush1.msra.mxu0 0.0
    %3519 = vmatprep.subr.mxu0 0.0
    %3520 = vmatpush1.msra.mxu0 0.0
    %3521 = vmatprep.subr.mxu0 0.0
    %3522 = vmatpush1.msra.mxu0 0.0
    %3523 = vmatprep.subr.mxu0 0.0
    %3524 = vmatpush1.msra.mxu0 0.0
    %3525 = vmatprep.subr.mxu0 0.0
    %3526 = vmatpush1.msra.mxu0 0.0
    %3527 = vmatprep.subr.mxu0 0.0
    %3528 = vmatpush1.msra.mxu0 0.0
    %3529 = vmatprep.subr.mxu0 0.0
    %3530 = vmatpush1.msra.mxu0 0.0
    %3531 = vmatprep.subr.mxu0 0.0
    %3532 = vmatpush1.msra.mxu0 0.0
    %3533 = vmatprep.subr.mxu0 0.0
    %3534 = vmatpush1.msra.mxu0 0.0
    %3535 = vmatprep.subr.mxu0 0.0
    %3536 = vmatpush1.msra.mxu0 0.0
    %3537 = vmatprep.subr.mxu0 0.0
    %3538 = vmatpush1.msra.mxu0 0.0
    %3539 = vmatprep.subr.mxu0 0.0
    %3540 = vmatpush1.msra.mxu0 0.0
    %3541 = vmatprep.subr.mxu0 0.0
    %3542 = vmatpush1.msra.mxu0 0.0
    %3543 = vmatprep.subr.mxu0 0.0
    %3544 = vmatpush1.msra.mxu0 0.0
    %3545 = vmatprep.subr.mxu0 0.0
    %3546 = vmatpush1.msra.mxu0 0.0
    %3547 = vmatprep.subr.mxu0 0.0
    %3548 = vmatpush1.msra.mxu0 0.0
    %3549 = vmatprep.subr.mxu0 0.0
    %3550 = vmatpush1.msra.mxu0 0.0
    %3551 = vmatprep.subr.mxu0 0.0
    %3552 = vmatpush1.msra.mxu0 0.0
    %3553 = vmatprep.subr.mxu0 0.0
    %3554 = vmatpush1.msra.mxu0 0.0
    %3555 = vmatprep.subr.mxu0 0.0
    %3556 = vmatpush1.msra.mxu0 0.0
    %3557 = vmatprep.subr.mxu0 0.0
    %3558 = vmatpush1.msra.mxu0 0.0
    %3559 = vmatprep.subr.mxu0 0.0
    %3560 = vmatpush1.msra.mxu0 0.0
    %3561 = vmatprep.mubr.f32.mxu0 0.0
    %3562 = vmatmul.mubr.f32.gmra.mrb[0].mxu0 %v3474
    %v3563 = vpop.f32.mrb[0].mxu0
    %v3564 = vadd.f32 %v3471, %v3563
    %v3565 = vpop.f32.mrb[0].mxu0
    %3566 = vmatprep.mubr.f32.mxu0 0.0
    %3567 = vmatmul.mubr.f32.gmra.mrb[0].mxu0 %v3477
    %v3568 = vpop.f32.mrb[0].mxu0
    %v3569 = vadd.f32 %v3471, %v3568
    %v3570 = vpop.f32.mrb[0].mxu0
    %3571 = vmatprep.mubr.f32.mxu0 0.0
    %3572 = vmatmul.mubr.f32.gmra.mrb[0].mxu0 %v3480
    %v3573 = vpop.f32.mrb[0].mxu0
    %v3574 = vadd.f32 %v3471, %v3573
    %v3575 = vpop.f32.mrb[0].mxu0
    %3576 = vmatprep.mubr.f32.mxu0 0.0
    %3577 = vmatmul.mubr.f32.gmra.mrb[0].mxu0 %v3483
    %v3578 = vpop.f32.mrb[0].mxu0
    %v3579 = vadd.f32 %v3471, %v3578
    %v3580 = vpop.f32.mrb[0].mxu0
    %3581 = vmatprep.mubr.f32.mxu0 0.0
    %3582 = vmatmul.mubr.f32.gmra.mrb[0].mxu0 %v3486
    %v3583 = vpop.f32.mrb[0].mxu0
    %v3584 = vadd.f32 %v3471, %v3583
    %v3585 = vpop.f32.mrb[0].mxu0
    %3586 = vmatprep.mubr.f32.mxu0 0.0
    %3587 = vmatmul.mubr.f32.gmra.mrb[0].mxu0 %v3489
    %v3588 = vpop.f32.mrb[0].mxu0
    %v3589 = vadd.f32 %v3471, %v3588
    %v3590 = vpop.f32.mrb[0].mxu0
    %3591 = vmatprep.mubr.f32.mxu0 0.0
    %3592 = vmatmul.mubr.f32.gmra.mrb[0].mxu0 %v3492
    %v3593 = vpop.f32.mrb[0].mxu0
    %v3594 = vadd.f32 %v3471, %v3593
    %v3595 = vpop.f32.mrb[0].mxu0
    %3596 = vmatprep.mubr.f32.mxu0 0.0
    %3597 = vmatmul.mubr.f32.gmra.mrb[0].mxu0 %v3495
    %v3598 = vpop.f32.mrb[0].mxu0
    %v3599 = vadd.f32 %v3471, %v3598
    %v3600 = vpop.f32.mrb[0].mxu0
    %3601 = vdwg.mxu0
    %3602 = vst.msk [vmem:[#allocation10] sm:$0xff] %vm100, %v3564
    %3603 = vst.msk [vmem:[#allocation10 + $0x8] sm:$0xff] %vm100, %v3569
    %3604 = vst.msk [vmem:[#allocation10 + $0x10] sm:$0xff] %vm100, %v3574
    %3605 = vst.msk [vmem:[#allocation10 + $0x18] sm:$0xff] %vm100, %v3579
    %3606 = vst.msk [vmem:[#allocation10 + $0x20] sm:$0xff] %vm100, %v3584
    %3607 = vst.msk [vmem:[#allocation10 + $0x28] sm:$0xff] %vm100, %v3589
    %3608 = vst.msk [vmem:[#allocation10 + $0x30] sm:$0xff] %vm100, %v3594
    %3609 = vst.msk [vmem:[#allocation10 + $0x38] sm:$0xff] %vm100, %v3599
    %3610 = vst.msk [vmem:[#allocation11] sm:$0xff] %vm230, %v3305
    %3611 = vst.msk [vmem:[#allocation13] sm:$0xff] %vm230, %v3303
    // Predicated region
    $region54: #{tpu_custom_call.1} parent=1 // pred_check
      _
    $region55: #{tpu_custom_call.1} parent=1 // pred_check_branch
      %3613 = sbr.rel (0) target = $region57
    $region56: #{tpu_custom_call.1} parent=1 // pred_region
      %s3615 = ssub.s32 1024, 1024
      %3616 = vsyncadd [#allocation6], %s3615
      %s3617 = sshll.u32 [#allocation10], 4
      %s3618 = int_to_ptr.vmem [resolvable:$true] %s3617
      %3623 = dma.vmem_to_hbm [thread:$0]  %s3618, 1024, %s10, [#allocation6], 128, 128, 8
    $region57: #{tpu_custom_call.1} parent=1 // pred_fallthru
      _
    // Predicated region
    $region58: #{tpu_custom_call.1} parent=1 // pred_check
      _
    $region59: #{tpu_custom_call.1} parent=1 // pred_check_branch
      %3625 = sbr.rel (0) target = $region61
    $region60: #{tpu_custom_call.1} parent=1 // pred_region
      %s3627 = ssub.s32 128, 128
      %3628 = vsyncadd [#allocation12], %s3627
      %s3630 = sshll.u32 [#allocation11], 4
      %s3631 = int_to_ptr.vmem [resolvable:$true] %s3630
      %3633 = dma.vmem_to_hbm [thread:$0]  %s3631, 128, %s11, [#allocation12]
    $region61: #{tpu_custom_call.1} parent=1 // pred_fallthru
      _
    // Predicated region
    $region62: #{tpu_custom_call.1} parent=1 // pred_check
      _
    $region63: #{tpu_custom_call.1} parent=1 // pred_check_branch
      %3635 = sbr.rel (0) target = $region65
    $region64: #{tpu_custom_call.1} parent=1 // pred_region
      %s3637 = ssub.s32 128, 128
      %3638 = vsyncadd [#allocation12], %s3637
      %s3640 = sshll.u32 [#allocation13], 4
      %s3641 = int_to_ptr.vmem [resolvable:$true] %s3640
      %3643 = dma.vmem_to_hbm [thread:$0]  %s3641, 128, %s12, [#allocation12]
    $region65: #{tpu_custom_call.1} parent=1 // pred_fallthru
      _
    // Predicated region
    $region66: #{tpu_custom_call.1} parent=1 // pred_check
      _
    $region67: #{tpu_custom_call.1} parent=1 // pred_check_branch
      %3645 = sbr.rel (0) target = $region69
    $region68: #{tpu_custom_call.1} parent=1 // pred_region
      %3646 = dma.done [#allocation6], 1024
    $region69: #{tpu_custom_call.1} parent=1 // pred_fallthru
      _
    // Predicated region
    $region70: #{tpu_custom_call.1} parent=1 // pred_check
      _
    $region71: #{tpu_custom_call.1} parent=1 // pred_check_branch
      %3648 = sbr.rel (0) target = $region73
    $region72: #{tpu_custom_call.1} parent=1 // pred_region
      %3649 = dma.done [#allocation12], 128
    $region73: #{tpu_custom_call.1} parent=1 // pred_fallthru
      _
    // Predicated region
    $region74: #{tpu_custom_call.1} parent=1 // pred_check
      _
    $region75: #{tpu_custom_call.1} parent=1 // pred_check_branch
      %3651 = sbr.rel (0) target = $region77
    $region76: #{tpu_custom_call.1} parent=1 // pred_region
      %3652 = dma.done [#allocation12], 128
    $region77: #{tpu_custom_call.1} parent=1 // pred_fallthru
      _
    %3653 = vsyncpa [#allocation5], 1
    %3654 = vsyncpa [#allocation8], 1
    %3655 = vsyncpa [#allocation6], 1
    %3656 = vsyncpa [#allocation12], 1

</llo_original>
